<compile_context>
chip_gen: v6e
topology: v6e:2x2x1
jax: 0.10.0
libtpu: 0.0.40
codegen_flags: <defaults>
</compile_context>

<pallas_src>
import functools

import numpy as np
import jax
import jax.numpy as jnp
from jax import lax
from jax.experimental import pallas as pl
from jax.experimental.pallas import tpu as pltpu


# ---------------------------------------------------------------------------
# Fused decoder-layer kernel (one grid step = one batch element)
# ---------------------------------------------------------------------------
# Row indices inside the packed (16, d_model) parameter array `vec_ref`:
_BQ1, _BK1, _BV1, _BFC1, _G1, _B1 = 0, 1, 2, 3, 4, 5
_BQ2, _BK2, _BV2, _BFC2, _G2, _B2 = 6, 7, 8, 9, 10, 11
_BF2, _G3, _B3 = 12, 13, 14        # row 15 is zero padding (sublane multiple of 8)


def _decoder_layer_kernel(num_heads, depth, eps,
                          x_ref, enc_ref,
                          wq1_ref, wk1_ref, wv1_ref, wfc1_ref,
                          wq2_ref, wk2_ref, wv2_ref, wfc2_ref,
                          wf1_ref, bf1_ref, wf2_ref,
                          vec_ref,
                          out_ref, attw1_ref, attw2_ref):
    x = x_ref[0]          # (S_dec, E)  f32
    enc = enc_ref[0]      # (S_enc, E)  f32
    vec = vec_ref[...]    # (16, d_model) f32: packed biases / LayerNorm params
    eps_f = np.float32(eps)
    inv_sqrt_dk = np.float32(1.0 / np.sqrt(depth))

    def row(i):                       # (1, d_model) broadcastable parameter row
        return vec[i:i + 1, :]

    def layer_norm(s, g, b):          # biased variance, f32 epilogue
        mean = jnp.mean(s, axis=-1, keepdims=True)
        c = s - mean
        var = jnp.mean(c * c, axis=-1, keepdims=True)
        return c * lax.rsqrt(var + eps_f) * g + b

    def split_heads(t):               # (S, H*depth) -> (H, S, depth); one relayout
        return jnp.transpose(t.reshape(t.shape[0], num_heads, depth), (1, 0, 2))

    def mha(q_in, k_in, v_in, wqT, bq, wkT, bk, wvT, bv, wfcT, bfc, attw_out):
        """MultiHeadAttention.forward(query=q_in, key=k_in, value=v_in)."""
        cdt = wqT.dtype               # bf16 (MXU-native) or f32 (exact-parity mode)
        Q = jnp.dot(q_in.astype(cdt), wqT, preferred_element_type=jnp.float32) + bq
        K = jnp.dot(k_in.astype(cdt), wkT, preferred_element_type=jnp.float32) + bk
        V = jnp.dot(v_in.astype(cdt), wvT, preferred_element_type=jnp.float32) + bv
        d_model = Q.shape[-1]
        Qh, Kh, Vh = split_heads(Q), split_heads(K), split_heads(V)  # (H, S, depth)
        # Module quirk: calculate_attention(value=Qh, key=Kh, query=Vh)
        scores = jnp.einsum("hqd,hkd->hqk", Vh.astype(cdt), Kh.astype(cdt),
                            preferred_element_type=jnp.float32) * inv_sqrt_dk
        m = jnp.max(scores, axis=-1, keepdims=True)
        e = jnp.exp(scores - m)                                      # EUP
        prob = e * pl.reciprocal(jnp.sum(e, axis=-1, keepdims=True), approx=False)
        attw_out[0] = prob                                           # (H, Sv, Sk) f32
        ctx = jnp.einsum("hqk,hkd->hqd", prob.astype(cdt), Qh.astype(cdt),
                         preferred_element_type=jnp.float32)          # (H, Sv, depth)
        ctx_cat = jnp.transpose(ctx, (1, 0, 2)).reshape(v_in.shape[0], d_model)
        return jnp.dot(ctx_cat.astype(cdt), wfcT,
                       preferred_element_type=jnp.float32) + bfc

    # --- sub-layer 1: self-attention + dropout(id) + residual(x) + LN1 -----
    a1 = mha(x, x, x,
             wq1_ref[...], row(_BQ1), wk1_ref[...], row(_BK1),
             wv1_ref[...], row(_BV1), wfc1_ref[...], row(_BFC1), attw1_ref)
    out1 = layer_norm(a1 + x, row(_G1), row(_B1))

    # --- sub-layer 2: cross-attention(query=enc, key=enc, value=out1) ------
    a2 = mha(enc, enc, out1,
             wq2_ref[...], row(_BQ2), wk2_ref[...], row(_BK2),
             wv2_ref[...], row(_BV2), wfc2_ref[...], row(_BFC2), attw2_ref)
    out2 = layer_norm(a2 + out1, row(_G2), row(_B2))

    # --- sub-layer 3: position-wise FFN + residual(out2) + LN3 -------------
    cdt = wf1_ref.dtype
    h = jnp.dot(out2.astype(cdt), wf1_ref[...],
                preferred_element_type=jnp.float32) + bf1_ref[...]
    h = jnp.maximum(h, 0.0)                                          # ReLU (dropout=id)
    y = jnp.dot(h.astype(cdt), wf2_ref[...],
                preferred_element_type=jnp.float32) + row(_BF2)
    out_ref[0] = layer_norm(y + out2, row(_G3), row(_B3))


# ---------------------------------------------------------------------------
# Wrapper around pallas_call
# ---------------------------------------------------------------------------

def decoder_layer_forward(x, enc_out, params, num_heads, eps=1e-6,
                          look_ahead_mask=None, padding_mask=None,
                          use_bf16_matmul=True):
    """Fused decoder layer. Returns (out3, attn_weights_block1, attn_weights_block2)."""
    # TODO(synk): masked_fill(mask == 0, 1e-9) path (module defaults masks to None).
    assert look_ahead_mask is None and padding_mask is None

    B, S_dec, E = x.shape
    Be, S_enc, Ee = enc_out.shape
    assert Be == B and Ee == E
    D = params["mha1"]["wq"].shape[0]
    assert D % num_heads == 0
    depth = D // num_heads
    assert E == D, "residual fusion requires d_embed == d_model"
    dff = params["ffn"]["w1"].shape[0]

    # One-time layout plumbing OUTSIDE the kernel:
    #   * W(out,in) -> W.T(in,out): y = x @ W.T + b with no in-kernel transpose.
    #   * bf16 MXU operands (f32 accumulation in-kernel): halves weight DMA bytes.
    wdt = jnp.bfloat16 if use_bf16_matmul else jnp.float32
    tw = lambda w: w.T.astype(wdt)
    p1, p2, pf = params["mha1"], params["mha2"], params["ffn"]
    attn_weights_in = [tw(p1["wq"]), tw(p1["wk"]), tw(p1["wv"]), tw(p1["wfc"]),
                       tw(p2["wq"]), tw(p2["wk"]), tw(p2["wv"]), tw(p2["wfc"])]
    wf1 = tw(pf["w1"])
    wf2 = tw(pf["w2"])
    bf1 = pf["b1"].reshape(1, dff).astype(jnp.float32)

    # Pack the 15 d_model-wide bias / LayerNorm vectors (kept f32) into one array:
    # a single DMA descriptor + double buffer instead of 15 tiny ones.
    vecs = jnp.stack([
        p1["bq"], p1["bk"], p1["bv"], p1["bfc"], params["ln1_g"], params["ln1_b"],
        p2["bq"], p2["bk"], p2["bv"], p2["bfc"], params["ln2_g"], params["ln2_b"],
        pf["b2"], params["ln3_g"], params["ln3_b"],
        jnp.zeros((D,), jnp.float32),
    ], axis=0)                                                   # (16, D) f32

    def full_spec(shape):             # constant-index (resident) parameter block
        return pl.BlockSpec(shape, lambda b: (0,) * len(shape))

    in_specs = [
        pl.BlockSpec((1, S_dec, E), lambda b: (b, 0, 0)),        # x
        pl.BlockSpec((1, S_enc, E), lambda b: (b, 0, 0)),        # enc_out
        full_spec((E, D)), full_spec((E, D)), full_spec((E, D)), full_spec((D, D)),
        full_spec((E, D)), full_spec((E, D)), full_spec((E, D)), full_spec((D, D)),
        full_spec((D, dff)),                                     # wf1T
        full_spec((1, dff)),                                     # bf1
        full_spec((dff, D)),                                     # wf2T
        full_spec((16, D)),                                      # packed vectors
    ]
    out_specs = (
        pl.BlockSpec((1, S_dec, D), lambda b: (b, 0, 0)),
        pl.BlockSpec((1, num_heads, S_dec, S_dec), lambda b: (b, 0, 0, 0)),
        pl.BlockSpec((1, num_heads, S_dec, S_enc), lambda b: (b, 0, 0, 0)),
    )
    out_shape = (
        jax.ShapeDtypeStruct((B, S_dec, D), jnp.float32),
        jax.ShapeDtypeStruct((B, num_heads, S_dec, S_dec), jnp.float32),
        jax.ShapeDtypeStruct((B, num_heads, S_dec, S_enc), jnp.float32),
    )

    # Advisory cost estimate so XLA can schedule neighbours around the custom call.
    flops = 2 * B * (3 * S_dec * E * D + 2 * S_dec * S_dec * D + S_dec * D * D
                     + 2 * S_enc * E * D + S_dec * E * D
                     + 2 * S_dec * S_enc * D + S_dec * D * D
                     + 2 * S_dec * D * dff)
    transcendentals = B * (num_heads * S_dec * (S_dec + S_enc)       # exp
                           + 2 * num_heads * S_dec + 3 * S_dec)      # recip + rsqrt
    bytes_accessed = (
        4 * (int(x.size) + int(enc_out.size) + B * S_dec * D
             + B * num_heads * S_dec * (S_dec + S_enc))
        + sum(int(np.prod(a.shape)) * a.dtype.itemsize
              for a in (*attn_weights_in, wf1, bf1, wf2, vecs)))

    kernel = functools.partial(_decoder_layer_kernel, num_heads, depth, float(eps))
    out3, attw1, attw2 = pl.pallas_call(
        kernel,
        out_shape=out_shape,
        grid=(B,),
        in_specs=in_specs,
        out_specs=out_specs,
        compiler_params=pltpu.CompilerParams(
            dimension_semantics=("parallel",),      # batch elements are independent
            vmem_limit_bytes=64 * 1024 * 1024),     # fits v5e/v6e/v7x physical VMEM
        cost_estimate=pl.CostEstimate(flops=int(flops),
                                      transcendentals=int(transcendentals),
                                      bytes_accessed=int(bytes_accessed)),
    )(x, enc_out, *attn_weights_in, wf1, bf1, wf2, vecs)
    return out3, attw1, attw2


# ---------------------------------------------------------------------------
# Pure-JAX reference (mirrors the PyTorch code, including the arg-order quirk)
# ---------------------------------------------------------------------------

def _ref_mha(q, k, v, p, num_heads):
    d_model = p["wq"].shape[0]
    depth = d_model // num_heads
    Q = q @ p["wq"].T + p["bq"]
    K = k @ p["wk"].T + p["bk"]
    V = v @ p["wv"].T + p["bv"]
    split = lambda t: t.reshape(t.shape[0], t.shape[1], num_heads, depth).transpose(0, 2, 1, 3)
    Qh, Kh, Vh = split(Q), split(K), split(V)
    scores = jnp.einsum("bhqd,bhkd->bhqk", Vh, Kh) / np.sqrt(depth)
    prob = jax.nn.softmax(scores, axis=-1)
    out = jnp.einsum("bhqk,bhkd->bhqd", prob, Qh)
    out = out.transpose(0, 2, 1, 3).reshape(out.shape[0], -1, d_model)
    return out @ p["wfc"].T + p["bfc"], prob


def _ref_ln(x, g, b, eps):
    mean = x.mean(-1, keepdims=True)
    var = ((x - mean) ** 2).mean(-1, keepdims=True)
    return (x - mean) / jnp.sqrt(var + eps) * g + b


def _ref_decoder(x, enc_out, params, num_heads, eps):
    a1, w1 = _ref_mha(x, x, x, params["mha1"], num_heads)
    o1 = _ref_ln(a1 + x, params["ln1_g"], params["ln1_b"], eps)
    a2, w2 = _ref_mha(enc_out, enc_out, o1, params["mha2"], num_heads)
    o2 = _ref_ln(a2 + o1, params["ln2_g"], params["ln2_b"], eps)
    p = params["ffn"]
    f = jnp.maximum(o2 @ p["w1"].T + p["b1"], 0.0) @ p["w2"].T + p["b2"]
    o3 = _ref_ln(f + o2, params["ln3_g"], params["ln3_b"], eps)
    return o3, w1, w2


# ---------------------------------------------------------------------------
# Deterministic parameter init + main
# ---------------------------------------------------------------------------

def _init_linear(key, out_f, in_f):
    k1, k2 = jax.random.split(key)
    bound = 1.0 / np.sqrt(in_f)
    w = jax.random.uniform(k1, (out_f, in_f), jnp.float32, -bound, bound)
    b = jax.random.uniform(k2, (out_f,), jnp.float32, -bound, bound)
    return w, b


def _init_mha(key, d_model, d_embed):
    ks = jax.random.split(key, 4)
    wq, bq = _init_linear(ks[0], d_model, d_embed)
    wk, bk = _init_linear(ks[1], d_model, d_embed)
    wv, bv = _init_linear(ks[2], d_model, d_embed)
    wfc, bfc = _init_linear(ks[3], d_model, d_model)
    return dict(wq=wq, bq=bq, wk=wk, bk=bk, wv=wv, bv=bv, wfc=wfc, bfc=bfc)


if __name__ == "__main__":
    B, S_dec, S_enc = 2, 8, 8
    d_embed = d_model = 32          # residual connections require d_embed == d_model
    num_heads, dff, eps = 4, 64, 1e-6

    key = jax.random.PRNGKey(0)
    keys = jax.random.split(key, 12)

    params = {
        "mha1": _init_mha(keys[0], d_model, d_embed),
        "mha2": _init_mha(keys[1], d_model, d_embed),
        "ffn": dict(zip(("w1", "b1"), _init_linear(keys[2], dff, d_model)))
               | dict(zip(("w2", "b2"), _init_linear(keys[3], d_model, dff))),
        "ln1_g": 1.0 + 0.1 * jax.random.normal(keys[4], (d_model,), jnp.float32),
        "ln1_b": 0.1 * jax.random.normal(keys[5], (d_model,), jnp.float32),
        "ln2_g": 1.0 + 0.1 * jax.random.normal(keys[6], (d_model,), jnp.float32),
        "ln2_b": 0.1 * jax.random.normal(keys[7], (d_model,), jnp.float32),
        "ln3_g": 1.0 + 0.1 * jax.random.normal(keys[8], (d_model,), jnp.float32),
        "ln3_b": 0.1 * jax.random.normal(keys[9], (d_model,), jnp.float32),
    }

    x = jax.random.normal(keys[10], (B, S_dec, d_embed), jnp.float32)
    enc_out = jax.random.normal(keys[11], (B, S_enc, d_embed), jnp.float32)

    # Exact f32 path: tight parity vs. a pure-JAX mirror of the PyTorch module.
    o32, w1_32, w2_32 = decoder_layer_forward(x, enc_out, params, num_heads, eps,
                                              use_bf16_matmul=False)
    jax.block_until_ready((o32, w1_32, w2_32))
    r3, rw1, rw2 = _ref_decoder(x, enc_out, params, num_heads, eps)
    np.testing.assert_allclose(np.asarray(o32), np.asarray(r3), rtol=1e-4, atol=1e-4)
    np.testing.assert_allclose(np.asarray(w1_32), np.asarray(rw1), rtol=1e-4, atol=1e-5)
    np.testing.assert_allclose(np.asarray(w2_32), np.asarray(rw2), rtol=1e-4, atol=1e-5)

    # bf16-MXU path (perf default): loose smoke check against the exact-f32 kernel.
    o16, w1_16, w2_16 = decoder_layer_forward(x, enc_out, params, num_heads, eps,
                                              use_bf16_matmul=True)
    jax.block_until_ready((o16, w1_16, w2_16))
    np.testing.assert_allclose(np.asarray(o16), np.asarray(o32), rtol=0.1, atol=0.15)
    np.testing.assert_allclose(np.asarray(w1_16), np.asarray(w1_32), rtol=0.1, atol=0.05)
    np.testing.assert_allclose(np.asarray(w2_16), np.asarray(w2_32), rtol=0.1, atol=0.05)

    print("KERNEL_OK")
</pallas_src>

<mosaic_0001>
module attributes {stable_mosaic.version = 11 : i64} {
  func.func @_decoder_layer_kernel(%arg0: i32, %arg1: memref<1x8x32xf32, #tpu.memory_space<vmem>>, %arg2: memref<1x8x32xf32, #tpu.memory_space<vmem>>, %arg3: memref<32x32xf32, #tpu.memory_space<vmem>>, %arg4: memref<32x32xf32, #tpu.memory_space<vmem>>, %arg5: memref<32x32xf32, #tpu.memory_space<vmem>>, %arg6: memref<32x32xf32, #tpu.memory_space<vmem>>, %arg7: memref<32x32xf32, #tpu.memory_space<vmem>>, %arg8: memref<32x32xf32, #tpu.memory_space<vmem>>, %arg9: memref<32x32xf32, #tpu.memory_space<vmem>>, %arg10: memref<32x32xf32, #tpu.memory_space<vmem>>, %arg11: memref<32x64xf32, #tpu.memory_space<vmem>>, %arg12: memref<1x64xf32, #tpu.memory_space<vmem>>, %arg13: memref<64x32xf32, #tpu.memory_space<vmem>>, %arg14: memref<16x32xf32, #tpu.memory_space<vmem>>, %arg15: memref<1x8x32xf32, #tpu.memory_space<vmem>>, %arg16: memref<1x4x8x8xf32, #tpu.memory_space<vmem>>, %arg17: memref<1x4x8x8xf32, #tpu.memory_space<vmem>>) attributes {dimension_semantics = [#tpu.dimension_semantics<parallel>], iteration_bounds = array<i64: 2>, scalar_prefetch = 0 : i64, scratch_operands = 0 : i64, tpu.core_type = #tpu.core_type<tc>, window_params = [{transform_indices = @transform_0, window_bounds = array<i64: 1, 8, 32>}, {transform_indices = @transform_1, window_bounds = array<i64: 1, 8, 32>}, {pipeline_mode = #tpu.pipeline_mode<synchronous>, transform_indices = @transform_2, window_bounds = array<i64: 32, 32>}, {pipeline_mode = #tpu.pipeline_mode<synchronous>, transform_indices = @transform_3, window_bounds = array<i64: 32, 32>}, {pipeline_mode = #tpu.pipeline_mode<synchronous>, transform_indices = @transform_4, window_bounds = array<i64: 32, 32>}, {pipeline_mode = #tpu.pipeline_mode<synchronous>, transform_indices = @transform_5, window_bounds = array<i64: 32, 32>}, {pipeline_mode = #tpu.pipeline_mode<synchronous>, transform_indices = @transform_6, window_bounds = array<i64: 32, 32>}, {pipeline_mode = #tpu.pipeline_mode<synchronous>, transform_indices = @transform_7, window_bounds = array<i64: 32, 32>}, {pipeline_mode = #tpu.pipeline_mode<synchronous>, transform_indices = @transform_8, window_bounds = array<i64: 32, 32>}, {pipeline_mode = #tpu.pipeline_mode<synchronous>, transform_indices = @transform_9, window_bounds = array<i64: 32, 32>}, {pipeline_mode = #tpu.pipeline_mode<synchronous>, transform_indices = @transform_10, window_bounds = array<i64: 32, 64>}, {pipeline_mode = #tpu.pipeline_mode<synchronous>, transform_indices = @transform_11, window_bounds = array<i64: 1, 64>}, {pipeline_mode = #tpu.pipeline_mode<synchronous>, transform_indices = @transform_12, window_bounds = array<i64: 64, 32>}, {pipeline_mode = #tpu.pipeline_mode<synchronous>, transform_indices = @transform_13, window_bounds = array<i64: 16, 32>}, {transform_indices = @transform_14, window_bounds = array<i64: 1, 8, 32>}, {transform_indices = @transform_15, window_bounds = array<i64: 1, 4, 8, 8>}, {transform_indices = @transform_16, window_bounds = array<i64: 1, 4, 8, 8>}]} {
    %c0 = arith.constant 0 : index
    %c0_0 = arith.constant 0 : index
    %c0_1 = arith.constant 0 : index
    %0 = vector.load %arg1[%c0, %c0_0, %c0_1] : memref<1x8x32xf32, #tpu.memory_space<vmem>>, vector<1x8x32xf32>
    %1 = vector.shape_cast %0 : vector<1x8x32xf32> to vector<8x32xf32>
    %c0_2 = arith.constant 0 : index
    %c0_3 = arith.constant 0 : index
    %c0_4 = arith.constant 0 : index
    %2 = vector.load %arg2[%c0_2, %c0_3, %c0_4] : memref<1x8x32xf32, #tpu.memory_space<vmem>>, vector<1x8x32xf32>
    %3 = vector.shape_cast %2 : vector<1x8x32xf32> to vector<8x32xf32>
    %c0_5 = arith.constant 0 : index
    %c0_6 = arith.constant 0 : index
    %4 = vector.load %arg14[%c0_5, %c0_6] : memref<16x32xf32, #tpu.memory_space<vmem>>, vector<16x32xf32>
    %c0_7 = arith.constant 0 : index
    %c0_8 = arith.constant 0 : index
    %5 = vector.load %arg3[%c0_7, %c0_8] : memref<32x32xf32, #tpu.memory_space<vmem>>, vector<32x32xf32>
    %6 = vector.extract_strided_slice %4 {offsets = [0, 0], sizes = [1, 32], strides = [1, 1]} : vector<16x32xf32> to vector<1x32xf32>
    %c0_9 = arith.constant 0 : index
    %c0_10 = arith.constant 0 : index
    %7 = vector.load %arg4[%c0_9, %c0_10] : memref<32x32xf32, #tpu.memory_space<vmem>>, vector<32x32xf32>
    %8 = vector.extract_strided_slice %4 {offsets = [1, 0], sizes = [1, 32], strides = [1, 1]} : vector<16x32xf32> to vector<1x32xf32>
    %c0_11 = arith.constant 0 : index
    %c0_12 = arith.constant 0 : index
    %9 = vector.load %arg5[%c0_11, %c0_12] : memref<32x32xf32, #tpu.memory_space<vmem>>, vector<32x32xf32>
    %10 = vector.extract_strided_slice %4 {offsets = [2, 0], sizes = [1, 32], strides = [1, 1]} : vector<16x32xf32> to vector<1x32xf32>
    %c0_13 = arith.constant 0 : index
    %c0_14 = arith.constant 0 : index
    %11 = vector.load %arg6[%c0_13, %c0_14] : memref<32x32xf32, #tpu.memory_space<vmem>>, vector<32x32xf32>
    %12 = vector.extract_strided_slice %4 {offsets = [3, 0], sizes = [1, 32], strides = [1, 1]} : vector<16x32xf32> to vector<1x32xf32>
    %cst = arith.constant dense<0.000000e+00> : vector<8x32xf32>
    %13 = tpu.matmul %1, %5, %cst {dimension_numbers = #tpu.dot_dimension_numbers<[1], [0], [0], [1], [0, 0, 1, 1], [], []>} : vector<8x32xf32>, vector<32x32xf32>, vector<8x32xf32> -> vector<8x32xf32>
    %14 = vector.broadcast %6 : vector<1x32xf32> to vector<8x32xf32>
    %15 = arith.addf %13, %14 : vector<8x32xf32>
    %cst_15 = arith.constant dense<0.000000e+00> : vector<8x32xf32>
    %16 = tpu.matmul %1, %7, %cst_15 {dimension_numbers = #tpu.dot_dimension_numbers<[1], [0], [0], [1], [0, 0, 1, 1], [], []>} : vector<8x32xf32>, vector<32x32xf32>, vector<8x32xf32> -> vector<8x32xf32>
    %17 = vector.broadcast %8 : vector<1x32xf32> to vector<8x32xf32>
    %18 = arith.addf %16, %17 : vector<8x32xf32>
    %cst_16 = arith.constant dense<0.000000e+00> : vector<8x32xf32>
    %19 = tpu.matmul %1, %9, %cst_16 {dimension_numbers = #tpu.dot_dimension_numbers<[1], [0], [0], [1], [0, 0, 1, 1], [], []>} : vector<8x32xf32>, vector<32x32xf32>, vector<8x32xf32> -> vector<8x32xf32>
    %20 = vector.broadcast %10 : vector<1x32xf32> to vector<8x32xf32>
    %21 = arith.addf %19, %20 : vector<8x32xf32>
    %22 = vector.shape_cast %15 : vector<8x32xf32> to vector<8x4x8xf32>
    %23 = tpu.transpose %22, [1, 0, 2] : vector<8x4x8xf32> -> vector<4x8x8xf32>
    %24 = vector.shape_cast %18 : vector<8x32xf32> to vector<8x4x8xf32>
    %25 = tpu.transpose %24, [1, 0, 2] : vector<8x4x8xf32> -> vector<4x8x8xf32>
    %26 = vector.shape_cast %21 : vector<8x32xf32> to vector<8x4x8xf32>
    %27 = tpu.transpose %26, [1, 0, 2] : vector<8x4x8xf32> -> vector<4x8x8xf32>
    "tpu.trace_start"() <{level = 10 : i32, message = "hqd,hkd->hqk"}> : () -> ()
    %cst_17 = arith.constant dense<0.000000e+00> : vector<4x8x8xf32>
    %28 = tpu.matmul %27, %25, %cst_17 {dimension_numbers = #tpu.dot_dimension_numbers<[2], [2], [1], [1], [0, 0, 0, 1, 1, 1], [0], [0]>} : vector<4x8x8xf32>, vector<4x8x8xf32>, vector<4x8x8xf32> -> vector<4x8x8xf32>
    "tpu.trace_stop"() : () -> ()
    %cst_18 = arith.constant 0.353553385 : f32
    %29 = vector.broadcast %cst_18 : f32 to vector<4x8x8xf32>
    %30 = arith.mulf %28, %29 : vector<4x8x8xf32>
    %cst_19 = arith.constant dense<0xFF800000> : vector<4x8xf32>
    %31 = vector.multi_reduction <maximumf>, %30, %cst_19 [2] : vector<4x8x8xf32> to vector<4x8xf32>
    %32 = vector.shape_cast %31 : vector<4x8xf32> to vector<4x8x1xf32>
    %33 = vector.broadcast %32 : vector<4x8x1xf32> to vector<4x8x8xf32>
    %34 = arith.subf %30, %33 : vector<4x8x8xf32>
    %35 = math.exp %34 : vector<4x8x8xf32>
    %cst_20 = arith.constant dense<0.000000e+00> : vector<4x8xf32>
    %36 = vector.multi_reduction <add>, %35, %cst_20 [2] : vector<4x8x8xf32> to vector<4x8xf32>
    %37 = vector.shape_cast %36 : vector<4x8xf32> to vector<4x8x1xf32>
    %38 = tpu.reciprocal %37 : vector<4x8x1xf32> -> vector<4x8x1xf32>
    %39 = vector.broadcast %38 : vector<4x8x1xf32> to vector<4x8x8xf32>
    %40 = arith.mulf %35, %39 : vector<4x8x8xf32>
    %c0_21 = arith.constant 0 : index
    %c0_22 = arith.constant 0 : index
    %c0_23 = arith.constant 0 : index
    %c0_24 = arith.constant 0 : index
    %41 = vector.load %arg16[%c0_21, %c0_22, %c0_23, %c0_24] : memref<1x4x8x8xf32, #tpu.memory_space<vmem>>, vector<1x4x8x8xf32>
    %42 = vector.shape_cast %41 : vector<1x4x8x8xf32> to vector<4x8x8xf32>
    %43 = vector.shape_cast %40 : vector<4x8x8xf32> to vector<1x4x8x8xf32>
    tpu.vector_store %arg16[%c0_21, %c0_22, %c0_23, %c0_24], %43 {strides = array<i32>} : memref<1x4x8x8xf32, #tpu.memory_space<vmem>>, vector<1x4x8x8xf32>,
    "tpu.trace_start"() <{level = 10 : i32, message = "hqk,hkd->hqd"}> : () -> ()
    %cst_25 = arith.constant dense<0.000000e+00> : vector<4x8x8xf32>
    %44 = tpu.matmul %40, %23, %cst_25 {dimension_numbers = #tpu.dot_dimension_numbers<[2], [1], [1], [2], [0, 0, 0, 1, 1, 2], [0], [0]>} : vector<4x8x8xf32>, vector<4x8x8xf32>, vector<4x8x8xf32> -> vector<4x8x8xf32>
    "tpu.trace_stop"() : () -> ()
    %45 = tpu.transpose %44, [1, 0, 2] : vector<4x8x8xf32> -> vector<8x4x8xf32>
    %46 = vector.shape_cast %45 : vector<8x4x8xf32> to vector<8x32xf32>
    %cst_26 = arith.constant dense<0.000000e+00> : vector<8x32xf32>
    %47 = tpu.matmul %46, %11, %cst_26 {dimension_numbers = #tpu.dot_dimension_numbers<[1], [0], [0], [1], [0, 0, 1, 1], [], []>} : vector<8x32xf32>, vector<32x32xf32>, vector<8x32xf32> -> vector<8x32xf32>
    %48 = vector.broadcast %12 : vector<1x32xf32> to vector<8x32xf32>
    %49 = arith.addf %47, %48 : vector<8x32xf32>
    %50 = arith.addf %49, %1 : vector<8x32xf32>
    %51 = vector.extract_strided_slice %4 {offsets = [4, 0], sizes = [1, 32], strides = [1, 1]} : vector<16x32xf32> to vector<1x32xf32>
    %52 = vector.extract_strided_slice %4 {offsets = [5, 0], sizes = [1, 32], strides = [1, 1]} : vector<16x32xf32> to vector<1x32xf32>
    %cst_27 = arith.constant dense<0.000000e+00> : vector<8xf32>
    %53 = vector.multi_reduction <add>, %50, %cst_27 [1] : vector<8x32xf32> to vector<8xf32>
    %54 = vector.shape_cast %53 : vector<8xf32> to vector<8x1xf32>
    %cst_28 = arith.constant 3.200000e+01 : f32
    %55 = vector.broadcast %cst_28 : f32 to vector<8x1xf32>
    %56 = arith.divf %54, %55 : vector<8x1xf32>
    %57 = vector.broadcast %56 : vector<8x1xf32> to vector<8x32xf32>
    %58 = arith.subf %50, %57 : vector<8x32xf32>
    %59 = arith.mulf %58, %58 : vector<8x32xf32>
    %cst_29 = arith.constant dense<0.000000e+00> : vector<8xf32>
    %60 = vector.multi_reduction <add>, %59, %cst_29 [1] : vector<8x32xf32> to vector<8xf32>
    %61 = vector.shape_cast %60 : vector<8xf32> to vector<8x1xf32>
    %cst_30 = arith.constant 3.200000e+01 : f32
    %62 = vector.broadcast %cst_30 : f32 to vector<8x1xf32>
    %63 = arith.divf %61, %62 : vector<8x1xf32>
    %cst_31 = arith.constant 9.99999997E-7 : f32
    %64 = vector.broadcast %cst_31 : f32 to vector<8x1xf32>
    %65 = arith.addf %63, %64 : vector<8x1xf32>
    %66 = math.rsqrt %65 : vector<8x1xf32>
    %67 = vector.broadcast %66 : vector<8x1xf32> to vector<8x32xf32>
    %68 = arith.mulf %58, %67 : vector<8x32xf32>
    %69 = vector.broadcast %51 : vector<1x32xf32> to vector<8x32xf32>
    %70 = arith.mulf %68, %69 : vector<8x32xf32>
    %71 = vector.broadcast %52 : vector<1x32xf32> to vector<8x32xf32>
    %72 = arith.addf %70, %71 : vector<8x32xf32>
    %c0_32 = arith.constant 0 : index
    %c0_33 = arith.constant 0 : index
    %73 = vector.load %arg7[%c0_32, %c0_33] : memref<32x32xf32, #tpu.memory_space<vmem>>, vector<32x32xf32>
    %74 = vector.extract_strided_slice %4 {offsets = [6, 0], sizes = [1, 32], strides = [1, 1]} : vector<16x32xf32> to vector<1x32xf32>
    %c0_34 = arith.constant 0 : index
    %c0_35 = arith.constant 0 : index
    %75 = vector.load %arg8[%c0_34, %c0_35] : memref<32x32xf32, #tpu.memory_space<vmem>>, vector<32x32xf32>
    %76 = vector.extract_strided_slice %4 {offsets = [7, 0], sizes = [1, 32], strides = [1, 1]} : vector<16x32xf32> to vector<1x32xf32>
    %c0_36 = arith.constant 0 : index
    %c0_37 = arith.constant 0 : index
    %77 = vector.load %arg9[%c0_36, %c0_37] : memref<32x32xf32, #tpu.memory_space<vmem>>, vector<32x32xf32>
    %78 = vector.extract_strided_slice %4 {offsets = [8, 0], sizes = [1, 32], strides = [1, 1]} : vector<16x32xf32> to vector<1x32xf32>
    %c0_38 = arith.constant 0 : index
    %c0_39 = arith.constant 0 : index
    %79 = vector.load %arg10[%c0_38, %c0_39] : memref<32x32xf32, #tpu.memory_space<vmem>>, vector<32x32xf32>
    %80 = vector.extract_strided_slice %4 {offsets = [9, 0], sizes = [1, 32], strides = [1, 1]} : vector<16x32xf32> to vector<1x32xf32>
    %cst_40 = arith.constant dense<0.000000e+00> : vector<8x32xf32>
    %81 = tpu.matmul %3, %73, %cst_40 {dimension_numbers = #tpu.dot_dimension_numbers<[1], [0], [0], [1], [0, 0, 1, 1], [], []>} : vector<8x32xf32>, vector<32x32xf32>, vector<8x32xf32> -> vector<8x32xf32>
    %82 = vector.broadcast %74 : vector<1x32xf32> to vector<8x32xf32>
    %83 = arith.addf %81, %82 : vector<8x32xf32>
    %cst_41 = arith.constant dense<0.000000e+00> : vector<8x32xf32>
    %84 = tpu.matmul %3, %75, %cst_41 {dimension_numbers = #tpu.dot_dimension_numbers<[1], [0], [0], [1], [0, 0, 1, 1], [], []>} : vector<8x32xf32>, vector<32x32xf32>, vector<8x32xf32> -> vector<8x32xf32>
    %85 = vector.broadcast %76 : vector<1x32xf32> to vector<8x32xf32>
    %86 = arith.addf %84, %85 : vector<8x32xf32>
    %cst_42 = arith.constant dense<0.000000e+00> : vector<8x32xf32>
    %87 = tpu.matmul %72, %77, %cst_42 {dimension_numbers = #tpu.dot_dimension_numbers<[1], [0], [0], [1], [0, 0, 1, 1], [], []>} : vector<8x32xf32>, vector<32x32xf32>, vector<8x32xf32> -> vector<8x32xf32>
    %88 = vector.broadcast %78 : vector<1x32xf32> to vector<8x32xf32>
    %89 = arith.addf %87, %88 : vector<8x32xf32>
    %90 = vector.shape_cast %83 : vector<8x32xf32> to vector<8x4x8xf32>
    %91 = tpu.transpose %90, [1, 0, 2] : vector<8x4x8xf32> -> vector<4x8x8xf32>
    %92 = vector.shape_cast %86 : vector<8x32xf32> to vector<8x4x8xf32>
    %93 = tpu.transpose %92, [1, 0, 2] : vector<8x4x8xf32> -> vector<4x8x8xf32>
    %94 = vector.shape_cast %89 : vector<8x32xf32> to vector<8x4x8xf32>
    %95 = tpu.transpose %94, [1, 0, 2] : vector<8x4x8xf32> -> vector<4x8x8xf32>
    "tpu.trace_start"() <{level = 10 : i32, message = "hqd,hkd->hqk"}> : () -> ()
    %cst_43 = arith.constant dense<0.000000e+00> : vector<4x8x8xf32>
    %96 = tpu.matmul %95, %93, %cst_43 {dimension_numbers = #tpu.dot_dimension_numbers<[2], [2], [1], [1], [0, 0, 0, 1, 1, 1], [0], [0]>} : vector<4x8x8xf32>, vector<4x8x8xf32>, vector<4x8x8xf32> -> vector<4x8x8xf32>
    "tpu.trace_stop"() : () -> ()
    %cst_44 = arith.constant 0.353553385 : f32
    %97 = vector.broadcast %cst_44 : f32 to vector<4x8x8xf32>
    %98 = arith.mulf %96, %97 : vector<4x8x8xf32>
    %cst_45 = arith.constant dense<0xFF800000> : vector<4x8xf32>
    %99 = vector.multi_reduction <maximumf>, %98, %cst_45 [2] : vector<4x8x8xf32> to vector<4x8xf32>
    %100 = vector.shape_cast %99 : vector<4x8xf32> to vector<4x8x1xf32>
    %101 = vector.broadcast %100 : vector<4x8x1xf32> to vector<4x8x8xf32>
    %102 = arith.subf %98, %101 : vector<4x8x8xf32>
    %103 = math.exp %102 : vector<4x8x8xf32>
    %cst_46 = arith.constant dense<0.000000e+00> : vector<4x8xf32>
    %104 = vector.multi_reduction <add>, %103, %cst_46 [2] : vector<4x8x8xf32> to vector<4x8xf32>
    %105 = vector.shape_cast %104 : vector<4x8xf32> to vector<4x8x1xf32>
    %106 = tpu.reciprocal %105 : vector<4x8x1xf32> -> vector<4x8x1xf32>
    %107 = vector.broadcast %106 : vector<4x8x1xf32> to vector<4x8x8xf32>
    %108 = arith.mulf %103, %107 : vector<4x8x8xf32>
    %c0_47 = arith.constant 0 : index
    %c0_48 = arith.constant 0 : index
    %c0_49 = arith.constant 0 : index
    %c0_50 = arith.constant 0 : index
    %109 = vector.load %arg17[%c0_47, %c0_48, %c0_49, %c0_50] : memref<1x4x8x8xf32, #tpu.memory_space<vmem>>, vector<1x4x8x8xf32>
    %110 = vector.shape_cast %109 : vector<1x4x8x8xf32> to vector<4x8x8xf32>
    %111 = vector.shape_cast %108 : vector<4x8x8xf32> to vector<1x4x8x8xf32>
    tpu.vector_store %arg17[%c0_47, %c0_48, %c0_49, %c0_50], %111 {strides = array<i32>} : memref<1x4x8x8xf32, #tpu.memory_space<vmem>>, vector<1x4x8x8xf32>,
    "tpu.trace_start"() <{level = 10 : i32, message = "hqk,hkd->hqd"}> : () -> ()
    %cst_51 = arith.constant dense<0.000000e+00> : vector<4x8x8xf32>
    %112 = tpu.matmul %108, %91, %cst_51 {dimension_numbers = #tpu.dot_dimension_numbers<[2], [1], [1], [2], [0, 0, 0, 1, 1, 2], [0], [0]>} : vector<4x8x8xf32>, vector<4x8x8xf32>, vector<4x8x8xf32> -> vector<4x8x8xf32>
    "tpu.trace_stop"() : () -> ()
    %113 = tpu.transpose %112, [1, 0, 2] : vector<4x8x8xf32> -> vector<8x4x8xf32>
    %114 = vector.shape_cast %113 : vector<8x4x8xf32> to vector<8x32xf32>
    %cst_52 = arith.constant dense<0.000000e+00> : vector<8x32xf32>
    %115 = tpu.matmul %114, %79, %cst_52 {dimension_numbers = #tpu.dot_dimension_numbers<[1], [0], [0], [1], [0, 0, 1, 1], [], []>} : vector<8x32xf32>, vector<32x32xf32>, vector<8x32xf32> -> vector<8x32xf32>
    %116 = vector.broadcast %80 : vector<1x32xf32> to vector<8x32xf32>
    %117 = arith.addf %115, %116 : vector<8x32xf32>
    %118 = arith.addf %117, %72 : vector<8x32xf32>
    %119 = vector.extract_strided_slice %4 {offsets = [10, 0], sizes = [1, 32], strides = [1, 1]} : vector<16x32xf32> to vector<1x32xf32>
    %120 = vector.extract_strided_slice %4 {offsets = [11, 0], sizes = [1, 32], strides = [1, 1]} : vector<16x32xf32> to vector<1x32xf32>
    %cst_53 = arith.constant dense<0.000000e+00> : vector<8xf32>
    %121 = vector.multi_reduction <add>, %118, %cst_53 [1] : vector<8x32xf32> to vector<8xf32>
    %122 = vector.shape_cast %121 : vector<8xf32> to vector<8x1xf32>
    %cst_54 = arith.constant 3.200000e+01 : f32
    %123 = vector.broadcast %cst_54 : f32 to vector<8x1xf32>
    %124 = arith.divf %122, %123 : vector<8x1xf32>
    %125 = vector.broadcast %124 : vector<8x1xf32> to vector<8x32xf32>
    %126 = arith.subf %118, %125 : vector<8x32xf32>
    %127 = arith.mulf %126, %126 : vector<8x32xf32>
    %cst_55 = arith.constant dense<0.000000e+00> : vector<8xf32>
    %128 = vector.multi_reduction <add>, %127, %cst_55 [1] : vector<8x32xf32> to vector<8xf32>
    %129 = vector.shape_cast %128 : vector<8xf32> to vector<8x1xf32>
    %cst_56 = arith.constant 3.200000e+01 : f32
    %130 = vector.broadcast %cst_56 : f32 to vector<8x1xf32>
    %131 = arith.divf %129, %130 : vector<8x1xf32>
    %cst_57 = arith.constant 9.99999997E-7 : f32
    %132 = vector.broadcast %cst_57 : f32 to vector<8x1xf32>
    %133 = arith.addf %131, %132 : vector<8x1xf32>
    %134 = math.rsqrt %133 : vector<8x1xf32>
    %135 = vector.broadcast %134 : vector<8x1xf32> to vector<8x32xf32>
    %136 = arith.mulf %126, %135 : vector<8x32xf32>
    %137 = vector.broadcast %119 : vector<1x32xf32> to vector<8x32xf32>
    %138 = arith.mulf %136, %137 : vector<8x32xf32>
    %139 = vector.broadcast %120 : vector<1x32xf32> to vector<8x32xf32>
    %140 = arith.addf %138, %139 : vector<8x32xf32>
    %c0_58 = arith.constant 0 : index
    %c0_59 = arith.constant 0 : index
    %141 = vector.load %arg11[%c0_58, %c0_59] : memref<32x64xf32, #tpu.memory_space<vmem>>, vector<32x64xf32>
    %cst_60 = arith.constant dense<0.000000e+00> : vector<8x64xf32>
    %142 = tpu.matmul %140, %141, %cst_60 {dimension_numbers = #tpu.dot_dimension_numbers<[1], [0], [0], [1], [0, 0, 1, 1], [], []>} : vector<8x32xf32>, vector<32x64xf32>, vector<8x64xf32> -> vector<8x64xf32>
    %c0_61 = arith.constant 0 : index
    %c0_62 = arith.constant 0 : index
    %143 = vector.load %arg12[%c0_61, %c0_62] : memref<1x64xf32, #tpu.memory_space<vmem>>, vector<1x64xf32>
    %144 = vector.broadcast %143 : vector<1x64xf32> to vector<8x64xf32>
    %145 = arith.addf %142, %144 : vector<8x64xf32>
    %cst_63 = arith.constant 0.000000e+00 : f32
    %146 = vector.broadcast %cst_63 : f32 to vector<8x64xf32>
    %147 = arith.maximumf %145, %146 : vector<8x64xf32>
    %c0_64 = arith.constant 0 : index
    %c0_65 = arith.constant 0 : index
    %148 = vector.load %arg13[%c0_64, %c0_65] : memref<64x32xf32, #tpu.memory_space<vmem>>, vector<64x32xf32>
    %cst_66 = arith.constant dense<0.000000e+00> : vector<8x32xf32>
    %149 = tpu.matmul %147, %148, %cst_66 {dimension_numbers = #tpu.dot_dimension_numbers<[1], [0], [0], [1], [0, 0, 1, 1], [], []>} : vector<8x64xf32>, vector<64x32xf32>, vector<8x32xf32> -> vector<8x32xf32>
    %150 = vector.extract_strided_slice %4 {offsets = [12, 0], sizes = [1, 32], strides = [1, 1]} : vector<16x32xf32> to vector<1x32xf32>
    %151 = vector.broadcast %150 : vector<1x32xf32> to vector<8x32xf32>
    %152 = arith.addf %149, %151 : vector<8x32xf32>
    %153 = arith.addf %152, %140 : vector<8x32xf32>
    %154 = vector.extract_strided_slice %4 {offsets = [13, 0], sizes = [1, 32], strides = [1, 1]} : vector<16x32xf32> to vector<1x32xf32>
    %155 = vector.extract_strided_slice %4 {offsets = [14, 0], sizes = [1, 32], strides = [1, 1]} : vector<16x32xf32> to vector<1x32xf32>
    %cst_67 = arith.constant dense<0.000000e+00> : vector<8xf32>
    %156 = vector.multi_reduction <add>, %153, %cst_67 [1] : vector<8x32xf32> to vector<8xf32>
    %157 = vector.shape_cast %156 : vector<8xf32> to vector<8x1xf32>
    %cst_68 = arith.constant 3.200000e+01 : f32
    %158 = vector.broadcast %cst_68 : f32 to vector<8x1xf32>
    %159 = arith.divf %157, %158 : vector<8x1xf32>
    %160 = vector.broadcast %159 : vector<8x1xf32> to vector<8x32xf32>
    %161 = arith.subf %153, %160 : vector<8x32xf32>
    %162 = arith.mulf %161, %161 : vector<8x32xf32>
    %cst_69 = arith.constant dense<0.000000e+00> : vector<8xf32>
    %163 = vector.multi_reduction <add>, %162, %cst_69 [1] : vector<8x32xf32> to vector<8xf32>
    %164 = vector.shape_cast %163 : vector<8xf32> to vector<8x1xf32>
    %cst_70 = arith.constant 3.200000e+01 : f32
    %165 = vector.broadcast %cst_70 : f32 to vector<8x1xf32>
    %166 = arith.divf %164, %165 : vector<8x1xf32>
    %cst_71 = arith.constant 9.99999997E-7 : f32
    %167 = vector.broadcast %cst_71 : f32 to vector<8x1xf32>
    %168 = arith.addf %166, %167 : vector<8x1xf32>
    %169 = math.rsqrt %168 : vector<8x1xf32>
    %170 = vector.broadcast %169 : vector<8x1xf32> to vector<8x32xf32>
    %171 = arith.mulf %161, %170 : vector<8x32xf32>
    %172 = vector.broadcast %154 : vector<1x32xf32> to vector<8x32xf32>
    %173 = arith.mulf %171, %172 : vector<8x32xf32>
    %174 = vector.broadcast %155 : vector<1x32xf32> to vector<8x32xf32>
    %175 = arith.addf %173, %174 : vector<8x32xf32>
    %c0_72 = arith.constant 0 : index
    %c0_73 = arith.constant 0 : index
    %c0_74 = arith.constant 0 : index
    %176 = vector.load %arg15[%c0_72, %c0_73, %c0_74] : memref<1x8x32xf32, #tpu.memory_space<vmem>>, vector<1x8x32xf32>
    %177 = vector.shape_cast %176 : vector<1x8x32xf32> to vector<8x32xf32>
    %178 = vector.shape_cast %175 : vector<8x32xf32> to vector<1x8x32xf32>
    tpu.vector_store %arg15[%c0_72, %c0_73, %c0_74], %178 {strides = array<i32>} : memref<1x8x32xf32, #tpu.memory_space<vmem>>, vector<1x8x32xf32>,
    return
  }
  func.func @transform_0(%arg0: i32) -> (i32, i32, i32) {
    %c0_i32 = arith.constant 0 : i32
    %c0_i32_0 = arith.constant 0 : i32
    %c0_i32_1 = arith.constant 0 : i32
    return %arg0, %c0_i32, %c0_i32_0 : i32, i32, i32
  }
  func.func @transform_1(%arg0: i32) -> (i32, i32, i32) {
    %c0_i32 = arith.constant 0 : i32
    %c0_i32_0 = arith.constant 0 : i32
    %c0_i32_1 = arith.constant 0 : i32
    return %arg0, %c0_i32, %c0_i32_0 : i32, i32, i32
  }
  func.func @transform_2(%arg0: i32) -> (i32, i32) {
    %c0_i32 = arith.constant 0 : i32
    %c0_i32_0 = arith.constant 0 : i32
    %c0_i32_1 = arith.constant 0 : i32
    return %c0_i32, %c0_i32_0 : i32, i32
  }
  func.func @transform_3(%arg0: i32) -> (i32, i32) {
    %c0_i32 = arith.constant 0 : i32
    %c0_i32_0 = arith.constant 0 : i32
    %c0_i32_1 = arith.constant 0 : i32
    return %c0_i32, %c0_i32_0 : i32, i32
  }
  func.func @transform_4(%arg0: i32) -> (i32, i32) {
    %c0_i32 = arith.constant 0 : i32
    %c0_i32_0 = arith.constant 0 : i32
    %c0_i32_1 = arith.constant 0 : i32
    return %c0_i32, %c0_i32_0 : i32, i32
  }
  func.func @transform_5(%arg0: i32) -> (i32, i32) {
    %c0_i32 = arith.constant 0 : i32
    %c0_i32_0 = arith.constant 0 : i32
    %c0_i32_1 = arith.constant 0 : i32
    return %c0_i32, %c0_i32_0 : i32, i32
  }
  func.func @transform_6(%arg0: i32) -> (i32, i32) {
    %c0_i32 = arith.constant 0 : i32
    %c0_i32_0 = arith.constant 0 : i32
    %c0_i32_1 = arith.constant 0 : i32
    return %c0_i32, %c0_i32_0 : i32, i32
  }
  func.func @transform_7(%arg0: i32) -> (i32, i32) {
    %c0_i32 = arith.constant 0 : i32
    %c0_i32_0 = arith.constant 0 : i32
    %c0_i32_1 = arith.constant 0 : i32
    return %c0_i32, %c0_i32_0 : i32, i32
  }
  func.func @transform_8(%arg0: i32) -> (i32, i32) {
    %c0_i32 = arith.constant 0 : i32
    %c0_i32_0 = arith.constant 0 : i32
    %c0_i32_1 = arith.constant 0 : i32
    return %c0_i32, %c0_i32_0 : i32, i32
  }
  func.func @transform_9(%arg0: i32) -> (i32, i32) {
    %c0_i32 = arith.constant 0 : i32
    %c0_i32_0 = arith.constant 0 : i32
    %c0_i32_1 = arith.constant 0 : i32
    return %c0_i32, %c0_i32_0 : i32, i32
  }
  func.func @transform_10(%arg0: i32) -> (i32, i32) {
    %c0_i32 = arith.constant 0 : i32
    %c0_i32_0 = arith.constant 0 : i32
    %c0_i32_1 = arith.constant 0 : i32
    return %c0_i32, %c0_i32_0 : i32, i32
  }
  func.func @transform_11(%arg0: i32) -> (i32, i32) {
    %c0_i32 = arith.constant 0 : i32
    %c0_i32_0 = arith.constant 0 : i32
    %c0_i32_1 = arith.constant 0 : i32
    return %c0_i32, %c0_i32_0 : i32, i32
  }
  func.func @transform_12(%arg0: i32) -> (i32, i32) {
    %c0_i32 = arith.constant 0 : i32
    %c0_i32_0 = arith.constant 0 : i32
    %c0_i32_1 = arith.constant 0 : i32
    return %c0_i32, %c0_i32_0 : i32, i32
  }
  func.func @transform_13(%arg0: i32) -> (i32, i32) {
    %c0_i32 = arith.constant 0 : i32
    %c0_i32_0 = arith.constant 0 : i32
    %c0_i32_1 = arith.constant 0 : i32
    return %c0_i32, %c0_i32_0 : i32, i32
  }
  func.func @transform_14(%arg0: i32) -> (i32, i32, i32) {
    %c0_i32 = arith.constant 0 : i32
    %c0_i32_0 = arith.constant 0 : i32
    %c0_i32_1 = arith.constant 0 : i32
    return %arg0, %c0_i32, %c0_i32_0 : i32, i32, i32
  }
  func.func @transform_15(%arg0: i32) -> (i32, i32, i32, i32) {
    %c0_i32 = arith.constant 0 : i32
    %c0_i32_0 = arith.constant 0 : i32
    %c0_i32_1 = arith.constant 0 : i32
    %c0_i32_2 = arith.constant 0 : i32
    return %arg0, %c0_i32, %c0_i32_0, %c0_i32_1 : i32, i32, i32, i32
  }
  func.func @transform_16(%arg0: i32) -> (i32, i32, i32, i32) {
    %c0_i32 = arith.constant 0 : i32
    %c0_i32_0 = arith.constant 0 : i32
    %c0_i32_1 = arith.constant 0 : i32
    %c0_i32_2 = arith.constant 0 : i32
    return %arg0, %c0_i32, %c0_i32_0, %c0_i32_1 : i32, i32, i32, i32
  }
}

</mosaic_0001>

<llo_original>
// kernel: tpu_custom_call.1
$region0: #{tpu_custom_call.1}
  #allocation0 [shape = 'u32[]', space=smem, size = 0x4, offset = 0x4, fixed_abs, tag = 'smem constant byte address 0x4 - core index']
  #allocation1 [shape = 'u32[144,128]{1,0:T(1,128)}', space=vmem, size = 0x12000, scoped, tag = 'internal scratch']
  %s0 = inlined_call_operand.hbm [shape: f32[2,8,32], index: 0, kind: input, shape index: {}]
  %s1 = inlined_call_operand.hbm [shape: f32[2,8,32], index: 1, kind: input, shape index: {}]
  %s2 = inlined_call_operand.vmem [shape: f32[32,32], index: 2, kind: input, shape index: {}]
  %s3 = inlined_call_operand.vmem [shape: f32[32,32], index: 3, kind: input, shape index: {}]
  %s4 = inlined_call_operand.vmem [shape: f32[32,32], index: 4, kind: input, shape index: {}]
  %s5 = inlined_call_operand.hbm [shape: f32[32,32], index: 5, kind: input, shape index: {}]
  %s6 = inlined_call_operand.hbm [shape: f32[32,32], index: 6, kind: input, shape index: {}]
  %s7 = inlined_call_operand.hbm [shape: f32[32,32], index: 7, kind: input, shape index: {}]
  %s8 = inlined_call_operand.hbm [shape: f32[32,32], index: 8, kind: input, shape index: {}]
  %s9 = inlined_call_operand.hbm [shape: f32[32,32], index: 9, kind: input, shape index: {}]
  %s10 = inlined_call_operand.hbm [shape: f32[32,64], index: 10, kind: input, shape index: {}]
  %s11 = inlined_call_operand.vmem [shape: f32[1,64], index: 11, kind: input, shape index: {}]
  %s12 = inlined_call_operand.vmem [shape: f32[64,32], index: 12, kind: input, shape index: {}]
  %s13 = inlined_call_operand.vmem [shape: f32[16,32], index: 13, kind: input, shape index: {}]
  %s14 = inlined_call_operand.hbm [shape: f32[2,8,32], index: 14, kind: output, shape index: {0}]
  %s15 = inlined_call_operand.hbm [shape: f32[2,4,8,8], index: 15, kind: output, shape index: {1}]
  %s16 = inlined_call_operand.hbm [shape: f32[2,4,8,8], index: 16, kind: output, shape index: {2}]
  %17 = xla_tuple %s14, %s15, %s16
  %s18 = sld [smem:[#allocation0]]
  $region137: #{tpu_custom_call.1} parent=0
    _
  %s20 = ssub.s32 1, %s18
  %s21 = scalar_select 0, %s20, %s18
  $region1: #{tpu_custom_call.1} parent=0
    #allocation2 [shape = 'u8[8192]{0}', space=vmem, size = 0x2000, scoped, tag = 'input window, operand 0']
    #allocation3 [shape = 's32[2]{0}', space=sflag, size = 0x8, scoped, tag = 'scoped memory for tpu_custom_call.1']
    #allocation4 [shape = 's32[2]{0}', space=sflag, size = 0x8, scoped, tag = 'scoped memory for tpu_custom_call.1']
    #allocation5 [shape = 'u8[8192]{0}', space=vmem, size = 0x2000, scoped, tag = 'input window, operand 1']
    #allocation6 [shape = 's32[2]{0}', space=sflag, size = 0x8, scoped, tag = 'scoped memory for tpu_custom_call.1']
    #allocation7 [shape = 'u8[16384]{0}', space=vmem, size = 0x4000, scoped, tag = 'input window, operand 5, single buffered']
    #allocation8 [shape = 'u8[16384]{0}', space=vmem, size = 0x4000, scoped, tag = 'input window, operand 6, single buffered']
    #allocation9 [shape = 's32[1]{0}', space=sflag, size = 0x4, scoped, tag = 'scoped memory for tpu_custom_call.1']
    #allocation10 [shape = 'u8[16384]{0}', space=vmem, size = 0x4000, scoped, tag = 'input window, operand 7, single buffered']
    #allocation11 [shape = 'u8[16384]{0}', space=vmem, size = 0x4000, scoped, tag = 'input window, operand 8, single buffered']
    #allocation12 [shape = 's32[1]{0}', space=sflag, size = 0x4, scoped, tag = 'scoped memory for tpu_custom_call.1']
    #allocation13 [shape = 'u8[16384]{0}', space=vmem, size = 0x4000, scoped, tag = 'input window, operand 9, single buffered']
    #allocation14 [shape = 'u8[16384]{0}', space=vmem, size = 0x4000, scoped, tag = 'input window, operand 10, single buffered']
    #allocation15 [shape = 's32[1]{0}', space=sflag, size = 0x4, scoped, tag = 'scoped memory for tpu_custom_call.1']
    #allocation16 [shape = 'u8[8192]{0}', space=vmem, size = 0x2000, scoped, tag = 'output window, operand 0']
    #allocation17 [shape = 'u8[32768]{0}', space=vmem, size = 0x8000, scoped, tag = 'output window, operand 1']
    #allocation18 [shape = 's32[2]{0}', space=sflag, size = 0x8, scoped, tag = 'scoped memory for tpu_custom_call.1']
    #allocation19 [shape = 'u8[32768]{0}', space=vmem, size = 0x8000, scoped, tag = 'output window, operand 2']
    %22 = vsyncpa [#allocation3], 0
    %s23 = scalar_lea.sflag [#allocation3], 1
    %24 = vsyncpa %s23, 0
    %25 = vsyncpa [#allocation6], 0
    %s26 = scalar_lea.sflag [#allocation6], 1
    %27 = vsyncpa %s26, 0
    %28 = vsyncpa [#allocation9], 0
    %29 = vsyncpa [#allocation12], 0
    %30 = vsyncpa [#allocation15], 0
    %31 = vsyncpa [#allocation4], 0
    %s32 = scalar_lea.sflag [#allocation4], 1
    %33 = vsyncpa %s32, 0
    %34 = vsyncpa [#allocation18], 0
    %s35 = scalar_lea.sflag [#allocation18], 1
    %36 = vsyncpa %s35, 0
    loop: start=0, step=1, limit=4
    $region2: #{tpu_custom_call.1} parent=1 // loop_pre_header
      _
    $region3: #{tpu_custom_call.1} parent=1 // loop_header
      %s38 = sphi 0, %s42
      %p39 = scmp.ge.s32.totalorder %s38, 4
      %s48 = sphi 0, %s50
      %s51 = sphi 0, %s48
      %s52 = sphi 0, %s51
      %s68 = sphi 0, %s52
      %s74 = sphi 0, %s76
      %s77 = sphi 0, %s74
      %s78 = sphi 0, %s77
      %s94 = sphi 0, %s78
      %s98 = sphi 0, %s98
      %s100 = sphi 0, %s98
      %s101 = sphi 0, %s100
      %s115 = sphi 0, %s101
      %s119 = sphi 0, %s119
      %s121 = sphi 0, %s119
      %s122 = sphi 0, %s121
      %s136 = sphi 0, %s122
      %s140 = sphi 0, %s140
      %s142 = sphi 0, %s140
      %s143 = sphi 0, %s142
      %s157 = sphi 0, %s143
      %s161 = sphi 0, %s161
      %s163 = sphi 0, %s161
      %s164 = sphi 0, %s163
      %s178 = sphi 0, %s164
      %s182 = sphi 0, %s182
      %s184 = sphi 0, %s182
      %s185 = sphi 0, %s184
      %s199 = sphi 0, %s185
      %s203 = sphi 0, %s203
      %s205 = sphi 0, %s203
      %s206 = sphi 0, %s205
      %s220 = sphi 0, %s206
      %s224 = sphi 0, %s224
      %s226 = sphi 0, %s224
      %s227 = sphi 0, %s226
      %s241 = sphi 0, %s227
      %s245 = sphi 0, %s245
      %s247 = sphi 0, %s245
      %s248 = sphi 0, %s247
      %s262 = sphi 0, %s248
      %s266 = sphi 0, %s266
      %s268 = sphi 0, %s266
      %s269 = sphi 0, %s268
      %s283 = sphi 0, %s269
      %s287 = sphi 0, %s287
      %s289 = sphi 0, %s287
      %s290 = sphi 0, %s289
      %s304 = sphi 0, %s290
      %s308 = sphi 0, %s308
      %s310 = sphi 0, %s308
      %s311 = sphi 0, %s310
      %s325 = sphi 0, %s311
      %s329 = sphi 0, %s329
      %s331 = sphi 0, %s329
      %s332 = sphi 0, %s331
      %s346 = sphi 0, %s332
      %s352 = sphi 0, %s354
      %s355 = sphi 0, %s352
      %s356 = sphi 0, %s355
      %s372 = sphi 0, %s356
      %s378 = sphi 0, %s380
      %s381 = sphi 0, %s378
      %s382 = sphi 0, %s381
      %s398 = sphi 0, %s382
      %s404 = sphi 0, %s406
      %s407 = sphi 0, %s404
      %s408 = sphi 0, %s407
      %s424 = sphi 0, %s408
    $region4: #{tpu_custom_call.1} parent=1 // loop_header_branch
      %41 = sbr.rel (%p39) target = $region8
    $region5: #{tpu_custom_call.1} parent=1 // loop_body
      %s43 = ssub.s32 %s38, 1
      %s44 = ssub.s32 %s38, 2
      %s45 = sadd.s32 %s38, 1
      %s46 = ssub.s32 %s38, %s45
      %p47 = scmp.eq.s32.totalorder %s46, 0
      %s49 = sadd.s32 %s48, 1
      %s50 = scalar_select %p47, %s48, %s49
      %p53 = pneg %p47
      %p54 = scmp.eq.s32.totalorder %s38, 1
      %p55 = por %p53, %p54
      %p56 = scmp.ne.s32.totalorder %s48, %s51
      %p57 = scmp.eq.s32.totalorder %s38, 0
      %p58 = por %p56, %p57
      %p59 = scmp.ne.s32.totalorder %s48, %s51
      %p60 = scmp.eq.s32.totalorder %s43, 1
      %p61 = por %p59, %p60
      %p62 = scmp.ne.s32.totalorder %s51, %s52
      %p63 = scmp.eq.s32.totalorder %s43, 0
      %p64 = por %p62, %p63
      %p65 = scmp.ne.s32.totalorder %s51, %s52
      %p66 = scmp.eq.s32.totalorder %s44, 1
      %p67 = por %p65, %p66
      %p69 = scmp.ne.s32.totalorder %s52, %s68
      %p70 = scmp.eq.s32.totalorder %s44, 0
      %p71 = por %p69, %p70
      %s72 = ssub.s32 %s38, %s45
      %p73 = scmp.eq.s32.totalorder %s72, 0
      %s75 = sadd.s32 %s74, 1
      %s76 = scalar_select %p73, %s74, %s75
      %p79 = pneg %p73
      %p80 = scmp.eq.s32.totalorder %s38, 1
      %p81 = por %p79, %p80
      %p82 = scmp.ne.s32.totalorder %s74, %s77
      %p83 = scmp.eq.s32.totalorder %s38, 0
      %p84 = por %p82, %p83
      %p85 = scmp.ne.s32.totalorder %s74, %s77
      %p86 = scmp.eq.s32.totalorder %s43, 1
      %p87 = por %p85, %p86
      %p88 = scmp.ne.s32.totalorder %s77, %s78
      %p89 = scmp.eq.s32.totalorder %s43, 0
      %p90 = por %p88, %p89
      %p91 = scmp.ne.s32.totalorder %s77, %s78
      %p92 = scmp.eq.s32.totalorder %s44, 1
      %p93 = por %p91, %p92
      %p95 = scmp.ne.s32.totalorder %s78, %s94
      %p96 = scmp.eq.s32.totalorder %s44, 0
      %p97 = por %p95, %p96
      %s99 = sadd.s32 %s98, 1
      %p102 = scmp.eq.s32.totalorder %s38, 1
      %p103 = scmp.ne.s32.totalorder %s98, %s100
      %p104 = scmp.eq.s32.totalorder %s38, 0
      %p105 = por %p103, %p104
      %p106 = scmp.ne.s32.totalorder %s98, %s100
      %p107 = scmp.eq.s32.totalorder %s43, 1
      %p108 = por %p106, %p107
      %p109 = scmp.ne.s32.totalorder %s100, %s101
      %p110 = scmp.eq.s32.totalorder %s43, 0
      %p111 = por %p109, %p110
      %p112 = scmp.ne.s32.totalorder %s100, %s101
      %p113 = scmp.eq.s32.totalorder %s44, 1
      %p114 = por %p112, %p113
      %p116 = scmp.ne.s32.totalorder %s101, %s115
      %p117 = scmp.eq.s32.totalorder %s44, 0
      %p118 = por %p116, %p117
      %s120 = sadd.s32 %s119, 1
      %p123 = scmp.eq.s32.totalorder %s38, 1
      %p124 = scmp.ne.s32.totalorder %s119, %s121
      %p125 = scmp.eq.s32.totalorder %s38, 0
      %p126 = por %p124, %p125
      %p127 = scmp.ne.s32.totalorder %s119, %s121
      %p128 = scmp.eq.s32.totalorder %s43, 1
      %p129 = por %p127, %p128
      %p130 = scmp.ne.s32.totalorder %s121, %s122
      %p131 = scmp.eq.s32.totalorder %s43, 0
      %p132 = por %p130, %p131
      %p133 = scmp.ne.s32.totalorder %s121, %s122
      %p134 = scmp.eq.s32.totalorder %s44, 1
      %p135 = por %p133, %p134
      %p137 = scmp.ne.s32.totalorder %s122, %s136
      %p138 = scmp.eq.s32.totalorder %s44, 0
      %p139 = por %p137, %p138
      %s141 = sadd.s32 %s140, 1
      %p144 = scmp.eq.s32.totalorder %s38, 1
      %p145 = scmp.ne.s32.totalorder %s140, %s142
      %p146 = scmp.eq.s32.totalorder %s38, 0
      %p147 = por %p145, %p146
      %p148 = scmp.ne.s32.totalorder %s140, %s142
      %p149 = scmp.eq.s32.totalorder %s43, 1
      %p150 = por %p148, %p149
      %p151 = scmp.ne.s32.totalorder %s142, %s143
      %p152 = scmp.eq.s32.totalorder %s43, 0
      %p153 = por %p151, %p152
      %p154 = scmp.ne.s32.totalorder %s142, %s143
      %p155 = scmp.eq.s32.totalorder %s44, 1
      %p156 = por %p154, %p155
      %p158 = scmp.ne.s32.totalorder %s143, %s157
      %p159 = scmp.eq.s32.totalorder %s44, 0
      %p160 = por %p158, %p159
      %s162 = sadd.s32 %s161, 1
      %p165 = scmp.eq.s32.totalorder %s38, 1
      %p166 = scmp.ne.s32.totalorder %s161, %s163
      %p167 = scmp.eq.s32.totalorder %s38, 0
      %p168 = por %p166, %p167
      %p169 = scmp.ne.s32.totalorder %s161, %s163
      %p170 = scmp.eq.s32.totalorder %s43, 1
      %p171 = por %p169, %p170
      %p172 = scmp.ne.s32.totalorder %s163, %s164
      %p173 = scmp.eq.s32.totalorder %s43, 0
      %p174 = por %p172, %p173
      %p175 = scmp.ne.s32.totalorder %s163, %s164
      %p176 = scmp.eq.s32.totalorder %s44, 1
      %p177 = por %p175, %p176
      %p179 = scmp.ne.s32.totalorder %s164, %s178
      %p180 = scmp.eq.s32.totalorder %s44, 0
      %p181 = por %p179, %p180
      %s183 = sadd.s32 %s182, 1
      %p186 = scmp.eq.s32.totalorder %s38, 1
      %p187 = scmp.ne.s32.totalorder %s182, %s184
      %p188 = scmp.eq.s32.totalorder %s38, 0
      %p189 = por %p187, %p188
      %p190 = scmp.ne.s32.totalorder %s182, %s184
      %p191 = scmp.eq.s32.totalorder %s43, 1
      %p192 = por %p190, %p191
      %p193 = scmp.ne.s32.totalorder %s184, %s185
      %p194 = scmp.eq.s32.totalorder %s43, 0
      %p195 = por %p193, %p194
      %p196 = scmp.ne.s32.totalorder %s184, %s185
      %p197 = scmp.eq.s32.totalorder %s44, 1
      %p198 = por %p196, %p197
      %p200 = scmp.ne.s32.totalorder %s185, %s199
      %p201 = scmp.eq.s32.totalorder %s44, 0
      %p202 = por %p200, %p201
      %s204 = sadd.s32 %s203, 1
      %p207 = scmp.eq.s32.totalorder %s38, 1
      %p208 = scmp.ne.s32.totalorder %s203, %s205
      %p209 = scmp.eq.s32.totalorder %s38, 0
      %p210 = por %p208, %p209
      %p211 = scmp.ne.s32.totalorder %s203, %s205
      %p212 = scmp.eq.s32.totalorder %s43, 1
      %p213 = por %p211, %p212
      %p214 = scmp.ne.s32.totalorder %s205, %s206
      %p215 = scmp.eq.s32.totalorder %s43, 0
      %p216 = por %p214, %p215
      %p217 = scmp.ne.s32.totalorder %s205, %s206
      %p218 = scmp.eq.s32.totalorder %s44, 1
      %p219 = por %p217, %p218
      %p221 = scmp.ne.s32.totalorder %s206, %s220
      %p222 = scmp.eq.s32.totalorder %s44, 0
      %p223 = por %p221, %p222
      %s225 = sadd.s32 %s224, 1
      %p228 = scmp.eq.s32.totalorder %s38, 1
      %p229 = scmp.ne.s32.totalorder %s224, %s226
      %p230 = scmp.eq.s32.totalorder %s38, 0
      %p231 = por %p229, %p230
      %p232 = scmp.ne.s32.totalorder %s224, %s226
      %p233 = scmp.eq.s32.totalorder %s43, 1
      %p234 = por %p232, %p233
      %p235 = scmp.ne.s32.totalorder %s226, %s227
      %p236 = scmp.eq.s32.totalorder %s43, 0
      %p237 = por %p235, %p236
      %p238 = scmp.ne.s32.totalorder %s226, %s227
      %p239 = scmp.eq.s32.totalorder %s44, 1
      %p240 = por %p238, %p239
      %p242 = scmp.ne.s32.totalorder %s227, %s241
      %p243 = scmp.eq.s32.totalorder %s44, 0
      %p244 = por %p242, %p243
      %s246 = sadd.s32 %s245, 1
      %p249 = scmp.eq.s32.totalorder %s38, 1
      %p250 = scmp.ne.s32.totalorder %s245, %s247
      %p251 = scmp.eq.s32.totalorder %s38, 0
      %p252 = por %p250, %p251
      %p253 = scmp.ne.s32.totalorder %s245, %s247
      %p254 = scmp.eq.s32.totalorder %s43, 1
      %p255 = por %p253, %p254
      %p256 = scmp.ne.s32.totalorder %s247, %s248
      %p257 = scmp.eq.s32.totalorder %s43, 0
      %p258 = por %p256, %p257
      %p259 = scmp.ne.s32.totalorder %s247, %s248
      %p260 = scmp.eq.s32.totalorder %s44, 1
      %p261 = por %p259, %p260
      %p263 = scmp.ne.s32.totalorder %s248, %s262
      %p264 = scmp.eq.s32.totalorder %s44, 0
      %p265 = por %p263, %p264
      %s267 = sadd.s32 %s266, 1
      %p270 = scmp.eq.s32.totalorder %s38, 1
      %p271 = scmp.ne.s32.totalorder %s266, %s268
      %p272 = scmp.eq.s32.totalorder %s38, 0
      %p273 = por %p271, %p272
      %p274 = scmp.ne.s32.totalorder %s266, %s268
      %p275 = scmp.eq.s32.totalorder %s43, 1
      %p276 = por %p274, %p275
      %p277 = scmp.ne.s32.totalorder %s268, %s269
      %p278 = scmp.eq.s32.totalorder %s43, 0
      %p279 = por %p277, %p278
      %p280 = scmp.ne.s32.totalorder %s268, %s269
      %p281 = scmp.eq.s32.totalorder %s44, 1
      %p282 = por %p280, %p281
      %p284 = scmp.ne.s32.totalorder %s269, %s283
      %p285 = scmp.eq.s32.totalorder %s44, 0
      %p286 = por %p284, %p285
      %s288 = sadd.s32 %s287, 1
      %p291 = scmp.eq.s32.totalorder %s38, 1
      %p292 = scmp.ne.s32.totalorder %s287, %s289
      %p293 = scmp.eq.s32.totalorder %s38, 0
      %p294 = por %p292, %p293
      %p295 = scmp.ne.s32.totalorder %s287, %s289
      %p296 = scmp.eq.s32.totalorder %s43, 1
      %p297 = por %p295, %p296
      %p298 = scmp.ne.s32.totalorder %s289, %s290
      %p299 = scmp.eq.s32.totalorder %s43, 0
      %p300 = por %p298, %p299
      %p301 = scmp.ne.s32.totalorder %s289, %s290
      %p302 = scmp.eq.s32.totalorder %s44, 1
      %p303 = por %p301, %p302
      %p305 = scmp.ne.s32.totalorder %s290, %s304
      %p306 = scmp.eq.s32.totalorder %s44, 0
      %p307 = por %p305, %p306
      %s309 = sadd.s32 %s308, 1
      %p312 = scmp.eq.s32.totalorder %s38, 1
      %p313 = scmp.ne.s32.totalorder %s308, %s310
      %p314 = scmp.eq.s32.totalorder %s38, 0
      %p315 = por %p313, %p314
      %p316 = scmp.ne.s32.totalorder %s308, %s310
      %p317 = scmp.eq.s32.totalorder %s43, 1
      %p318 = por %p316, %p317
      %p319 = scmp.ne.s32.totalorder %s310, %s311
      %p320 = scmp.eq.s32.totalorder %s43, 0
      %p321 = por %p319, %p320
      %p322 = scmp.ne.s32.totalorder %s310, %s311
      %p323 = scmp.eq.s32.totalorder %s44, 1
      %p324 = por %p322, %p323
      %p326 = scmp.ne.s32.totalorder %s311, %s325
      %p327 = scmp.eq.s32.totalorder %s44, 0
      %p328 = por %p326, %p327
      %s330 = sadd.s32 %s329, 1
      %p333 = scmp.eq.s32.totalorder %s38, 1
      %p334 = scmp.ne.s32.totalorder %s329, %s331
      %p335 = scmp.eq.s32.totalorder %s38, 0
      %p336 = por %p334, %p335
      %p337 = scmp.ne.s32.totalorder %s329, %s331
      %p338 = scmp.eq.s32.totalorder %s43, 1
      %p339 = por %p337, %p338
      %p340 = scmp.ne.s32.totalorder %s331, %s332
      %p341 = scmp.eq.s32.totalorder %s43, 0
      %p342 = por %p340, %p341
      %p343 = scmp.ne.s32.totalorder %s331, %s332
      %p344 = scmp.eq.s32.totalorder %s44, 1
      %p345 = por %p343, %p344
      %p347 = scmp.ne.s32.totalorder %s332, %s346
      %p348 = scmp.eq.s32.totalorder %s44, 0
      %p349 = por %p347, %p348
      %s350 = ssub.s32 %s38, %s45
      %p351 = scmp.eq.s32.totalorder %s350, 0
      %s353 = sadd.s32 %s352, 1
      %s354 = scalar_select %p351, %s352, %s353
      %p357 = pneg %p351
      %p358 = scmp.eq.s32.totalorder %s38, 1
      %p359 = por %p357, %p358
      %p360 = scmp.ne.s32.totalorder %s352, %s355
      %p361 = scmp.eq.s32.totalorder %s38, 0
      %p362 = por %p360, %p361
      %p363 = scmp.ne.s32.totalorder %s352, %s355
      %p364 = scmp.eq.s32.totalorder %s43, 1
      %p365 = por %p363, %p364
      %p366 = scmp.ne.s32.totalorder %s355, %s356
      %p367 = scmp.eq.s32.totalorder %s43, 0
      %p368 = por %p366, %p367
      %p369 = scmp.ne.s32.totalorder %s355, %s356
      %p370 = scmp.eq.s32.totalorder %s44, 1
      %p371 = por %p369, %p370
      %p373 = scmp.ne.s32.totalorder %s356, %s372
      %p374 = scmp.eq.s32.totalorder %s44, 0
      %p375 = por %p373, %p374
      %s376 = ssub.s32 %s38, %s45
      %p377 = scmp.eq.s32.totalorder %s376, 0
      %s379 = sadd.s32 %s378, 1
      %s380 = scalar_select %p377, %s378, %s379
      %p383 = pneg %p377
      %p384 = scmp.eq.s32.totalorder %s38, 1
      %p385 = por %p383, %p384
      %p386 = scmp.ne.s32.totalorder %s378, %s381
      %p387 = scmp.eq.s32.totalorder %s38, 0
      %p388 = por %p386, %p387
      %p389 = scmp.ne.s32.totalorder %s378, %s381
      %p390 = scmp.eq.s32.totalorder %s43, 1
      %p391 = por %p389, %p390
      %p392 = scmp.ne.s32.totalorder %s381, %s382
      %p393 = scmp.eq.s32.totalorder %s43, 0
      %p394 = por %p392, %p393
      %p395 = scmp.ne.s32.totalorder %s381, %s382
      %p396 = scmp.eq.s32.totalorder %s44, 1
      %p397 = por %p395, %p396
      %p399 = scmp.ne.s32.totalorder %s382, %s398
      %p400 = scmp.eq.s32.totalorder %s44, 0
      %p401 = por %p399, %p400
      %s402 = ssub.s32 %s38, %s45
      %p403 = scmp.eq.s32.totalorder %s402, 0
      %s405 = sadd.s32 %s404, 1
      %s406 = scalar_select %p403, %s404, %s405
      %p409 = pneg %p403
      %p410 = scmp.eq.s32.totalorder %s38, 1
      %p411 = por %p409, %p410
      %p412 = scmp.ne.s32.totalorder %s404, %s407
      %p413 = scmp.eq.s32.totalorder %s38, 0
      %p414 = por %p412, %p413
      %p415 = scmp.ne.s32.totalorder %s404, %s407
      %p416 = scmp.eq.s32.totalorder %s43, 1
      %p417 = por %p415, %p416
      %p418 = scmp.ne.s32.totalorder %s407, %s408
      %p419 = scmp.eq.s32.totalorder %s43, 0
      %p420 = por %p418, %p419
      %p421 = scmp.ne.s32.totalorder %s407, %s408
      %p422 = scmp.eq.s32.totalorder %s44, 1
      %p423 = por %p421, %p422
      %p425 = scmp.ne.s32.totalorder %s408, %s424
      %p426 = scmp.eq.s32.totalorder %s44, 0
      %p427 = por %p425, %p426
      %p428 = scmp.le.s32.totalorder 1, %s38
      %p429 = scmp.lt.s32.totalorder %s38, 3
      %p430 = pnand %p428, %p429
      %p431 = pneg %p430
      // Predicated region
      $region9: #{tpu_custom_call.1} parent=5 // pred_check
        _
      $region10: #{tpu_custom_call.1} parent=5 // pred_check_branch
        %433 = sbr.rel (%p430) target = $region12
      $region11: #{tpu_custom_call.1} parent=5 // pred_region
        %s434 = ssub.s32 %s38, 1
        // Predicated region
        $region13: #{tpu_custom_call.1} parent=11 // pred_check
          %p435 = pneg %p111
        $region14: #{tpu_custom_call.1} parent=11 // pred_check_branch
          %437 = sbr.rel (%p435) target = $region16
        $region15: #{tpu_custom_call.1} parent=11 // pred_region
          _
        $region16: #{tpu_custom_call.1} parent=11 // pred_fallthru
          _
        // Predicated region
        $region17: #{tpu_custom_call.1} parent=11 // pred_check
          %p438 = pneg %p132
        $region18: #{tpu_custom_call.1} parent=11 // pred_check_branch
          %440 = sbr.rel (%p438) target = $region20
        $region19: #{tpu_custom_call.1} parent=11 // pred_region
          _
        $region20: #{tpu_custom_call.1} parent=11 // pred_fallthru
          _
        // Predicated region
        $region21: #{tpu_custom_call.1} parent=11 // pred_check
          %p441 = pneg %p153
        $region22: #{tpu_custom_call.1} parent=11 // pred_check_branch
          %443 = sbr.rel (%p441) target = $region24
        $region23: #{tpu_custom_call.1} parent=11 // pred_region
          _
        $region24: #{tpu_custom_call.1} parent=11 // pred_fallthru
          _
        // Predicated region
        $region25: #{tpu_custom_call.1} parent=11 // pred_check
          %p444 = pneg %p174
        $region26: #{tpu_custom_call.1} parent=11 // pred_check_branch
          %446 = sbr.rel (%p444) target = $region28
        $region27: #{tpu_custom_call.1} parent=11 // pred_region
          %s448 = ssub.s32 512, 512
          %449 = vsyncadd [#allocation6], %s448
          %s450 = sshll.u32 [#allocation7], 4
          %s451 = int_to_ptr.vmem [resolvable:$true] %s450
          %456 = dma.hbm_to_vmem [thread:$0]  %s5, 512, %s451, [#allocation6], 128, 128, 8
        $region28: #{tpu_custom_call.1} parent=11 // pred_fallthru
          _
        // Predicated region
        $region29: #{tpu_custom_call.1} parent=11 // pred_check
          %p457 = pneg %p195
        $region30: #{tpu_custom_call.1} parent=11 // pred_check_branch
          %459 = sbr.rel (%p457) target = $region32
        $region31: #{tpu_custom_call.1} parent=11 // pred_region
          %s461 = ssub.s32 512, 512
          %462 = vsyncadd [#allocation9], %s461
          %s463 = sshll.u32 [#allocation8], 4
          %s464 = int_to_ptr.vmem [resolvable:$true] %s463
          %469 = dma.hbm_to_vmem [thread:$0]  %s6, 512, %s464, [#allocation9], 128, 128, 8
        $region32: #{tpu_custom_call.1} parent=11 // pred_fallthru
          _
        // Predicated region
        $region33: #{tpu_custom_call.1} parent=11 // pred_check
          %p470 = pneg %p216
        $region34: #{tpu_custom_call.1} parent=11 // pred_check_branch
          %472 = sbr.rel (%p470) target = $region36
        $region35: #{tpu_custom_call.1} parent=11 // pred_region
          %s474 = ssub.s32 512, 512
          %475 = vsyncadd [#allocation9], %s474
          %s476 = sshll.u32 [#allocation10], 4
          %s477 = int_to_ptr.vmem [resolvable:$true] %s476
          %482 = dma.hbm_to_vmem [thread:$0]  %s7, 512, %s477, [#allocation9], 128, 128, 8
        $region36: #{tpu_custom_call.1} parent=11 // pred_fallthru
          _
        // Predicated region
        $region37: #{tpu_custom_call.1} parent=11 // pred_check
          %p483 = pneg %p237
        $region38: #{tpu_custom_call.1} parent=11 // pred_check_branch
          %485 = sbr.rel (%p483) target = $region40
        $region39: #{tpu_custom_call.1} parent=11 // pred_region
          %s487 = ssub.s32 512, 512
          %488 = vsyncadd [#allocation12], %s487
          %s489 = sshll.u32 [#allocation11], 4
          %s490 = int_to_ptr.vmem [resolvable:$true] %s489
          %495 = dma.hbm_to_vmem [thread:$0]  %s8, 512, %s490, [#allocation12], 128, 128, 8
        $region40: #{tpu_custom_call.1} parent=11 // pred_fallthru
          _
        // Predicated region
        $region41: #{tpu_custom_call.1} parent=11 // pred_check
          %p496 = pneg %p258
        $region42: #{tpu_custom_call.1} parent=11 // pred_check_branch
          %498 = sbr.rel (%p496) target = $region44
        $region43: #{tpu_custom_call.1} parent=11 // pred_region
          %s500 = ssub.s32 512, 512
          %501 = vsyncadd [#allocation12], %s500
          %s502 = sshll.u32 [#allocation13], 4
          %s503 = int_to_ptr.vmem [resolvable:$true] %s502
          %508 = dma.hbm_to_vmem [thread:$0]  %s9, 512, %s503, [#allocation12], 128, 128, 8
        $region44: #{tpu_custom_call.1} parent=11 // pred_fallthru
          _
        // Predicated region
        $region45: #{tpu_custom_call.1} parent=11 // pred_check
          %p509 = pneg %p279
        $region46: #{tpu_custom_call.1} parent=11 // pred_check_branch
          %511 = sbr.rel (%p509) target = $region48
        $region47: #{tpu_custom_call.1} parent=11 // pred_region
          %s513 = ssub.s32 512, 512
          %514 = vsyncadd [#allocation15], %s513
          %s515 = sshll.u32 [#allocation14], 4
          %s516 = int_to_ptr.vmem [resolvable:$true] %s515
          %521 = dma.hbm_to_vmem [thread:$0]  %s10, 512, %s516, [#allocation15], 128, 128, 8
        $region48: #{tpu_custom_call.1} parent=11 // pred_fallthru
          _
        // Predicated region
        $region49: #{tpu_custom_call.1} parent=11 // pred_check
          %p522 = pneg %p300
        $region50: #{tpu_custom_call.1} parent=11 // pred_check_branch
          %524 = sbr.rel (%p522) target = $region52
        $region51: #{tpu_custom_call.1} parent=11 // pred_region
          _
        $region52: #{tpu_custom_call.1} parent=11 // pred_fallthru
          _
        // Predicated region
        $region53: #{tpu_custom_call.1} parent=11 // pred_check
          %p525 = pneg %p321
        $region54: #{tpu_custom_call.1} parent=11 // pred_check_branch
          %527 = sbr.rel (%p525) target = $region56
        $region55: #{tpu_custom_call.1} parent=11 // pred_region
          _
        $region56: #{tpu_custom_call.1} parent=11 // pred_fallthru
          _
        // Predicated region
        $region57: #{tpu_custom_call.1} parent=11 // pred_check
          %p528 = pneg %p342
        $region58: #{tpu_custom_call.1} parent=11 // pred_check_branch
          %530 = sbr.rel (%p528) target = $region60
        $region59: #{tpu_custom_call.1} parent=11 // pred_region
          _
        $region60: #{tpu_custom_call.1} parent=11 // pred_fallthru
          _
      $region12: #{tpu_custom_call.1} parent=5 // pred_fallthru
        _
      %p531 = scmp.lt.s32.totalorder %s38, 2
      // Predicated region
      $region61: #{tpu_custom_call.1} parent=5 // pred_check
        %p532 = pneg %p531
      $region62: #{tpu_custom_call.1} parent=5 // pred_check_branch
        %534 = sbr.rel (%p532) target = $region64
      $region63: #{tpu_custom_call.1} parent=5 // pred_region
        // Predicated region
        $region65: #{tpu_custom_call.1} parent=63 // pred_check
          %p535 = pneg %p58
        $region66: #{tpu_custom_call.1} parent=63 // pred_check_branch
          %537 = sbr.rel (%p535) target = $region68
        $region67: #{tpu_custom_call.1} parent=63 // pred_region
          %s538 = sand.u32 %s48, 1
          %s539 = scalar_lea.sflag [#allocation3], %s538
          %s540 = sand.u32 %s48, 1
          %s541 = smul.addr %s540, 8
          %s542 = scalar_lea.vmem [#allocation2], %s541
          %s544 = ssub.s32 128, 128
          %545 = vsyncadd %s539, %s544
          %s546 = smul.addr %s38, 128
          %s547 = scalar_lea.hbm %s0, %s546
          %s549 = sshll.u32 %s542, 4
          %s550 = int_to_ptr.vmem [resolvable:$true] %s549
          %552 = dma.hbm_to_vmem [thread:$0]  %s547, 128, %s550, %s539
        $region68: #{tpu_custom_call.1} parent=63 // pred_fallthru
          _
        // Predicated region
        $region69: #{tpu_custom_call.1} parent=63 // pred_check
          %p553 = pneg %p84
        $region70: #{tpu_custom_call.1} parent=63 // pred_check_branch
          %555 = sbr.rel (%p553) target = $region72
        $region71: #{tpu_custom_call.1} parent=63 // pred_region
          %s556 = sand.u32 %s38, 1
          %s557 = scalar_lea.sflag [#allocation6], %s556
          %s558 = sand.u32 %s74, 1
          %s559 = smul.addr %s558, 8
          %s560 = scalar_lea.vmem [#allocation5], %s559
          %s562 = ssub.s32 128, 128
          %563 = vsyncadd %s557, %s562
          %s564 = smul.addr %s38, 128
          %s565 = scalar_lea.hbm %s1, %s564
          %s567 = sshll.u32 %s560, 4
          %s568 = int_to_ptr.vmem [resolvable:$true] %s567
          %570 = dma.hbm_to_vmem [thread:$0]  %s565, 128, %s568, %s557
        $region72: #{tpu_custom_call.1} parent=63 // pred_fallthru
          _
      $region64: #{tpu_custom_call.1} parent=5 // pred_fallthru
        _
      %p571 = scmp.le.s32.totalorder 1, %s38
      %p572 = scmp.lt.s32.totalorder %s38, 3
      %p573 = pnand %p571, %p572
      %p574 = pneg %p573
      // Predicated region
      $region73: #{tpu_custom_call.1} parent=5 // pred_check
        _
      $region74: #{tpu_custom_call.1} parent=5 // pred_check_branch
        %576 = sbr.rel (%p573) target = $region76
      $region75: #{tpu_custom_call.1} parent=5 // pred_region
        %s577 = ssub.s32 %s38, 1
        %s578 = sand.u32 %s51, 1
        %s579 = scalar_lea.sflag [#allocation3], %s578
        %s580 = sand.u32 %s51, 1
        %s581 = smul.addr %s580, 8
        %s582 = scalar_lea.vmem [#allocation2], %s581
        // Predicated region
        $region77: #{tpu_custom_call.1} parent=75 // pred_check
          %p583 = pneg %p64
        $region78: #{tpu_custom_call.1} parent=75 // pred_check_branch
          %585 = sbr.rel (%p583) target = $region80
        $region79: #{tpu_custom_call.1} parent=75 // pred_region
          %586 = dma.done %s579, 128
        $region80: #{tpu_custom_call.1} parent=75 // pred_fallthru
          _
        %s587 = sand.u32 %s43, 1
        %s588 = scalar_lea.sflag [#allocation6], %s587
        %s589 = sand.u32 %s77, 1
        %s590 = smul.addr %s589, 8
        %s591 = scalar_lea.vmem [#allocation5], %s590
        // Predicated region
        $region81: #{tpu_custom_call.1} parent=75 // pred_check
          %p592 = pneg %p90
        $region82: #{tpu_custom_call.1} parent=75 // pred_check_branch
          %594 = sbr.rel (%p592) target = $region84
        $region83: #{tpu_custom_call.1} parent=75 // pred_region
          %595 = dma.done %s588, 128
        $region84: #{tpu_custom_call.1} parent=75 // pred_fallthru
          _
        // Predicated region
        $region85: #{tpu_custom_call.1} parent=75 // pred_check
          %p596 = pneg %p174
        $region86: #{tpu_custom_call.1} parent=75 // pred_check_branch
          %598 = sbr.rel (%p596) target = $region88
        $region87: #{tpu_custom_call.1} parent=75 // pred_region
          %599 = dma.done [#allocation6], 512
        $region88: #{tpu_custom_call.1} parent=75 // pred_fallthru
          _
        // Predicated region
        $region89: #{tpu_custom_call.1} parent=75 // pred_check
          %p600 = pneg %p195
        $region90: #{tpu_custom_call.1} parent=75 // pred_check_branch
          %602 = sbr.rel (%p600) target = $region92
        $region91: #{tpu_custom_call.1} parent=75 // pred_region
          %603 = dma.done [#allocation9], 512
        $region92: #{tpu_custom_call.1} parent=75 // pred_fallthru
          _
        // Predicated region
        $region93: #{tpu_custom_call.1} parent=75 // pred_check
          %p604 = pneg %p216
        $region94: #{tpu_custom_call.1} parent=75 // pred_check_branch
          %606 = sbr.rel (%p604) target = $region96
        $region95: #{tpu_custom_call.1} parent=75 // pred_region
          %607 = dma.done [#allocation9], 512
        $region96: #{tpu_custom_call.1} parent=75 // pred_fallthru
          _
        // Predicated region
        $region97: #{tpu_custom_call.1} parent=75 // pred_check
          %p608 = pneg %p237
        $region98: #{tpu_custom_call.1} parent=75 // pred_check_branch
          %610 = sbr.rel (%p608) target = $region100
        $region99: #{tpu_custom_call.1} parent=75 // pred_region
          %611 = dma.done [#allocation12], 512
        $region100: #{tpu_custom_call.1} parent=75 // pred_fallthru
          _
        // Predicated region
        $region101: #{tpu_custom_call.1} parent=75 // pred_check
          %p612 = pneg %p258
        $region102: #{tpu_custom_call.1} parent=75 // pred_check_branch
          %614 = sbr.rel (%p612) target = $region104
        $region103: #{tpu_custom_call.1} parent=75 // pred_region
          %615 = dma.done [#allocation12], 512
        $region104: #{tpu_custom_call.1} parent=75 // pred_fallthru
          _
        // Predicated region
        $region105: #{tpu_custom_call.1} parent=75 // pred_check
          %p616 = pneg %p279
        $region106: #{tpu_custom_call.1} parent=75 // pred_check_branch
          %618 = sbr.rel (%p616) target = $region108
        $region107: #{tpu_custom_call.1} parent=75 // pred_region
          %619 = dma.done [#allocation15], 512
        $region108: #{tpu_custom_call.1} parent=75 // pred_fallthru
          _
        %s620 = sand.u32 %s51, 1
        %s621 = scalar_lea.sflag [#allocation3], %s620
        %s622 = sand.u32 %s51, 1
        %s623 = smul.addr %s622, 8
        %s624 = scalar_lea.vmem [#allocation2], %s623
        %p625 = pneg %p64
        %p626 = pneg %p61
        %s627 = sand.u32 %s43, 1
        %s628 = scalar_lea.sflag [#allocation6], %s627
        %s629 = sand.u32 %s77, 1
        %s630 = smul.addr %s629, 8
        %s631 = scalar_lea.vmem [#allocation5], %s630
        %p632 = pneg %p90
        %p633 = pneg %p87
        %p634 = pneg %p111
        %p635 = pneg %p108
        %p636 = pneg %p132
        %p637 = pneg %p129
        %p638 = pneg %p153
        %p639 = pneg %p150
        %p640 = pneg %p174
        %p641 = pneg %p171
        %p642 = pneg %p195
        %p643 = pneg %p192
        %p644 = pneg %p216
        %p645 = pneg %p213
        %p646 = pneg %p237
        %p647 = pneg %p234
        %p648 = pneg %p258
        %p649 = pneg %p255
        %p650 = pneg %p279
        %p651 = pneg %p276
        %p652 = pneg %p300
        %p653 = pneg %p297
        %p654 = pneg %p321
        %p655 = pneg %p318
        %p656 = pneg %p342
        %p657 = pneg %p339
        %p658 = pneg %p368
        %p659 = pneg %p365
        %s660 = sand.u32 %s355, 1
        %s661 = scalar_lea.sflag [#allocation4], %s660
        %s662 = sand.u32 %s355, 1
        %s663 = smul.addr %s662, 8
        %s664 = scalar_lea.vmem [#allocation16], %s663
        %p665 = pneg %p394
        %p666 = pneg %p391
        %s667 = sand.u32 %s43, 1
        %s668 = scalar_lea.sflag [#allocation18], %s667
        %s669 = sand.u32 %s381, 1
        %s670 = smul.addr %s669, 32
        %s671 = scalar_lea.vmem [#allocation17], %s670
        %p672 = pneg %p420
        %p673 = pneg %p417
        %s674 = sand.u32 %s43, 1
        %s675 = scalar_lea.sflag [#allocation18], %s674
        %s676 = sand.u32 %s407, 1
        %s677 = smul.addr %s676, 32
        %s678 = scalar_lea.vmem [#allocation19], %s677
        %v679 = vld [vmem:[%s582] sm:$0xff]
        %v680 = vld [vmem:[%s591] sm:$0xff]
        %v681 = vld [vmem:[%s13] sm:$0xff]
        %v682 = vld [vmem:[%s13 + $0x8] sm:$0xff]
        %v683 = vld [vmem:[%s2] sm:$0xff]
        %v684 = vld [vmem:[%s2 + $0x8] sm:$0xff]
        %v685 = vld [vmem:[%s2 + $0x10] sm:$0xff]
        %v686 = vld [vmem:[%s2 + $0x18] sm:$0xff]
        %v687 = vld [vmem:[%s3] sm:$0xff]
        %v688 = vld [vmem:[%s3 + $0x8] sm:$0xff]
        %v689 = vld [vmem:[%s3 + $0x10] sm:$0xff]
        %v690 = vld [vmem:[%s3 + $0x18] sm:$0xff]
        %v691 = vld [vmem:[%s4] sm:$0xff]
        %v692 = vld [vmem:[%s4 + $0x8] sm:$0xff]
        %v693 = vld [vmem:[%s4 + $0x10] sm:$0xff]
        %v694 = vld [vmem:[%s4 + $0x18] sm:$0xff]
        %v695 = vld [vmem:[#allocation7] sm:$0xff]
        %v696 = vld [vmem:[#allocation7 + $0x8] sm:$0xff]
        %v697 = vld [vmem:[#allocation7 + $0x10] sm:$0xff]
        %v698 = vld [vmem:[#allocation7 + $0x18] sm:$0xff]
        %v699 = vlaneseq
        %v700 = vshrl.u32 %v699, 7
        %v701 = vsub.s32 0, %v700
        %v702 = vrot.slane %v681, %v701
        %vm703 = vcmask 261120
        %v705 = vsel %vm703, %v679, 0
        %707 = vmatprep.subr.mxu0 0.0
        %708 = vmatpush1.msra.mxu0 0.0
        %709 = vmatprep.subr.mxu0 0.0
        %710 = vmatpush1.msra.mxu0 0.0
        %711 = vmatprep.subr.mxu0 0.0
        %712 = vmatpush1.msra.mxu0 0.0
        %713 = vmatprep.subr.mxu0 0.0
        %714 = vmatpush1.msra.mxu0 0.0
        %715 = vmatprep.subr.mxu0 0.0
        %716 = vmatpush1.msra.mxu0 0.0
        %717 = vmatprep.subr.mxu0 0.0
        %718 = vmatpush1.msra.mxu0 0.0
        %719 = vmatprep.subr.mxu0 0.0
        %720 = vmatpush1.msra.mxu0 0.0
        %721 = vmatprep.subr.mxu0 0.0
        %722 = vmatpush1.msra.mxu0 0.0
        %723 = vmatprep.subr.mxu0 0.0
        %724 = vmatpush1.msra.mxu0 0.0
        %725 = vmatprep.subr.mxu0 0.0
        %726 = vmatpush1.msra.mxu0 0.0
        %727 = vmatprep.subr.mxu0 0.0
        %728 = vmatpush1.msra.mxu0 0.0
        %729 = vmatprep.subr.mxu0 0.0
        %730 = vmatpush1.msra.mxu0 0.0
        %731 = vmatprep.subr.mxu0 0.0
        %732 = vmatpush1.msra.mxu0 %v686
        %733 = vmatprep.subr.mxu0 0.0
        %734 = vmatpush1.msra.mxu0 %v685
        %735 = vmatprep.subr.mxu0 0.0
        %736 = vmatpush1.msra.mxu0 %v684
        %737 = vmatprep.subr.mxu0 0.0
        %738 = vmatpush1.msra.mxu0 %v683
        %739 = vmatprep.subr.mxu0 0.0
        %740 = vmatpush2.msra.mxu0 0.0
        %741 = vmatprep.subr.mxu0 0.0
        %742 = vmatpush2.msra.mxu0 0.0
        %743 = vmatprep.subr.mxu0 0.0
        %744 = vmatpush2.msra.mxu0 0.0
        %745 = vmatprep.subr.mxu0 0.0
        %746 = vmatpush2.msra.mxu0 0.0
        %747 = vmatprep.subr.mxu0 0.0
        %748 = vmatpush2.msra.mxu0 0.0
        %749 = vmatprep.subr.mxu0 0.0
        %750 = vmatpush2.msra.mxu0 0.0
        %751 = vmatprep.subr.mxu0 0.0
        %752 = vmatpush2.msra.mxu0 0.0
        %753 = vmatprep.subr.mxu0 0.0
        %754 = vmatpush2.msra.mxu0 0.0
        %755 = vmatprep.subr.mxu0 0.0
        %756 = vmatpush2.msra.mxu0 0.0
        %757 = vmatprep.subr.mxu0 0.0
        %758 = vmatpush2.msra.mxu0 0.0
        %759 = vmatprep.subr.mxu0 0.0
        %760 = vmatpush2.msra.mxu0 0.0
        %761 = vmatprep.subr.mxu0 0.0
        %762 = vmatpush2.msra.mxu0 0.0
        %763 = vmatprep.subr.mxu0 0.0
        %764 = vmatpush2.msra.mxu0 0.0
        %765 = vmatprep.subr.mxu0 0.0
        %766 = vmatpush2.msra.mxu0 0.0
        %767 = vmatprep.subr.mxu0 0.0
        %768 = vmatpush2.msra.mxu0 0.0
        %769 = vmatprep.subr.mxu0 0.0
        %770 = vmatpush2.msra.mxu0 0.0
        %771 = vmatprep.mubr.f32.mxu0 0.0
        %772 = vmatmul.mubr.f32.gmra.mxu0 %v705
        %v773 = vpop.f32.mrf.mxu0
        %v774 = vadd.f32 %v702, %v773
        %v775 = vpop.f32.mrf.mxu0
        %776 = vdwg.mxu0
        %v777 = vlaneseq
        %v778 = vshrl.u32 %v777, 7
        %v779 = vsub.s32 1, %v778
        %v780 = vrot.slane %v681, %v779
        %781 = vmatprep.subr.mxu0 0.0
        %782 = vmatpush1.msra.mxu0 0.0
        %783 = vmatprep.subr.mxu0 0.0
        %784 = vmatpush1.msra.mxu0 0.0
        %785 = vmatprep.subr.mxu0 0.0
        %786 = vmatpush1.msra.mxu0 0.0
        %787 = vmatprep.subr.mxu0 0.0
        %788 = vmatpush1.msra.mxu0 0.0
        %789 = vmatprep.subr.mxu0 0.0
        %790 = vmatpush1.msra.mxu0 0.0
        %791 = vmatprep.subr.mxu0 0.0
        %792 = vmatpush1.msra.mxu0 0.0
        %793 = vmatprep.subr.mxu0 0.0
        %794 = vmatpush1.msra.mxu0 0.0
        %795 = vmatprep.subr.mxu0 0.0
        %796 = vmatpush1.msra.mxu0 0.0
        %797 = vmatprep.subr.mxu0 0.0
        %798 = vmatpush1.msra.mxu0 0.0
        %799 = vmatprep.subr.mxu0 0.0
        %800 = vmatpush1.msra.mxu0 0.0
        %801 = vmatprep.subr.mxu0 0.0
        %802 = vmatpush1.msra.mxu0 0.0
        %803 = vmatprep.subr.mxu0 0.0
        %804 = vmatpush1.msra.mxu0 0.0
        %805 = vmatprep.subr.mxu0 0.0
        %806 = vmatpush1.msra.mxu0 %v690
        %807 = vmatprep.subr.mxu0 0.0
        %808 = vmatpush1.msra.mxu0 %v689
        %809 = vmatprep.subr.mxu0 0.0
        %810 = vmatpush1.msra.mxu0 %v688
        %811 = vmatprep.subr.mxu0 0.0
        %812 = vmatpush1.msra.mxu0 %v687
        %813 = vmatprep.subr.mxu0 0.0
        %814 = vmatpush2.msra.mxu0 0.0
        %815 = vmatprep.subr.mxu0 0.0
        %816 = vmatpush2.msra.mxu0 0.0
        %817 = vmatprep.subr.mxu0 0.0
        %818 = vmatpush2.msra.mxu0 0.0
        %819 = vmatprep.subr.mxu0 0.0
        %820 = vmatpush2.msra.mxu0 0.0
        %821 = vmatprep.subr.mxu0 0.0
        %822 = vmatpush2.msra.mxu0 0.0
        %823 = vmatprep.subr.mxu0 0.0
        %824 = vmatpush2.msra.mxu0 0.0
        %825 = vmatprep.subr.mxu0 0.0
        %826 = vmatpush2.msra.mxu0 0.0
        %827 = vmatprep.subr.mxu0 0.0
        %828 = vmatpush2.msra.mxu0 0.0
        %829 = vmatprep.subr.mxu0 0.0
        %830 = vmatpush2.msra.mxu0 0.0
        %831 = vmatprep.subr.mxu0 0.0
        %832 = vmatpush2.msra.mxu0 0.0
        %833 = vmatprep.subr.mxu0 0.0
        %834 = vmatpush2.msra.mxu0 0.0
        %835 = vmatprep.subr.mxu0 0.0
        %836 = vmatpush2.msra.mxu0 0.0
        %837 = vmatprep.subr.mxu0 0.0
        %838 = vmatpush2.msra.mxu0 0.0
        %839 = vmatprep.subr.mxu0 0.0
        %840 = vmatpush2.msra.mxu0 0.0
        %841 = vmatprep.subr.mxu0 0.0
        %842 = vmatpush2.msra.mxu0 0.0
        %843 = vmatprep.subr.mxu0 0.0
        %844 = vmatpush2.msra.mxu0 0.0
        %845 = vmatprep.mubr.f32.mxu0 0.0
        %846 = vmatmul.mubr.f32.gmra.mxu0 %v705
        %v847 = vpop.f32.mrf.mxu0
        %v848 = vadd.f32 %v780, %v847
        %v849 = vpop.f32.mrf.mxu0
        %850 = vdwg.mxu0
        %v851 = vlaneseq
        %v852 = vshrl.u32 %v851, 7
        %v853 = vsub.s32 2, %v852
        %v854 = vrot.slane %v681, %v853
        %855 = vmatprep.subr.mxu0 0.0
        %856 = vmatpush1.msra.mxu0 0.0
        %857 = vmatprep.subr.mxu0 0.0
        %858 = vmatpush1.msra.mxu0 0.0
        %859 = vmatprep.subr.mxu0 0.0
        %860 = vmatpush1.msra.mxu0 0.0
        %861 = vmatprep.subr.mxu0 0.0
        %862 = vmatpush1.msra.mxu0 0.0
        %863 = vmatprep.subr.mxu0 0.0
        %864 = vmatpush1.msra.mxu0 0.0
        %865 = vmatprep.subr.mxu0 0.0
        %866 = vmatpush1.msra.mxu0 0.0
        %867 = vmatprep.subr.mxu0 0.0
        %868 = vmatpush1.msra.mxu0 0.0
        %869 = vmatprep.subr.mxu0 0.0
        %870 = vmatpush1.msra.mxu0 0.0
        %871 = vmatprep.subr.mxu0 0.0
        %872 = vmatpush1.msra.mxu0 0.0
        %873 = vmatprep.subr.mxu0 0.0
        %874 = vmatpush1.msra.mxu0 0.0
        %875 = vmatprep.subr.mxu0 0.0
        %876 = vmatpush1.msra.mxu0 0.0
        %877 = vmatprep.subr.mxu0 0.0
        %878 = vmatpush1.msra.mxu0 0.0
        %879 = vmatprep.subr.mxu0 0.0
        %880 = vmatpush1.msra.mxu0 %v694
        %881 = vmatprep.subr.mxu0 0.0
        %882 = vmatpush1.msra.mxu0 %v693
        %883 = vmatprep.subr.mxu0 0.0
        %884 = vmatpush1.msra.mxu0 %v692
        %885 = vmatprep.subr.mxu0 0.0
        %886 = vmatpush1.msra.mxu0 %v691
        %887 = vmatprep.subr.mxu0 0.0
        %888 = vmatpush2.msra.mxu0 0.0
        %889 = vmatprep.subr.mxu0 0.0
        %890 = vmatpush2.msra.mxu0 0.0
        %891 = vmatprep.subr.mxu0 0.0
        %892 = vmatpush2.msra.mxu0 0.0
        %893 = vmatprep.subr.mxu0 0.0
        %894 = vmatpush2.msra.mxu0 0.0
        %895 = vmatprep.subr.mxu0 0.0
        %896 = vmatpush2.msra.mxu0 0.0
        %897 = vmatprep.subr.mxu0 0.0
        %898 = vmatpush2.msra.mxu0 0.0
        %899 = vmatprep.subr.mxu0 0.0
        %900 = vmatpush2.msra.mxu0 0.0
        %901 = vmatprep.subr.mxu0 0.0
        %902 = vmatpush2.msra.mxu0 0.0
        %903 = vmatprep.subr.mxu0 0.0
        %904 = vmatpush2.msra.mxu0 0.0
        %905 = vmatprep.subr.mxu0 0.0
        %906 = vmatpush2.msra.mxu0 0.0
        %907 = vmatprep.subr.mxu0 0.0
        %908 = vmatpush2.msra.mxu0 0.0
        %909 = vmatprep.subr.mxu0 0.0
        %910 = vmatpush2.msra.mxu0 0.0
        %911 = vmatprep.subr.mxu0 0.0
        %912 = vmatpush2.msra.mxu0 0.0
        %913 = vmatprep.subr.mxu0 0.0
        %914 = vmatpush2.msra.mxu0 0.0
        %915 = vmatprep.subr.mxu0 0.0
        %916 = vmatpush2.msra.mxu0 0.0
        %917 = vmatprep.subr.mxu0 0.0
        %918 = vmatpush2.msra.mxu0 0.0
        %919 = vmatprep.mubr.f32.mxu0 0.0
        %920 = vmatmul.mubr.f32.gmra.mxu0 %v705
        %v921 = vpop.f32.mrf.mxu0
        %v922 = vadd.f32 %v854, %v921
        %v923 = vpop.f32.mrf.mxu0
        %924 = vdwg.mxu0
        %926 = vrot.lane.b32.xlu0 %v774, 120
        %v927 = vpop.permute.xlu0 %926
        %929 = vrot.lane.b32.xlu0 %v774, 112
        %v930 = vpop.permute.xlu0 %929
        %932 = vrot.lane.b32.xlu0 %v774, 104
        %v933 = vpop.permute.xlu0 %932
        %v935 = vcombine.low %v774, %v930
        %v936 = vcombine.high %v774, %v930
        %v938 = vunpack.c.l.s4 1983009808
        %v939 = vunpack.c.0.s8 %v938
        %v940 = vlaneseq
        %v941 = vshrl.u32 %v940, 7
        %v942 = vsub.s32 %v939, %v941
        %v943 = vrot.slane %v935, %v942
        %v945 = vunpack.c.l.s4 1983009808
        %v946 = vunpack.c.0.s8 %v945
        %v947 = vlaneseq
        %v948 = vshrl.u32 %v947, 7
        %v949 = vsub.s32 %v946, %v948
        %v950 = vrot.slane %v936, %v949
        %v951 = vcombine.low %v927, %v933
        %v952 = vcombine.high %v927, %v933
        %v954 = vunpack.c.l.s4 1983009808
        %v955 = vunpack.c.0.s8 %v954
        %v956 = vlaneseq
        %v957 = vshrl.u32 %v956, 7
        %v958 = vsub.s32 %v955, %v957
        %v959 = vrot.slane %v951, %v958
        %v961 = vunpack.c.l.s4 1983009808
        %v962 = vunpack.c.0.s8 %v961
        %v963 = vlaneseq
        %v964 = vshrl.u32 %v963, 7
        %v965 = vsub.s32 %v962, %v964
        %v966 = vrot.slane %v952, %v965
        %v967 = vcombine.low %v943, %v959
        %v968 = vcombine.high %v943, %v959
        %v970 = vunpack.c.l.s4 1934713408
        %v971 = vunpack.c.0.s8 %v970
        %v972 = vlaneseq
        %v973 = vshrl.u32 %v972, 7
        %v974 = vsub.s32 %v971, %v973
        %v975 = vrot.slane %v967, %v974
        %v977 = vunpack.c.l.s4 1934713408
        %v978 = vunpack.c.0.s8 %v977
        %v979 = vlaneseq
        %v980 = vshrl.u32 %v979, 7
        %v981 = vsub.s32 %v978, %v980
        %v982 = vrot.slane %v968, %v981
        %v983 = vcombine.low %v950, %v966
        %v984 = vcombine.high %v950, %v966
        %v986 = vunpack.c.l.s4 1934713408
        %v987 = vunpack.c.0.s8 %v986
        %v988 = vlaneseq
        %v989 = vshrl.u32 %v988, 7
        %v990 = vsub.s32 %v987, %v989
        %v991 = vrot.slane %v983, %v990
        %v993 = vunpack.c.l.s4 1934713408
        %v994 = vunpack.c.0.s8 %v993
        %v995 = vlaneseq
        %v996 = vshrl.u32 %v995, 7
        %v997 = vsub.s32 %v994, %v996
        %v998 = vrot.slane %v984, %v997
        %v999 = vcombine.high %v975, 0.0
        %v1000 = vcombine.high %v982, 0.0
        %v1001 = vcombine.high %v991, 0.0
        %v1002 = vcombine.high %v998, 0.0
        %v1003 = vcombine.low %v975, %v982
        %v1005 = vunpack.c.l.s4 1983009808
        %v1006 = vunpack.c.0.s8 %v1005
        %v1007 = vlaneseq
        %v1008 = vshrl.u32 %v1007, 7
        %v1009 = vsub.s32 %v1006, %v1008
        %v1010 = vrot.slane %v1003, %v1009
        %v1011 = vcombine.low %v999, %v1000
        %v1013 = vunpack.c.l.s4 1983009808
        %v1014 = vunpack.c.0.s8 %v1013
        %v1015 = vlaneseq
        %v1016 = vshrl.u32 %v1015, 7
        %v1017 = vsub.s32 %v1014, %v1016
        %v1018 = vrot.slane %v1011, %v1017
        %v1019 = vcombine.low %v991, %v998
        %v1021 = vunpack.c.l.s4 1983009808
        %v1022 = vunpack.c.0.s8 %v1021
        %v1023 = vlaneseq
        %v1024 = vshrl.u32 %v1023, 7
        %v1025 = vsub.s32 %v1022, %v1024
        %v1026 = vrot.slane %v1019, %v1025
        %v1027 = vcombine.low %v1001, %v1002
        %v1029 = vunpack.c.l.s4 1983009808
        %v1030 = vunpack.c.0.s8 %v1029
        %v1031 = vlaneseq
        %v1032 = vshrl.u32 %v1031, 7
        %v1033 = vsub.s32 %v1030, %v1032
        %v1034 = vrot.slane %v1027, %v1033
        %v1035 = vcombine.low %v1010, %v1018
        %v1036 = vcombine.high %v1010, %v1018
        %v1038 = vunpack.c.l.s4 1934713408
        %v1039 = vunpack.c.0.s8 %v1038
        %v1040 = vlaneseq
        %v1041 = vshrl.u32 %v1040, 7
        %v1042 = vsub.s32 %v1039, %v1041
        %v1043 = vrot.slane %v1035, %v1042
        %v1045 = vunpack.c.l.s4 1934713408
        %v1046 = vunpack.c.0.s8 %v1045
        %v1047 = vlaneseq
        %v1048 = vshrl.u32 %v1047, 7
        %v1049 = vsub.s32 %v1046, %v1048
        %v1050 = vrot.slane %v1036, %v1049
        %v1051 = vcombine.low %v1026, %v1034
        %v1052 = vcombine.high %v1026, %v1034
        %v1054 = vunpack.c.l.s4 1934713408
        %v1055 = vunpack.c.0.s8 %v1054
        %v1056 = vlaneseq
        %v1057 = vshrl.u32 %v1056, 7
        %v1058 = vsub.s32 %v1055, %v1057
        %v1059 = vrot.slane %v1051, %v1058
        %v1061 = vunpack.c.l.s4 1934713408
        %v1062 = vunpack.c.0.s8 %v1061
        %v1063 = vlaneseq
        %v1064 = vshrl.u32 %v1063, 7
        %v1065 = vsub.s32 %v1062, %v1064
        %v1066 = vrot.slane %v1052, %v1065
        %v1067 = vcombine.low %v1043, %v1059
        %v1068 = vcombine.high %v1043, %v1059
        %v1069 = vcombine.low %v1050, %v1066
        %v1070 = vcombine.high %v1050, %v1066
        %1072 = vrot.lane.b32.xlu0 %v848, 120
        %v1073 = vpop.permute.xlu0 %1072
        %1075 = vrot.lane.b32.xlu0 %v848, 112
        %v1076 = vpop.permute.xlu0 %1075
        %1078 = vrot.lane.b32.xlu0 %v848, 104
        %v1079 = vpop.permute.xlu0 %1078
        %v1081 = vcombine.low %v848, %v1076
        %v1082 = vcombine.high %v848, %v1076
        %v1084 = vunpack.c.l.s4 1983009808
        %v1085 = vunpack.c.0.s8 %v1084
        %v1086 = vlaneseq
        %v1087 = vshrl.u32 %v1086, 7
        %v1088 = vsub.s32 %v1085, %v1087
        %v1089 = vrot.slane %v1081, %v1088
        %v1091 = vunpack.c.l.s4 1983009808
        %v1092 = vunpack.c.0.s8 %v1091
        %v1093 = vlaneseq
        %v1094 = vshrl.u32 %v1093, 7
        %v1095 = vsub.s32 %v1092, %v1094
        %v1096 = vrot.slane %v1082, %v1095
        %v1097 = vcombine.low %v1073, %v1079
        %v1098 = vcombine.high %v1073, %v1079
        %v1100 = vunpack.c.l.s4 1983009808
        %v1101 = vunpack.c.0.s8 %v1100
        %v1102 = vlaneseq
        %v1103 = vshrl.u32 %v1102, 7
        %v1104 = vsub.s32 %v1101, %v1103
        %v1105 = vrot.slane %v1097, %v1104
        %v1107 = vunpack.c.l.s4 1983009808
        %v1108 = vunpack.c.0.s8 %v1107
        %v1109 = vlaneseq
        %v1110 = vshrl.u32 %v1109, 7
        %v1111 = vsub.s32 %v1108, %v1110
        %v1112 = vrot.slane %v1098, %v1111
        %v1113 = vcombine.low %v1089, %v1105
        %v1114 = vcombine.high %v1089, %v1105
        %v1116 = vunpack.c.l.s4 1934713408
        %v1117 = vunpack.c.0.s8 %v1116
        %v1118 = vlaneseq
        %v1119 = vshrl.u32 %v1118, 7
        %v1120 = vsub.s32 %v1117, %v1119
        %v1121 = vrot.slane %v1113, %v1120
        %v1123 = vunpack.c.l.s4 1934713408
        %v1124 = vunpack.c.0.s8 %v1123
        %v1125 = vlaneseq
        %v1126 = vshrl.u32 %v1125, 7
        %v1127 = vsub.s32 %v1124, %v1126
        %v1128 = vrot.slane %v1114, %v1127
        %v1129 = vcombine.low %v1096, %v1112
        %v1130 = vcombine.high %v1096, %v1112
        %v1132 = vunpack.c.l.s4 1934713408
        %v1133 = vunpack.c.0.s8 %v1132
        %v1134 = vlaneseq
        %v1135 = vshrl.u32 %v1134, 7
        %v1136 = vsub.s32 %v1133, %v1135
        %v1137 = vrot.slane %v1129, %v1136
        %v1139 = vunpack.c.l.s4 1934713408
        %v1140 = vunpack.c.0.s8 %v1139
        %v1141 = vlaneseq
        %v1142 = vshrl.u32 %v1141, 7
        %v1143 = vsub.s32 %v1140, %v1142
        %v1144 = vrot.slane %v1130, %v1143
        %v1145 = vcombine.high %v1121, 0.0
        %v1146 = vcombine.high %v1128, 0.0
        %v1147 = vcombine.high %v1137, 0.0
        %v1148 = vcombine.high %v1144, 0.0
        %v1149 = vcombine.low %v1121, %v1128
        %v1151 = vunpack.c.l.s4 1983009808
        %v1152 = vunpack.c.0.s8 %v1151
        %v1153 = vlaneseq
        %v1154 = vshrl.u32 %v1153, 7
        %v1155 = vsub.s32 %v1152, %v1154
        %v1156 = vrot.slane %v1149, %v1155
        %v1157 = vcombine.low %v1145, %v1146
        %v1159 = vunpack.c.l.s4 1983009808
        %v1160 = vunpack.c.0.s8 %v1159
        %v1161 = vlaneseq
        %v1162 = vshrl.u32 %v1161, 7
        %v1163 = vsub.s32 %v1160, %v1162
        %v1164 = vrot.slane %v1157, %v1163
        %v1165 = vcombine.low %v1137, %v1144
        %v1167 = vunpack.c.l.s4 1983009808
        %v1168 = vunpack.c.0.s8 %v1167
        %v1169 = vlaneseq
        %v1170 = vshrl.u32 %v1169, 7
        %v1171 = vsub.s32 %v1168, %v1170
        %v1172 = vrot.slane %v1165, %v1171
        %v1173 = vcombine.low %v1147, %v1148
        %v1175 = vunpack.c.l.s4 1983009808
        %v1176 = vunpack.c.0.s8 %v1175
        %v1177 = vlaneseq
        %v1178 = vshrl.u32 %v1177, 7
        %v1179 = vsub.s32 %v1176, %v1178
        %v1180 = vrot.slane %v1173, %v1179
        %v1181 = vcombine.low %v1156, %v1164
        %v1182 = vcombine.high %v1156, %v1164
        %v1184 = vunpack.c.l.s4 1934713408
        %v1185 = vunpack.c.0.s8 %v1184
        %v1186 = vlaneseq
        %v1187 = vshrl.u32 %v1186, 7
        %v1188 = vsub.s32 %v1185, %v1187
        %v1189 = vrot.slane %v1181, %v1188
        %v1191 = vunpack.c.l.s4 1934713408
        %v1192 = vunpack.c.0.s8 %v1191
        %v1193 = vlaneseq
        %v1194 = vshrl.u32 %v1193, 7
        %v1195 = vsub.s32 %v1192, %v1194
        %v1196 = vrot.slane %v1182, %v1195
        %v1197 = vcombine.low %v1172, %v1180
        %v1198 = vcombine.high %v1172, %v1180
        %v1200 = vunpack.c.l.s4 1934713408
        %v1201 = vunpack.c.0.s8 %v1200
        %v1202 = vlaneseq
        %v1203 = vshrl.u32 %v1202, 7
        %v1204 = vsub.s32 %v1201, %v1203
        %v1205 = vrot.slane %v1197, %v1204
        %v1207 = vunpack.c.l.s4 1934713408
        %v1208 = vunpack.c.0.s8 %v1207
        %v1209 = vlaneseq
        %v1210 = vshrl.u32 %v1209, 7
        %v1211 = vsub.s32 %v1208, %v1210
        %v1212 = vrot.slane %v1198, %v1211
        %v1213 = vcombine.low %v1189, %v1205
        %v1214 = vcombine.high %v1189, %v1205
        %v1215 = vcombine.low %v1196, %v1212
        %v1216 = vcombine.high %v1196, %v1212
        %1218 = vrot.lane.b32.xlu0 %v922, 120
        %v1219 = vpop.permute.xlu0 %1218
        %1221 = vrot.lane.b32.xlu0 %v922, 112
        %v1222 = vpop.permute.xlu0 %1221
        %1224 = vrot.lane.b32.xlu0 %v922, 104
        %v1225 = vpop.permute.xlu0 %1224
        %v1227 = vcombine.low %v922, %v1222
        %v1228 = vcombine.high %v922, %v1222
        %v1230 = vunpack.c.l.s4 1983009808
        %v1231 = vunpack.c.0.s8 %v1230
        %v1232 = vlaneseq
        %v1233 = vshrl.u32 %v1232, 7
        %v1234 = vsub.s32 %v1231, %v1233
        %v1235 = vrot.slane %v1227, %v1234
        %v1237 = vunpack.c.l.s4 1983009808
        %v1238 = vunpack.c.0.s8 %v1237
        %v1239 = vlaneseq
        %v1240 = vshrl.u32 %v1239, 7
        %v1241 = vsub.s32 %v1238, %v1240
        %v1242 = vrot.slane %v1228, %v1241
        %v1243 = vcombine.low %v1219, %v1225
        %v1244 = vcombine.high %v1219, %v1225
        %v1246 = vunpack.c.l.s4 1983009808
        %v1247 = vunpack.c.0.s8 %v1246
        %v1248 = vlaneseq
        %v1249 = vshrl.u32 %v1248, 7
        %v1250 = vsub.s32 %v1247, %v1249
        %v1251 = vrot.slane %v1243, %v1250
        %v1253 = vunpack.c.l.s4 1983009808
        %v1254 = vunpack.c.0.s8 %v1253
        %v1255 = vlaneseq
        %v1256 = vshrl.u32 %v1255, 7
        %v1257 = vsub.s32 %v1254, %v1256
        %v1258 = vrot.slane %v1244, %v1257
        %v1259 = vcombine.low %v1235, %v1251
        %v1260 = vcombine.high %v1235, %v1251
        %v1262 = vunpack.c.l.s4 1934713408
        %v1263 = vunpack.c.0.s8 %v1262
        %v1264 = vlaneseq
        %v1265 = vshrl.u32 %v1264, 7
        %v1266 = vsub.s32 %v1263, %v1265
        %v1267 = vrot.slane %v1259, %v1266
        %v1269 = vunpack.c.l.s4 1934713408
        %v1270 = vunpack.c.0.s8 %v1269
        %v1271 = vlaneseq
        %v1272 = vshrl.u32 %v1271, 7
        %v1273 = vsub.s32 %v1270, %v1272
        %v1274 = vrot.slane %v1260, %v1273
        %v1275 = vcombine.low %v1242, %v1258
        %v1276 = vcombine.high %v1242, %v1258
        %v1278 = vunpack.c.l.s4 1934713408
        %v1279 = vunpack.c.0.s8 %v1278
        %v1280 = vlaneseq
        %v1281 = vshrl.u32 %v1280, 7
        %v1282 = vsub.s32 %v1279, %v1281
        %v1283 = vrot.slane %v1275, %v1282
        %v1285 = vunpack.c.l.s4 1934713408
        %v1286 = vunpack.c.0.s8 %v1285
        %v1287 = vlaneseq
        %v1288 = vshrl.u32 %v1287, 7
        %v1289 = vsub.s32 %v1286, %v1288
        %v1290 = vrot.slane %v1276, %v1289
        %v1291 = vcombine.high %v1267, 0.0
        %v1292 = vcombine.high %v1274, 0.0
        %v1293 = vcombine.high %v1283, 0.0
        %v1294 = vcombine.high %v1290, 0.0
        %v1295 = vcombine.low %v1267, %v1274
        %v1297 = vunpack.c.l.s4 1983009808
        %v1298 = vunpack.c.0.s8 %v1297
        %v1299 = vlaneseq
        %v1300 = vshrl.u32 %v1299, 7
        %v1301 = vsub.s32 %v1298, %v1300
        %v1302 = vrot.slane %v1295, %v1301
        %v1303 = vcombine.low %v1291, %v1292
        %v1305 = vunpack.c.l.s4 1983009808
        %v1306 = vunpack.c.0.s8 %v1305
        %v1307 = vlaneseq
        %v1308 = vshrl.u32 %v1307, 7
        %v1309 = vsub.s32 %v1306, %v1308
        %v1310 = vrot.slane %v1303, %v1309
        %v1311 = vcombine.low %v1283, %v1290
        %v1313 = vunpack.c.l.s4 1983009808
        %v1314 = vunpack.c.0.s8 %v1313
        %v1315 = vlaneseq
        %v1316 = vshrl.u32 %v1315, 7
        %v1317 = vsub.s32 %v1314, %v1316
        %v1318 = vrot.slane %v1311, %v1317
        %v1319 = vcombine.low %v1293, %v1294
        %v1321 = vunpack.c.l.s4 1983009808
        %v1322 = vunpack.c.0.s8 %v1321
        %v1323 = vlaneseq
        %v1324 = vshrl.u32 %v1323, 7
        %v1325 = vsub.s32 %v1322, %v1324
        %v1326 = vrot.slane %v1319, %v1325
        %v1327 = vcombine.low %v1302, %v1310
        %v1328 = vcombine.high %v1302, %v1310
        %v1330 = vunpack.c.l.s4 1934713408
        %v1331 = vunpack.c.0.s8 %v1330
        %v1332 = vlaneseq
        %v1333 = vshrl.u32 %v1332, 7
        %v1334 = vsub.s32 %v1331, %v1333
        %v1335 = vrot.slane %v1327, %v1334
        %v1337 = vunpack.c.l.s4 1934713408
        %v1338 = vunpack.c.0.s8 %v1337
        %v1339 = vlaneseq
        %v1340 = vshrl.u32 %v1339, 7
        %v1341 = vsub.s32 %v1338, %v1340
        %v1342 = vrot.slane %v1328, %v1341
        %v1343 = vcombine.low %v1318, %v1326
        %v1344 = vcombine.high %v1318, %v1326
        %v1346 = vunpack.c.l.s4 1934713408
        %v1347 = vunpack.c.0.s8 %v1346
        %v1348 = vlaneseq
        %v1349 = vshrl.u32 %v1348, 7
        %v1350 = vsub.s32 %v1347, %v1349
        %v1351 = vrot.slane %v1343, %v1350
        %v1353 = vunpack.c.l.s4 1934713408
        %v1354 = vunpack.c.0.s8 %v1353
        %v1355 = vlaneseq
        %v1356 = vshrl.u32 %v1355, 7
        %v1357 = vsub.s32 %v1354, %v1356
        %v1358 = vrot.slane %v1344, %v1357
        %v1359 = vcombine.low %v1335, %v1351
        %v1360 = vcombine.high %v1335, %v1351
        %v1361 = vcombine.low %v1342, %v1358
        %v1362 = vcombine.high %v1342, %v1358
        %vm1363 = vcmask 64512
        %v1365 = vsel %vm1363, %v1359, 0
        %v1368 = vsel %vm1363, %v1213, 0
        %1370 = vmatprep.subr.mxu0 0.0
        %1371 = vmatpush1.xpose.msra.mxu0 0.0
        %1372 = vmatprep.subr.mxu0 0.0
        %1373 = vmatpush1.xpose.msra.mxu0 0.0
        %1374 = vmatprep.subr.mxu0 0.0
        %1375 = vmatpush1.xpose.msra.mxu0 0.0
        %1376 = vmatprep.subr.mxu0 0.0
        %1377 = vmatpush1.xpose.msra.mxu0 0.0
        %1378 = vmatprep.subr.mxu0 0.0
        %1379 = vmatpush1.xpose.msra.mxu0 0.0
        %1380 = vmatprep.subr.mxu0 0.0
        %1381 = vmatpush1.xpose.msra.mxu0 0.0
        %1382 = vmatprep.subr.mxu0 0.0
        %1383 = vmatpush1.xpose.msra.mxu0 0.0
        %1384 = vmatprep.subr.mxu0 0.0
        %1385 = vmatpush1.xpose.msra.mxu0 0.0
        %1386 = vmatprep.subr.mxu0 0.0
        %1387 = vmatpush1.xpose.msra.mxu0 0.0
        %1388 = vmatprep.subr.mxu0 0.0
        %1389 = vmatpush1.xpose.msra.mxu0 0.0
        %1390 = vmatprep.subr.mxu0 0.0
        %1391 = vmatpush1.xpose.msra.mxu0 0.0
        %1392 = vmatprep.subr.mxu0 0.0
        %1393 = vmatpush1.xpose.msra.mxu0 0.0
        %1394 = vmatprep.subr.mxu0 0.0
        %1395 = vmatpush1.xpose.msra.mxu0 0.0
        %1396 = vmatprep.subr.mxu0 0.0
        %1397 = vmatpush1.xpose.msra.mxu0 0.0
        %1398 = vmatprep.subr.mxu0 0.0
        %1399 = vmatpush1.xpose.msra.mxu0 0.0
        %1400 = vmatprep.subr.mxu0 0.0
        %1401 = vmatpush1.xpose.msra.mxu0 %v1368
        %1402 = vmatprep.subr.mxu0 0.0
        %1403 = vmatpush2.xpose.msra.mxu0 0.0
        %1404 = vmatprep.subr.mxu0 0.0
        %1405 = vmatpush2.xpose.msra.mxu0 0.0
        %1406 = vmatprep.subr.mxu0 0.0
        %1407 = vmatpush2.xpose.msra.mxu0 0.0
        %1408 = vmatprep.subr.mxu0 0.0
        %1409 = vmatpush2.xpose.msra.mxu0 0.0
        %1410 = vmatprep.subr.mxu0 0.0
        %1411 = vmatpush2.xpose.msra.mxu0 0.0
        %1412 = vmatprep.subr.mxu0 0.0
        %1413 = vmatpush2.xpose.msra.mxu0 0.0
        %1414 = vmatprep.subr.mxu0 0.0
        %1415 = vmatpush2.xpose.msra.mxu0 0.0
        %1416 = vmatprep.subr.mxu0 0.0
        %1417 = vmatpush2.xpose.msra.mxu0 0.0
        %1418 = vmatprep.subr.mxu0 0.0
        %1419 = vmatpush2.xpose.msra.mxu0 0.0
        %1420 = vmatprep.subr.mxu0 0.0
        %1421 = vmatpush2.xpose.msra.mxu0 0.0
        %1422 = vmatprep.subr.mxu0 0.0
        %1423 = vmatpush2.xpose.msra.mxu0 0.0
        %1424 = vmatprep.subr.mxu0 0.0
        %1425 = vmatpush2.xpose.msra.mxu0 0.0
        %1426 = vmatprep.subr.mxu0 0.0
        %1427 = vmatpush2.xpose.msra.mxu0 0.0
        %1428 = vmatprep.subr.mxu0 0.0
        %1429 = vmatpush2.xpose.msra.mxu0 0.0
        %1430 = vmatprep.subr.mxu0 0.0
        %1431 = vmatpush2.xpose.msra.mxu0 0.0
        %1432 = vmatprep.subr.mxu0 0.0
        %1433 = vmatpush2.xpose.msra.mxu0 0.0
        %1434 = vmatprep.mubr.f32.mxu0 0.0
        %1435 = vmatmul.mubr.f32.gmra.mxu0 %v1365
        %v1436 = vpop.f32.mrf.mxu0
        %v1437 = vadd.f32 0.0, %v1436
        %v1438 = vpop.f32.mrf.mxu0
        %1439 = vdwg.mxu0
        %v1441 = vsel %vm1363, %v1360, 0
        %v1444 = vsel %vm1363, %v1214, 0
        %1446 = vmatprep.subr.mxu0 0.0
        %1447 = vmatpush1.xpose.msra.mxu0 0.0
        %1448 = vmatprep.subr.mxu0 0.0
        %1449 = vmatpush1.xpose.msra.mxu0 0.0
        %1450 = vmatprep.subr.mxu0 0.0
        %1451 = vmatpush1.xpose.msra.mxu0 0.0
        %1452 = vmatprep.subr.mxu0 0.0
        %1453 = vmatpush1.xpose.msra.mxu0 0.0
        %1454 = vmatprep.subr.mxu0 0.0
        %1455 = vmatpush1.xpose.msra.mxu0 0.0
        %1456 = vmatprep.subr.mxu0 0.0
        %1457 = vmatpush1.xpose.msra.mxu0 0.0
        %1458 = vmatprep.subr.mxu0 0.0
        %1459 = vmatpush1.xpose.msra.mxu0 0.0
        %1460 = vmatprep.subr.mxu0 0.0
        %1461 = vmatpush1.xpose.msra.mxu0 0.0
        %1462 = vmatprep.subr.mxu0 0.0
        %1463 = vmatpush1.xpose.msra.mxu0 0.0
        %1464 = vmatprep.subr.mxu0 0.0
        %1465 = vmatpush1.xpose.msra.mxu0 0.0
        %1466 = vmatprep.subr.mxu0 0.0
        %1467 = vmatpush1.xpose.msra.mxu0 0.0
        %1468 = vmatprep.subr.mxu0 0.0
        %1469 = vmatpush1.xpose.msra.mxu0 0.0
        %1470 = vmatprep.subr.mxu0 0.0
        %1471 = vmatpush1.xpose.msra.mxu0 0.0
        %1472 = vmatprep.subr.mxu0 0.0
        %1473 = vmatpush1.xpose.msra.mxu0 0.0
        %1474 = vmatprep.subr.mxu0 0.0
        %1475 = vmatpush1.xpose.msra.mxu0 0.0
        %1476 = vmatprep.subr.mxu0 0.0
        %1477 = vmatpush1.xpose.msra.mxu0 %v1444
        %1478 = vmatprep.subr.mxu0 0.0
        %1479 = vmatpush2.xpose.msra.mxu0 0.0
        %1480 = vmatprep.subr.mxu0 0.0
        %1481 = vmatpush2.xpose.msra.mxu0 0.0
        %1482 = vmatprep.subr.mxu0 0.0
        %1483 = vmatpush2.xpose.msra.mxu0 0.0
        %1484 = vmatprep.subr.mxu0 0.0
        %1485 = vmatpush2.xpose.msra.mxu0 0.0
        %1486 = vmatprep.subr.mxu0 0.0
        %1487 = vmatpush2.xpose.msra.mxu0 0.0
        %1488 = vmatprep.subr.mxu0 0.0
        %1489 = vmatpush2.xpose.msra.mxu0 0.0
        %1490 = vmatprep.subr.mxu0 0.0
        %1491 = vmatpush2.xpose.msra.mxu0 0.0
        %1492 = vmatprep.subr.mxu0 0.0
        %1493 = vmatpush2.xpose.msra.mxu0 0.0
        %1494 = vmatprep.subr.mxu0 0.0
        %1495 = vmatpush2.xpose.msra.mxu0 0.0
        %1496 = vmatprep.subr.mxu0 0.0
        %1497 = vmatpush2.xpose.msra.mxu0 0.0
        %1498 = vmatprep.subr.mxu0 0.0
        %1499 = vmatpush2.xpose.msra.mxu0 0.0
        %1500 = vmatprep.subr.mxu0 0.0
        %1501 = vmatpush2.xpose.msra.mxu0 0.0
        %1502 = vmatprep.subr.mxu0 0.0
        %1503 = vmatpush2.xpose.msra.mxu0 0.0
        %1504 = vmatprep.subr.mxu0 0.0
        %1505 = vmatpush2.xpose.msra.mxu0 0.0
        %1506 = vmatprep.subr.mxu0 0.0
        %1507 = vmatpush2.xpose.msra.mxu0 0.0
        %1508 = vmatprep.subr.mxu0 0.0
        %1509 = vmatpush2.xpose.msra.mxu0 0.0
        %1510 = vmatprep.mubr.f32.mxu0 0.0
        %1511 = vmatmul.mubr.f32.gmra.mxu0 %v1441
        %v1512 = vpop.f32.mrf.mxu0
        %v1513 = vadd.f32 0.0, %v1512
        %v1514 = vpop.f32.mrf.mxu0
        %1515 = vdwg.mxu0
        %v1517 = vsel %vm1363, %v1361, 0
        %v1520 = vsel %vm1363, %v1215, 0
        %1522 = vmatprep.subr.mxu0 0.0
        %1523 = vmatpush1.xpose.msra.mxu0 0.0
        %1524 = vmatprep.subr.mxu0 0.0
        %1525 = vmatpush1.xpose.msra.mxu0 0.0
        %1526 = vmatprep.subr.mxu0 0.0
        %1527 = vmatpush1.xpose.msra.mxu0 0.0
        %1528 = vmatprep.subr.mxu0 0.0
        %1529 = vmatpush1.xpose.msra.mxu0 0.0
        %1530 = vmatprep.subr.mxu0 0.0
        %1531 = vmatpush1.xpose.msra.mxu0 0.0
        %1532 = vmatprep.subr.mxu0 0.0
        %1533 = vmatpush1.xpose.msra.mxu0 0.0
        %1534 = vmatprep.subr.mxu0 0.0
        %1535 = vmatpush1.xpose.msra.mxu0 0.0
        %1536 = vmatprep.subr.mxu0 0.0
        %1537 = vmatpush1.xpose.msra.mxu0 0.0
        %1538 = vmatprep.subr.mxu0 0.0
        %1539 = vmatpush1.xpose.msra.mxu0 0.0
        %1540 = vmatprep.subr.mxu0 0.0
        %1541 = vmatpush1.xpose.msra.mxu0 0.0
        %1542 = vmatprep.subr.mxu0 0.0
        %1543 = vmatpush1.xpose.msra.mxu0 0.0
        %1544 = vmatprep.subr.mxu0 0.0
        %1545 = vmatpush1.xpose.msra.mxu0 0.0
        %1546 = vmatprep.subr.mxu0 0.0
        %1547 = vmatpush1.xpose.msra.mxu0 0.0
        %1548 = vmatprep.subr.mxu0 0.0
        %1549 = vmatpush1.xpose.msra.mxu0 0.0
        %1550 = vmatprep.subr.mxu0 0.0
        %1551 = vmatpush1.xpose.msra.mxu0 0.0
        %1552 = vmatprep.subr.mxu0 0.0
        %1553 = vmatpush1.xpose.msra.mxu0 %v1520
        %1554 = vmatprep.subr.mxu0 0.0
        %1555 = vmatpush2.xpose.msra.mxu0 0.0
        %1556 = vmatprep.subr.mxu0 0.0
        %1557 = vmatpush2.xpose.msra.mxu0 0.0
        %1558 = vmatprep.subr.mxu0 0.0
        %1559 = vmatpush2.xpose.msra.mxu0 0.0
        %1560 = vmatprep.subr.mxu0 0.0
        %1561 = vmatpush2.xpose.msra.mxu0 0.0
        %1562 = vmatprep.subr.mxu0 0.0
        %1563 = vmatpush2.xpose.msra.mxu0 0.0
        %1564 = vmatprep.subr.mxu0 0.0
        %1565 = vmatpush2.xpose.msra.mxu0 0.0
        %1566 = vmatprep.subr.mxu0 0.0
        %1567 = vmatpush2.xpose.msra.mxu0 0.0
        %1568 = vmatprep.subr.mxu0 0.0
        %1569 = vmatpush2.xpose.msra.mxu0 0.0
        %1570 = vmatprep.subr.mxu0 0.0
        %1571 = vmatpush2.xpose.msra.mxu0 0.0
        %1572 = vmatprep.subr.mxu0 0.0
        %1573 = vmatpush2.xpose.msra.mxu0 0.0
        %1574 = vmatprep.subr.mxu0 0.0
        %1575 = vmatpush2.xpose.msra.mxu0 0.0
        %1576 = vmatprep.subr.mxu0 0.0
        %1577 = vmatpush2.xpose.msra.mxu0 0.0
        %1578 = vmatprep.subr.mxu0 0.0
        %1579 = vmatpush2.xpose.msra.mxu0 0.0
        %1580 = vmatprep.subr.mxu0 0.0
        %1581 = vmatpush2.xpose.msra.mxu0 0.0
        %1582 = vmatprep.subr.mxu0 0.0
        %1583 = vmatpush2.xpose.msra.mxu0 0.0
        %1584 = vmatprep.subr.mxu0 0.0
        %1585 = vmatpush2.xpose.msra.mxu0 0.0
        %1586 = vmatprep.mubr.f32.mxu0 0.0
        %1587 = vmatmul.mubr.f32.gmra.mxu0 %v1517
        %v1588 = vpop.f32.mrf.mxu0
        %v1589 = vadd.f32 0.0, %v1588
        %v1590 = vpop.f32.mrf.mxu0
        %1591 = vdwg.mxu0
        %v1593 = vsel %vm1363, %v1362, 0
        %v1596 = vsel %vm1363, %v1216, 0
        %1598 = vmatprep.subr.mxu0 0.0
        %1599 = vmatpush1.xpose.msra.mxu0 0.0
        %1600 = vmatprep.subr.mxu0 0.0
        %1601 = vmatpush1.xpose.msra.mxu0 0.0
        %1602 = vmatprep.subr.mxu0 0.0
        %1603 = vmatpush1.xpose.msra.mxu0 0.0
        %1604 = vmatprep.subr.mxu0 0.0
        %1605 = vmatpush1.xpose.msra.mxu0 0.0
        %1606 = vmatprep.subr.mxu0 0.0
        %1607 = vmatpush1.xpose.msra.mxu0 0.0
        %1608 = vmatprep.subr.mxu0 0.0
        %1609 = vmatpush1.xpose.msra.mxu0 0.0
        %1610 = vmatprep.subr.mxu0 0.0
        %1611 = vmatpush1.xpose.msra.mxu0 0.0
        %1612 = vmatprep.subr.mxu0 0.0
        %1613 = vmatpush1.xpose.msra.mxu0 0.0
        %1614 = vmatprep.subr.mxu0 0.0
        %1615 = vmatpush1.xpose.msra.mxu0 0.0
        %1616 = vmatprep.subr.mxu0 0.0
        %1617 = vmatpush1.xpose.msra.mxu0 0.0
        %1618 = vmatprep.subr.mxu0 0.0
        %1619 = vmatpush1.xpose.msra.mxu0 0.0
        %1620 = vmatprep.subr.mxu0 0.0
        %1621 = vmatpush1.xpose.msra.mxu0 0.0
        %1622 = vmatprep.subr.mxu0 0.0
        %1623 = vmatpush1.xpose.msra.mxu0 0.0
        %1624 = vmatprep.subr.mxu0 0.0
        %1625 = vmatpush1.xpose.msra.mxu0 0.0
        %1626 = vmatprep.subr.mxu0 0.0
        %1627 = vmatpush1.xpose.msra.mxu0 0.0
        %1628 = vmatprep.subr.mxu0 0.0
        %1629 = vmatpush1.xpose.msra.mxu0 %v1596
        %1630 = vmatprep.subr.mxu0 0.0
        %1631 = vmatpush2.xpose.msra.mxu0 0.0
        %1632 = vmatprep.subr.mxu0 0.0
        %1633 = vmatpush2.xpose.msra.mxu0 0.0
        %1634 = vmatprep.subr.mxu0 0.0
        %1635 = vmatpush2.xpose.msra.mxu0 0.0
        %1636 = vmatprep.subr.mxu0 0.0
        %1637 = vmatpush2.xpose.msra.mxu0 0.0
        %1638 = vmatprep.subr.mxu0 0.0
        %1639 = vmatpush2.xpose.msra.mxu0 0.0
        %1640 = vmatprep.subr.mxu0 0.0
        %1641 = vmatpush2.xpose.msra.mxu0 0.0
        %1642 = vmatprep.subr.mxu0 0.0
        %1643 = vmatpush2.xpose.msra.mxu0 0.0
        %1644 = vmatprep.subr.mxu0 0.0
        %1645 = vmatpush2.xpose.msra.mxu0 0.0
        %1646 = vmatprep.subr.mxu0 0.0
        %1647 = vmatpush2.xpose.msra.mxu0 0.0
        %1648 = vmatprep.subr.mxu0 0.0
        %1649 = vmatpush2.xpose.msra.mxu0 0.0
        %1650 = vmatprep.subr.mxu0 0.0
        %1651 = vmatpush2.xpose.msra.mxu0 0.0
        %1652 = vmatprep.subr.mxu0 0.0
        %1653 = vmatpush2.xpose.msra.mxu0 0.0
        %1654 = vmatprep.subr.mxu0 0.0
        %1655 = vmatpush2.xpose.msra.mxu0 0.0
        %1656 = vmatprep.subr.mxu0 0.0
        %1657 = vmatpush2.xpose.msra.mxu0 0.0
        %1658 = vmatprep.subr.mxu0 0.0
        %1659 = vmatpush2.xpose.msra.mxu0 0.0
        %1660 = vmatprep.subr.mxu0 0.0
        %1661 = vmatpush2.xpose.msra.mxu0 0.0
        %1662 = vmatprep.mubr.f32.mxu0 0.0
        %1663 = vmatmul.mubr.f32.gmra.mxu0 %v1593
        %v1664 = vpop.f32.mrf.mxu0
        %v1665 = vadd.f32 0.0, %v1664
        %v1666 = vpop.f32.mrf.mxu0
        %1667 = vdwg.mxu0
        %v1668 = vmul.f32 %v1437, 0.35355338
        %v1669 = vmul.f32 %v1513, 0.35355338
        %v1670 = vmul.f32 %v1589, 0.35355338
        %v1671 = vmul.f32 %v1665, 0.35355338
        %v1672 = vsel %vm1363, %v1668, -inf
        %1673 = vmax.xlane.f32.xlu0 %v1672
        %v1674 = vpop.xlane.xlu0 %1673
        %v1675 = vsel %vm1363, %v1669, -inf
        %1676 = vmax.xlane.f32.xlu0 %v1675
        %v1677 = vpop.xlane.xlu0 %1676
        %v1678 = vsel %vm1363, %v1670, -inf
        %1679 = vmax.xlane.f32.xlu0 %v1678
        %v1680 = vpop.xlane.xlu0 %1679
        %v1681 = vsel %vm1363, %v1671, -inf
        %1682 = vmax.xlane.f32.xlu0 %v1681
        %v1683 = vpop.xlane.xlu0 %1682
        %v1684 = vsub.f32 %v1668, %v1674
        %v1685 = vsub.f32 %v1669, %v1677
        %v1686 = vsub.f32 %v1670, %v1680
        %v1687 = vsub.f32 %v1671, %v1683
        %v1688 = vmul.f32 %v1684, 1.442695
        %v1689 = vpow.pop %v1688
        %v1690 = vmul.f32 %v1685, 1.442695
        %v1691 = vpow.pop %v1690
        %v1692 = vmul.f32 %v1686, 1.442695
        %v1693 = vpow.pop %v1692
        %v1694 = vmul.f32 %v1687, 1.442695
        %v1695 = vpow.pop %v1694
        %v1696 = vsel %vm1363, %v1689, 0.0
        %1697 = vadd.xlane.f32.xlu0 %v1696
        %v1698 = vpop.xlane.xlu0 %1697
        %v1699 = vsel %vm1363, %v1691, 0.0
        %1700 = vadd.xlane.f32.xlu0 %v1699
        %v1701 = vpop.xlane.xlu0 %1700
        %v1702 = vsel %vm1363, %v1693, 0.0
        %1703 = vadd.xlane.f32.xlu0 %v1702
        %v1704 = vpop.xlane.xlu0 %1703
        %v1705 = vsel %vm1363, %v1695, 0.0
        %1706 = vadd.xlane.f32.xlu0 %v1705
        %v1707 = vpop.xlane.xlu0 %1706
        %v1708 = vrcp.pop %v1698
        %v1709 = vrcp.pop %v1701
        %v1710 = vrcp.pop %v1704
        %v1711 = vrcp.pop %v1707
        %v1712 = vmul.f32 %v1689, %v1708
        %v1713 = vmul.f32 %v1691, %v1709
        %v1714 = vmul.f32 %v1693, %v1710
        %v1715 = vmul.f32 %v1695, %v1711
        %1716 = vst.msk [vmem:[%s671] sm:$0xff] %vm1363, %v1712
        %1717 = vst.msk [vmem:[%s671 + $0x8] sm:$0xff] %vm1363, %v1713
        %1718 = vst.msk [vmem:[%s671 + $0x10] sm:$0xff] %vm1363, %v1714
        %1719 = vst.msk [vmem:[%s671 + $0x18] sm:$0xff] %vm1363, %v1715
        %v1721 = vsel %vm1363, %v1712, 0
        %1723 = vmatprep.subr.mxu0 0.0
        %1724 = vmatpush1.msra.mxu0 0.0
        %1725 = vmatprep.subr.mxu0 0.0
        %1726 = vmatpush1.msra.mxu0 0.0
        %1727 = vmatprep.subr.mxu0 0.0
        %1728 = vmatpush1.msra.mxu0 0.0
        %1729 = vmatprep.subr.mxu0 0.0
        %1730 = vmatpush1.msra.mxu0 0.0
        %1731 = vmatprep.subr.mxu0 0.0
        %1732 = vmatpush1.msra.mxu0 0.0
        %1733 = vmatprep.subr.mxu0 0.0
        %1734 = vmatpush1.msra.mxu0 0.0
        %1735 = vmatprep.subr.mxu0 0.0
        %1736 = vmatpush1.msra.mxu0 0.0
        %1737 = vmatprep.subr.mxu0 0.0
        %1738 = vmatpush1.msra.mxu0 0.0
        %1739 = vmatprep.subr.mxu0 0.0
        %1740 = vmatpush1.msra.mxu0 0.0
        %1741 = vmatprep.subr.mxu0 0.0
        %1742 = vmatpush1.msra.mxu0 0.0
        %1743 = vmatprep.subr.mxu0 0.0
        %1744 = vmatpush1.msra.mxu0 0.0
        %1745 = vmatprep.subr.mxu0 0.0
        %1746 = vmatpush1.msra.mxu0 0.0
        %1747 = vmatprep.subr.mxu0 0.0
        %1748 = vmatpush1.msra.mxu0 0.0
        %1749 = vmatprep.subr.mxu0 0.0
        %1750 = vmatpush1.msra.mxu0 0.0
        %1751 = vmatprep.subr.mxu0 0.0
        %1752 = vmatpush1.msra.mxu0 0.0
        %1753 = vmatprep.subr.mxu0 0.0
        %1754 = vmatpush1.msra.mxu0 %v1067
        %1755 = vmatprep.subr.mxu0 0.0
        %1756 = vmatpush2.msra.mxu0 0.0
        %1757 = vmatprep.subr.mxu0 0.0
        %1758 = vmatpush2.msra.mxu0 0.0
        %1759 = vmatprep.subr.mxu0 0.0
        %1760 = vmatpush2.msra.mxu0 0.0
        %1761 = vmatprep.subr.mxu0 0.0
        %1762 = vmatpush2.msra.mxu0 0.0
        %1763 = vmatprep.subr.mxu0 0.0
        %1764 = vmatpush2.msra.mxu0 0.0
        %1765 = vmatprep.subr.mxu0 0.0
        %1766 = vmatpush2.msra.mxu0 0.0
        %1767 = vmatprep.subr.mxu0 0.0
        %1768 = vmatpush2.msra.mxu0 0.0
        %1769 = vmatprep.subr.mxu0 0.0
        %1770 = vmatpush2.msra.mxu0 0.0
        %1771 = vmatprep.subr.mxu0 0.0
        %1772 = vmatpush2.msra.mxu0 0.0
        %1773 = vmatprep.subr.mxu0 0.0
        %1774 = vmatpush2.msra.mxu0 0.0
        %1775 = vmatprep.subr.mxu0 0.0
        %1776 = vmatpush2.msra.mxu0 0.0
        %1777 = vmatprep.subr.mxu0 0.0
        %1778 = vmatpush2.msra.mxu0 0.0
        %1779 = vmatprep.subr.mxu0 0.0
        %1780 = vmatpush2.msra.mxu0 0.0
        %1781 = vmatprep.subr.mxu0 0.0
        %1782 = vmatpush2.msra.mxu0 0.0
        %1783 = vmatprep.subr.mxu0 0.0
        %1784 = vmatpush2.msra.mxu0 0.0
        %1785 = vmatprep.subr.mxu0 0.0
        %1786 = vmatpush2.msra.mxu0 0.0
        %1787 = vmatprep.mubr.f32.mxu0 0.0
        %1788 = vmatmul.mubr.f32.gmra.mxu0 %v1721
        %v1789 = vpop.f32.mrf.mxu0
        %v1790 = vadd.f32 0.0, %v1789
        %v1791 = vpop.f32.mrf.mxu0
        %1792 = vdwg.mxu0
        %v1794 = vsel %vm1363, %v1713, 0
        %1796 = vmatprep.subr.mxu0 0.0
        %1797 = vmatpush1.msra.mxu0 0.0
        %1798 = vmatprep.subr.mxu0 0.0
        %1799 = vmatpush1.msra.mxu0 0.0
        %1800 = vmatprep.subr.mxu0 0.0
        %1801 = vmatpush1.msra.mxu0 0.0
        %1802 = vmatprep.subr.mxu0 0.0
        %1803 = vmatpush1.msra.mxu0 0.0
        %1804 = vmatprep.subr.mxu0 0.0
        %1805 = vmatpush1.msra.mxu0 0.0
        %1806 = vmatprep.subr.mxu0 0.0
        %1807 = vmatpush1.msra.mxu0 0.0
        %1808 = vmatprep.subr.mxu0 0.0
        %1809 = vmatpush1.msra.mxu0 0.0
        %1810 = vmatprep.subr.mxu0 0.0
        %1811 = vmatpush1.msra.mxu0 0.0
        %1812 = vmatprep.subr.mxu0 0.0
        %1813 = vmatpush1.msra.mxu0 0.0
        %1814 = vmatprep.subr.mxu0 0.0
        %1815 = vmatpush1.msra.mxu0 0.0
        %1816 = vmatprep.subr.mxu0 0.0
        %1817 = vmatpush1.msra.mxu0 0.0
        %1818 = vmatprep.subr.mxu0 0.0
        %1819 = vmatpush1.msra.mxu0 0.0
        %1820 = vmatprep.subr.mxu0 0.0
        %1821 = vmatpush1.msra.mxu0 0.0
        %1822 = vmatprep.subr.mxu0 0.0
        %1823 = vmatpush1.msra.mxu0 0.0
        %1824 = vmatprep.subr.mxu0 0.0
        %1825 = vmatpush1.msra.mxu0 0.0
        %1826 = vmatprep.subr.mxu0 0.0
        %1827 = vmatpush1.msra.mxu0 %v1068
        %1828 = vmatprep.subr.mxu0 0.0
        %1829 = vmatpush2.msra.mxu0 0.0
        %1830 = vmatprep.subr.mxu0 0.0
        %1831 = vmatpush2.msra.mxu0 0.0
        %1832 = vmatprep.subr.mxu0 0.0
        %1833 = vmatpush2.msra.mxu0 0.0
        %1834 = vmatprep.subr.mxu0 0.0
        %1835 = vmatpush2.msra.mxu0 0.0
        %1836 = vmatprep.subr.mxu0 0.0
        %1837 = vmatpush2.msra.mxu0 0.0
        %1838 = vmatprep.subr.mxu0 0.0
        %1839 = vmatpush2.msra.mxu0 0.0
        %1840 = vmatprep.subr.mxu0 0.0
        %1841 = vmatpush2.msra.mxu0 0.0
        %1842 = vmatprep.subr.mxu0 0.0
        %1843 = vmatpush2.msra.mxu0 0.0
        %1844 = vmatprep.subr.mxu0 0.0
        %1845 = vmatpush2.msra.mxu0 0.0
        %1846 = vmatprep.subr.mxu0 0.0
        %1847 = vmatpush2.msra.mxu0 0.0
        %1848 = vmatprep.subr.mxu0 0.0
        %1849 = vmatpush2.msra.mxu0 0.0
        %1850 = vmatprep.subr.mxu0 0.0
        %1851 = vmatpush2.msra.mxu0 0.0
        %1852 = vmatprep.subr.mxu0 0.0
        %1853 = vmatpush2.msra.mxu0 0.0
        %1854 = vmatprep.subr.mxu0 0.0
        %1855 = vmatpush2.msra.mxu0 0.0
        %1856 = vmatprep.subr.mxu0 0.0
        %1857 = vmatpush2.msra.mxu0 0.0
        %1858 = vmatprep.subr.mxu0 0.0
        %1859 = vmatpush2.msra.mxu0 0.0
        %1860 = vmatprep.mubr.f32.mxu0 0.0
        %1861 = vmatmul.mubr.f32.gmra.mxu0 %v1794
        %v1862 = vpop.f32.mrf.mxu0
        %v1863 = vadd.f32 0.0, %v1862
        %v1864 = vpop.f32.mrf.mxu0
        %1865 = vdwg.mxu0
        %v1867 = vsel %vm1363, %v1714, 0
        %1869 = vmatprep.subr.mxu0 0.0
        %1870 = vmatpush1.msra.mxu0 0.0
        %1871 = vmatprep.subr.mxu0 0.0
        %1872 = vmatpush1.msra.mxu0 0.0
        %1873 = vmatprep.subr.mxu0 0.0
        %1874 = vmatpush1.msra.mxu0 0.0
        %1875 = vmatprep.subr.mxu0 0.0
        %1876 = vmatpush1.msra.mxu0 0.0
        %1877 = vmatprep.subr.mxu0 0.0
        %1878 = vmatpush1.msra.mxu0 0.0
        %1879 = vmatprep.subr.mxu0 0.0
        %1880 = vmatpush1.msra.mxu0 0.0
        %1881 = vmatprep.subr.mxu0 0.0
        %1882 = vmatpush1.msra.mxu0 0.0
        %1883 = vmatprep.subr.mxu0 0.0
        %1884 = vmatpush1.msra.mxu0 0.0
        %1885 = vmatprep.subr.mxu0 0.0
        %1886 = vmatpush1.msra.mxu0 0.0
        %1887 = vmatprep.subr.mxu0 0.0
        %1888 = vmatpush1.msra.mxu0 0.0
        %1889 = vmatprep.subr.mxu0 0.0
        %1890 = vmatpush1.msra.mxu0 0.0
        %1891 = vmatprep.subr.mxu0 0.0
        %1892 = vmatpush1.msra.mxu0 0.0
        %1893 = vmatprep.subr.mxu0 0.0
        %1894 = vmatpush1.msra.mxu0 0.0
        %1895 = vmatprep.subr.mxu0 0.0
        %1896 = vmatpush1.msra.mxu0 0.0
        %1897 = vmatprep.subr.mxu0 0.0
        %1898 = vmatpush1.msra.mxu0 0.0
        %1899 = vmatprep.subr.mxu0 0.0
        %1900 = vmatpush1.msra.mxu0 %v1069
        %1901 = vmatprep.subr.mxu0 0.0
        %1902 = vmatpush2.msra.mxu0 0.0
        %1903 = vmatprep.subr.mxu0 0.0
        %1904 = vmatpush2.msra.mxu0 0.0
        %1905 = vmatprep.subr.mxu0 0.0
        %1906 = vmatpush2.msra.mxu0 0.0
        %1907 = vmatprep.subr.mxu0 0.0
        %1908 = vmatpush2.msra.mxu0 0.0
        %1909 = vmatprep.subr.mxu0 0.0
        %1910 = vmatpush2.msra.mxu0 0.0
        %1911 = vmatprep.subr.mxu0 0.0
        %1912 = vmatpush2.msra.mxu0 0.0
        %1913 = vmatprep.subr.mxu0 0.0
        %1914 = vmatpush2.msra.mxu0 0.0
        %1915 = vmatprep.subr.mxu0 0.0
        %1916 = vmatpush2.msra.mxu0 0.0
        %1917 = vmatprep.subr.mxu0 0.0
        %1918 = vmatpush2.msra.mxu0 0.0
        %1919 = vmatprep.subr.mxu0 0.0
        %1920 = vmatpush2.msra.mxu0 0.0
        %1921 = vmatprep.subr.mxu0 0.0
        %1922 = vmatpush2.msra.mxu0 0.0
        %1923 = vmatprep.subr.mxu0 0.0
        %1924 = vmatpush2.msra.mxu0 0.0
        %1925 = vmatprep.subr.mxu0 0.0
        %1926 = vmatpush2.msra.mxu0 0.0
        %1927 = vmatprep.subr.mxu0 0.0
        %1928 = vmatpush2.msra.mxu0 0.0
        %1929 = vmatprep.subr.mxu0 0.0
        %1930 = vmatpush2.msra.mxu0 0.0
        %1931 = vmatprep.subr.mxu0 0.0
        %1932 = vmatpush2.msra.mxu0 0.0
        %1933 = vmatprep.mubr.f32.mxu0 0.0
        %1934 = vmatmul.mubr.f32.gmra.mxu0 %v1867
        %v1935 = vpop.f32.mrf.mxu0
        %v1936 = vadd.f32 0.0, %v1935
        %v1937 = vpop.f32.mrf.mxu0
        %1938 = vdwg.mxu0
        %v1940 = vsel %vm1363, %v1715, 0
        %1942 = vmatprep.subr.mxu0 0.0
        %1943 = vmatpush1.msra.mxu0 0.0
        %1944 = vmatprep.subr.mxu0 0.0
        %1945 = vmatpush1.msra.mxu0 0.0
        %1946 = vmatprep.subr.mxu0 0.0
        %1947 = vmatpush1.msra.mxu0 0.0
        %1948 = vmatprep.subr.mxu0 0.0
        %1949 = vmatpush1.msra.mxu0 0.0
        %1950 = vmatprep.subr.mxu0 0.0
        %1951 = vmatpush1.msra.mxu0 0.0
        %1952 = vmatprep.subr.mxu0 0.0
        %1953 = vmatpush1.msra.mxu0 0.0
        %1954 = vmatprep.subr.mxu0 0.0
        %1955 = vmatpush1.msra.mxu0 0.0
        %1956 = vmatprep.subr.mxu0 0.0
        %1957 = vmatpush1.msra.mxu0 0.0
        %1958 = vmatprep.subr.mxu0 0.0
        %1959 = vmatpush1.msra.mxu0 0.0
        %1960 = vmatprep.subr.mxu0 0.0
        %1961 = vmatpush1.msra.mxu0 0.0
        %1962 = vmatprep.subr.mxu0 0.0
        %1963 = vmatpush1.msra.mxu0 0.0
        %1964 = vmatprep.subr.mxu0 0.0
        %1965 = vmatpush1.msra.mxu0 0.0
        %1966 = vmatprep.subr.mxu0 0.0
        %1967 = vmatpush1.msra.mxu0 0.0
        %1968 = vmatprep.subr.mxu0 0.0
        %1969 = vmatpush1.msra.mxu0 0.0
        %1970 = vmatprep.subr.mxu0 0.0
        %1971 = vmatpush1.msra.mxu0 0.0
        %1972 = vmatprep.subr.mxu0 0.0
        %1973 = vmatpush1.msra.mxu0 %v1070
        %1974 = vmatprep.subr.mxu0 0.0
        %1975 = vmatpush2.msra.mxu0 0.0
        %1976 = vmatprep.subr.mxu0 0.0
        %1977 = vmatpush2.msra.mxu0 0.0
        %1978 = vmatprep.subr.mxu0 0.0
        %1979 = vmatpush2.msra.mxu0 0.0
        %1980 = vmatprep.subr.mxu0 0.0
        %1981 = vmatpush2.msra.mxu0 0.0
        %1982 = vmatprep.subr.mxu0 0.0
        %1983 = vmatpush2.msra.mxu0 0.0
        %1984 = vmatprep.subr.mxu0 0.0
        %1985 = vmatpush2.msra.mxu0 0.0
        %1986 = vmatprep.subr.mxu0 0.0
        %1987 = vmatpush2.msra.mxu0 0.0
        %1988 = vmatprep.subr.mxu0 0.0
        %1989 = vmatpush2.msra.mxu0 0.0
        %1990 = vmatprep.subr.mxu0 0.0
        %1991 = vmatpush2.msra.mxu0 0.0
        %1992 = vmatprep.subr.mxu0 0.0
        %1993 = vmatpush2.msra.mxu0 0.0
        %1994 = vmatprep.subr.mxu0 0.0
        %1995 = vmatpush2.msra.mxu0 0.0
        %1996 = vmatprep.subr.mxu0 0.0
        %1997 = vmatpush2.msra.mxu0 0.0
        %1998 = vmatprep.subr.mxu0 0.0
        %1999 = vmatpush2.msra.mxu0 0.0
        %2000 = vmatprep.subr.mxu0 0.0
        %2001 = vmatpush2.msra.mxu0 0.0
        %2002 = vmatprep.subr.mxu0 0.0
        %2003 = vmatpush2.msra.mxu0 0.0
        %2004 = vmatprep.subr.mxu0 0.0
        %2005 = vmatpush2.msra.mxu0 0.0
        %2006 = vmatprep.mubr.f32.mxu0 0.0
        %2007 = vmatmul.mubr.f32.gmra.mxu0 %v1940
        %v2008 = vpop.f32.mrf.mxu0
        %v2009 = vadd.f32 0.0, %v2008
        %v2010 = vpop.f32.mrf.mxu0
        %2011 = vdwg.mxu0
        %v2012 = vcombine.low %v1790, %v1936
        %v2013 = vcombine.high %v1790, %v1936
        %v2015 = vunpack.c.l.s4 1983009808
        %v2016 = vunpack.c.0.s8 %v2015
        %v2017 = vlaneseq
        %v2018 = vshrl.u32 %v2017, 7
        %v2019 = vsub.s32 %v2016, %v2018
        %v2020 = vrot.slane %v2012, %v2019
        %v2022 = vunpack.c.l.s4 1983009808
        %v2023 = vunpack.c.0.s8 %v2022
        %v2024 = vlaneseq
        %v2025 = vshrl.u32 %v2024, 7
        %v2026 = vsub.s32 %v2023, %v2025
        %v2027 = vrot.slane %v2013, %v2026
        %v2028 = vcombine.low %v1863, %v2009
        %v2029 = vcombine.high %v1863, %v2009
        %v2031 = vunpack.c.l.s4 1983009808
        %v2032 = vunpack.c.0.s8 %v2031
        %v2033 = vlaneseq
        %v2034 = vshrl.u32 %v2033, 7
        %v2035 = vsub.s32 %v2032, %v2034
        %v2036 = vrot.slane %v2028, %v2035
        %v2038 = vunpack.c.l.s4 1983009808
        %v2039 = vunpack.c.0.s8 %v2038
        %v2040 = vlaneseq
        %v2041 = vshrl.u32 %v2040, 7
        %v2042 = vsub.s32 %v2039, %v2041
        %v2043 = vrot.slane %v2029, %v2042
        %v2044 = vcombine.low %v2020, %v2036
        %v2045 = vcombine.high %v2020, %v2036
        %v2047 = vunpack.c.l.s4 1934713408
        %v2048 = vunpack.c.0.s8 %v2047
        %v2049 = vlaneseq
        %v2050 = vshrl.u32 %v2049, 7
        %v2051 = vsub.s32 %v2048, %v2050
        %v2052 = vrot.slane %v2044, %v2051
        %v2054 = vunpack.c.l.s4 1934713408
        %v2055 = vunpack.c.0.s8 %v2054
        %v2056 = vlaneseq
        %v2057 = vshrl.u32 %v2056, 7
        %v2058 = vsub.s32 %v2055, %v2057
        %v2059 = vrot.slane %v2045, %v2058
        %v2060 = vcombine.low %v2027, %v2043
        %v2061 = vcombine.high %v2027, %v2043
        %v2063 = vunpack.c.l.s4 1934713408
        %v2064 = vunpack.c.0.s8 %v2063
        %v2065 = vlaneseq
        %v2066 = vshrl.u32 %v2065, 7
        %v2067 = vsub.s32 %v2064, %v2066
        %v2068 = vrot.slane %v2060, %v2067
        %v2070 = vunpack.c.l.s4 1934713408
        %v2071 = vunpack.c.0.s8 %v2070
        %v2072 = vlaneseq
        %v2073 = vshrl.u32 %v2072, 7
        %v2074 = vsub.s32 %v2071, %v2073
        %v2075 = vrot.slane %v2061, %v2074
        %v2076 = vcombine.high %v2052, 0.0
        %v2077 = vcombine.high %v2059, 0.0
        %v2078 = vcombine.high %v2068, 0.0
        %v2079 = vcombine.high %v2075, 0.0
        %v2080 = vcombine.low %v2052, %v2059
        %v2082 = vunpack.c.l.s4 1983009808
        %v2083 = vunpack.c.0.s8 %v2082
        %v2084 = vlaneseq
        %v2085 = vshrl.u32 %v2084, 7
        %v2086 = vsub.s32 %v2083, %v2085
        %v2087 = vrot.slane %v2080, %v2086
        %v2088 = vcombine.low %v2076, %v2077
        %v2090 = vunpack.c.l.s4 1983009808
        %v2091 = vunpack.c.0.s8 %v2090
        %v2092 = vlaneseq
        %v2093 = vshrl.u32 %v2092, 7
        %v2094 = vsub.s32 %v2091, %v2093
        %v2095 = vrot.slane %v2088, %v2094
        %v2096 = vcombine.low %v2068, %v2075
        %v2098 = vunpack.c.l.s4 1983009808
        %v2099 = vunpack.c.0.s8 %v2098
        %v2100 = vlaneseq
        %v2101 = vshrl.u32 %v2100, 7
        %v2102 = vsub.s32 %v2099, %v2101
        %v2103 = vrot.slane %v2096, %v2102
        %v2104 = vcombine.low %v2078, %v2079
        %v2106 = vunpack.c.l.s4 1983009808
        %v2107 = vunpack.c.0.s8 %v2106
        %v2108 = vlaneseq
        %v2109 = vshrl.u32 %v2108, 7
        %v2110 = vsub.s32 %v2107, %v2109
        %v2111 = vrot.slane %v2104, %v2110
        %v2112 = vcombine.low %v2087, %v2095
        %v2113 = vcombine.high %v2087, %v2095
        %v2115 = vunpack.c.l.s4 1934713408
        %v2116 = vunpack.c.0.s8 %v2115
        %v2117 = vlaneseq
        %v2118 = vshrl.u32 %v2117, 7
        %v2119 = vsub.s32 %v2116, %v2118
        %v2120 = vrot.slane %v2112, %v2119
        %v2122 = vunpack.c.l.s4 1934713408
        %v2123 = vunpack.c.0.s8 %v2122
        %v2124 = vlaneseq
        %v2125 = vshrl.u32 %v2124, 7
        %v2126 = vsub.s32 %v2123, %v2125
        %v2127 = vrot.slane %v2113, %v2126
        %v2128 = vcombine.low %v2103, %v2111
        %v2129 = vcombine.high %v2103, %v2111
        %v2131 = vunpack.c.l.s4 1934713408
        %v2132 = vunpack.c.0.s8 %v2131
        %v2133 = vlaneseq
        %v2134 = vshrl.u32 %v2133, 7
        %v2135 = vsub.s32 %v2132, %v2134
        %v2136 = vrot.slane %v2128, %v2135
        %v2138 = vunpack.c.l.s4 1934713408
        %v2139 = vunpack.c.0.s8 %v2138
        %v2140 = vlaneseq
        %v2141 = vshrl.u32 %v2140, 7
        %v2142 = vsub.s32 %v2139, %v2141
        %v2143 = vrot.slane %v2129, %v2142
        %v2144 = vcombine.low %v2120, %v2136
        %v2145 = vcombine.high %v2120, %v2136
        %v2146 = vcombine.low %v2127, %v2143
        %v2147 = vcombine.high %v2127, %v2143
        %2149 = vrot.lane.b32.xlu0 %v2145, 8
        %v2150 = vpop.permute.xlu0 %2149
        %2153 = vrot.lane.b32.xlu0 %v2146, 16
        %v2154 = vpop.permute.xlu0 %2153
        %2157 = vrot.lane.b32.xlu0 %v2147, 24
        %v2158 = vpop.permute.xlu0 %2157
        %v2160 = vsel %vm1363, %v2144, %v2150
        %vm2161 = vcmask 130048
        %v2162 = vsel %vm2161, %v2160, %v2154
        %vm2163 = vcmask 195584
        %v2164 = vsel %vm2163, %v2162, %v2158
        %v2165 = vlaneseq
        %v2166 = vshrl.u32 %v2165, 7
        %v2167 = vsub.s32 3, %v2166
        %v2168 = vrot.slane %v681, %v2167
        %v2170 = vsel %vm703, %v2164, 0
        %2172 = vmatprep.subr.mxu0 0.0
        %2173 = vmatpush1.msra.mxu0 0.0
        %2174 = vmatprep.subr.mxu0 0.0
        %2175 = vmatpush1.msra.mxu0 0.0
        %2176 = vmatprep.subr.mxu0 0.0
        %2177 = vmatpush1.msra.mxu0 0.0
        %2178 = vmatprep.subr.mxu0 0.0
        %2179 = vmatpush1.msra.mxu0 0.0
        %2180 = vmatprep.subr.mxu0 0.0
        %2181 = vmatpush1.msra.mxu0 0.0
        %2182 = vmatprep.subr.mxu0 0.0
        %2183 = vmatpush1.msra.mxu0 0.0
        %2184 = vmatprep.subr.mxu0 0.0
        %2185 = vmatpush1.msra.mxu0 0.0
        %2186 = vmatprep.subr.mxu0 0.0
        %2187 = vmatpush1.msra.mxu0 0.0
        %2188 = vmatprep.subr.mxu0 0.0
        %2189 = vmatpush1.msra.mxu0 0.0
        %2190 = vmatprep.subr.mxu0 0.0
        %2191 = vmatpush1.msra.mxu0 0.0
        %2192 = vmatprep.subr.mxu0 0.0
        %2193 = vmatpush1.msra.mxu0 0.0
        %2194 = vmatprep.subr.mxu0 0.0
        %2195 = vmatpush1.msra.mxu0 0.0
        %2196 = vmatprep.subr.mxu0 0.0
        %2197 = vmatpush1.msra.mxu0 %v698
        %2198 = vmatprep.subr.mxu0 0.0
        %2199 = vmatpush1.msra.mxu0 %v697
        %2200 = vmatprep.subr.mxu0 0.0
        %2201 = vmatpush1.msra.mxu0 %v696
        %2202 = vmatprep.subr.mxu0 0.0
        %2203 = vmatpush1.msra.mxu0 %v695
        %2204 = vmatprep.subr.mxu0 0.0
        %2205 = vmatpush2.msra.mxu0 0.0
        %2206 = vmatprep.subr.mxu0 0.0
        %2207 = vmatpush2.msra.mxu0 0.0
        %2208 = vmatprep.subr.mxu0 0.0
        %2209 = vmatpush2.msra.mxu0 0.0
        %2210 = vmatprep.subr.mxu0 0.0
        %2211 = vmatpush2.msra.mxu0 0.0
        %2212 = vmatprep.subr.mxu0 0.0
        %2213 = vmatpush2.msra.mxu0 0.0
        %2214 = vmatprep.subr.mxu0 0.0
        %2215 = vmatpush2.msra.mxu0 0.0
        %2216 = vmatprep.subr.mxu0 0.0
        %2217 = vmatpush2.msra.mxu0 0.0
        %2218 = vmatprep.subr.mxu0 0.0
        %2219 = vmatpush2.msra.mxu0 0.0
        %2220 = vmatprep.subr.mxu0 0.0
        %2221 = vmatpush2.msra.mxu0 0.0
        %2222 = vmatprep.subr.mxu0 0.0
        %2223 = vmatpush2.msra.mxu0 0.0
        %2224 = vmatprep.subr.mxu0 0.0
        %2225 = vmatpush2.msra.mxu0 0.0
        %2226 = vmatprep.subr.mxu0 0.0
        %2227 = vmatpush2.msra.mxu0 0.0
        %2228 = vmatprep.subr.mxu0 0.0
        %2229 = vmatpush2.msra.mxu0 0.0
        %2230 = vmatprep.subr.mxu0 0.0
        %2231 = vmatpush2.msra.mxu0 0.0
        %2232 = vmatprep.subr.mxu0 0.0
        %2233 = vmatpush2.msra.mxu0 0.0
        %2234 = vmatprep.subr.mxu0 0.0
        %2235 = vmatpush2.msra.mxu0 0.0
        %2236 = vmatprep.mubr.f32.mxu0 0.0
        %2237 = vmatmul.mubr.f32.gmra.mxu0 %v2170
        %v2238 = vpop.f32.mrf.mxu0
        %v2239 = vadd.f32 %v2168, %v2238
        %v2240 = vpop.f32.mrf.mxu0
        %2241 = vdwg.mxu0
        %v2242 = vadd.f32 %v2239, %v679
        %v2243 = vsel %vm703, %v2242, 0.0
        %2244 = vadd.xlane.f32.xlu0 %v2243
        %v2245 = vpop.xlane.xlu0 %2244
        %v2246 = vrcp.pop 32.0
        %v2247 = vmul.f32 %v2245, %v2246
        %v2248 = vsub.f32 %v2242, %v2247
        %v2249 = vmul.f32 %v2248, %v2248
        %v2250 = vsel %vm703, %v2249, 0.0
        %2251 = vadd.xlane.f32.xlu0 %v2250
        %v2252 = vpop.xlane.xlu0 %2251
        %v2253 = vmul.f32 %v2252, %v2246
        %v2254 = vadd.f32 %v2253, 1e-06
        %v2255 = vrsqrt.pop %v2254
        %v2256 = vmul.f32 %v2248, %v2255
        %v2257 = vlaneseq
        %v2258 = vshrl.u32 %v2257, 7
        %v2259 = vsub.s32 4, %v2258
        %v2260 = vrot.slane %v681, %v2259
        %v2261 = vmul.f32 %v2256, %v2260
        %v2262 = vlaneseq
        %v2263 = vshrl.u32 %v2262, 7
        %v2264 = vsub.s32 5, %v2263
        %v2265 = vrot.slane %v681, %v2264
        %v2266 = vadd.f32 %v2261, %v2265
        %v2267 = vld [vmem:[#allocation8] sm:$0xff]
        %v2268 = vld [vmem:[#allocation8 + $0x8] sm:$0xff]
        %v2269 = vld [vmem:[#allocation8 + $0x10] sm:$0xff]
        %v2270 = vld [vmem:[#allocation8 + $0x18] sm:$0xff]
        %v2271 = vld [vmem:[#allocation10] sm:$0xff]
        %v2272 = vld [vmem:[#allocation10 + $0x8] sm:$0xff]
        %v2273 = vld [vmem:[#allocation10 + $0x10] sm:$0xff]
        %v2274 = vld [vmem:[#allocation10 + $0x18] sm:$0xff]
        %v2275 = vld [vmem:[#allocation11] sm:$0xff]
        %v2276 = vld [vmem:[#allocation11 + $0x8] sm:$0xff]
        %v2277 = vld [vmem:[#allocation11 + $0x10] sm:$0xff]
        %v2278 = vld [vmem:[#allocation11 + $0x18] sm:$0xff]
        %v2279 = vld [vmem:[#allocation13] sm:$0xff]
        %v2280 = vld [vmem:[#allocation13 + $0x8] sm:$0xff]
        %v2281 = vld [vmem:[#allocation13 + $0x10] sm:$0xff]
        %v2282 = vld [vmem:[#allocation13 + $0x18] sm:$0xff]
        %v2283 = vlaneseq
        %v2284 = vshrl.u32 %v2283, 7
        %v2285 = vsub.s32 6, %v2284
        %v2286 = vrot.slane %v681, %v2285
        %v2288 = vsel %vm703, %v680, 0
        %2290 = vmatprep.subr.mxu0 0.0
        %2291 = vmatpush1.msra.mxu0 0.0
        %2292 = vmatprep.subr.mxu0 0.0
        %2293 = vmatpush1.msra.mxu0 0.0
        %2294 = vmatprep.subr.mxu0 0.0
        %2295 = vmatpush1.msra.mxu0 0.0
        %2296 = vmatprep.subr.mxu0 0.0
        %2297 = vmatpush1.msra.mxu0 0.0
        %2298 = vmatprep.subr.mxu0 0.0
        %2299 = vmatpush1.msra.mxu0 0.0
        %2300 = vmatprep.subr.mxu0 0.0
        %2301 = vmatpush1.msra.mxu0 0.0
        %2302 = vmatprep.subr.mxu0 0.0
        %2303 = vmatpush1.msra.mxu0 0.0
        %2304 = vmatprep.subr.mxu0 0.0
        %2305 = vmatpush1.msra.mxu0 0.0
        %2306 = vmatprep.subr.mxu0 0.0
        %2307 = vmatpush1.msra.mxu0 0.0
        %2308 = vmatprep.subr.mxu0 0.0
        %2309 = vmatpush1.msra.mxu0 0.0
        %2310 = vmatprep.subr.mxu0 0.0
        %2311 = vmatpush1.msra.mxu0 0.0
        %2312 = vmatprep.subr.mxu0 0.0
        %2313 = vmatpush1.msra.mxu0 0.0
        %2314 = vmatprep.subr.mxu0 0.0
        %2315 = vmatpush1.msra.mxu0 %v2270
        %2316 = vmatprep.subr.mxu0 0.0
        %2317 = vmatpush1.msra.mxu0 %v2269
        %2318 = vmatprep.subr.mxu0 0.0
        %2319 = vmatpush1.msra.mxu0 %v2268
        %2320 = vmatprep.subr.mxu0 0.0
        %2321 = vmatpush1.msra.mxu0 %v2267
        %2322 = vmatprep.subr.mxu0 0.0
        %2323 = vmatpush2.msra.mxu0 0.0
        %2324 = vmatprep.subr.mxu0 0.0
        %2325 = vmatpush2.msra.mxu0 0.0
        %2326 = vmatprep.subr.mxu0 0.0
        %2327 = vmatpush2.msra.mxu0 0.0
        %2328 = vmatprep.subr.mxu0 0.0
        %2329 = vmatpush2.msra.mxu0 0.0
        %2330 = vmatprep.subr.mxu0 0.0
        %2331 = vmatpush2.msra.mxu0 0.0
        %2332 = vmatprep.subr.mxu0 0.0
        %2333 = vmatpush2.msra.mxu0 0.0
        %2334 = vmatprep.subr.mxu0 0.0
        %2335 = vmatpush2.msra.mxu0 0.0
        %2336 = vmatprep.subr.mxu0 0.0
        %2337 = vmatpush2.msra.mxu0 0.0
        %2338 = vmatprep.subr.mxu0 0.0
        %2339 = vmatpush2.msra.mxu0 0.0
        %2340 = vmatprep.subr.mxu0 0.0
        %2341 = vmatpush2.msra.mxu0 0.0
        %2342 = vmatprep.subr.mxu0 0.0
        %2343 = vmatpush2.msra.mxu0 0.0
        %2344 = vmatprep.subr.mxu0 0.0
        %2345 = vmatpush2.msra.mxu0 0.0
        %2346 = vmatprep.subr.mxu0 0.0
        %2347 = vmatpush2.msra.mxu0 0.0
        %2348 = vmatprep.subr.mxu0 0.0
        %2349 = vmatpush2.msra.mxu0 0.0
        %2350 = vmatprep.subr.mxu0 0.0
        %2351 = vmatpush2.msra.mxu0 0.0
        %2352 = vmatprep.subr.mxu0 0.0
        %2353 = vmatpush2.msra.mxu0 0.0
        %2354 = vmatprep.mubr.f32.mxu0 0.0
        %2355 = vmatmul.mubr.f32.gmra.mxu0 %v2288
        %v2356 = vpop.f32.mrf.mxu0
        %v2357 = vadd.f32 %v2286, %v2356
        %v2358 = vpop.f32.mrf.mxu0
        %2359 = vdwg.mxu0
        %v2360 = vlaneseq
        %v2361 = vshrl.u32 %v2360, 7
        %v2362 = vsub.s32 7, %v2361
        %v2363 = vrot.slane %v681, %v2362
        %2364 = vmatprep.subr.mxu0 0.0
        %2365 = vmatpush1.msra.mxu0 0.0
        %2366 = vmatprep.subr.mxu0 0.0
        %2367 = vmatpush1.msra.mxu0 0.0
        %2368 = vmatprep.subr.mxu0 0.0
        %2369 = vmatpush1.msra.mxu0 0.0
        %2370 = vmatprep.subr.mxu0 0.0
        %2371 = vmatpush1.msra.mxu0 0.0
        %2372 = vmatprep.subr.mxu0 0.0
        %2373 = vmatpush1.msra.mxu0 0.0
        %2374 = vmatprep.subr.mxu0 0.0
        %2375 = vmatpush1.msra.mxu0 0.0
        %2376 = vmatprep.subr.mxu0 0.0
        %2377 = vmatpush1.msra.mxu0 0.0
        %2378 = vmatprep.subr.mxu0 0.0
        %2379 = vmatpush1.msra.mxu0 0.0
        %2380 = vmatprep.subr.mxu0 0.0
        %2381 = vmatpush1.msra.mxu0 0.0
        %2382 = vmatprep.subr.mxu0 0.0
        %2383 = vmatpush1.msra.mxu0 0.0
        %2384 = vmatprep.subr.mxu0 0.0
        %2385 = vmatpush1.msra.mxu0 0.0
        %2386 = vmatprep.subr.mxu0 0.0
        %2387 = vmatpush1.msra.mxu0 0.0
        %2388 = vmatprep.subr.mxu0 0.0
        %2389 = vmatpush1.msra.mxu0 %v2274
        %2390 = vmatprep.subr.mxu0 0.0
        %2391 = vmatpush1.msra.mxu0 %v2273
        %2392 = vmatprep.subr.mxu0 0.0
        %2393 = vmatpush1.msra.mxu0 %v2272
        %2394 = vmatprep.subr.mxu0 0.0
        %2395 = vmatpush1.msra.mxu0 %v2271
        %2396 = vmatprep.subr.mxu0 0.0
        %2397 = vmatpush2.msra.mxu0 0.0
        %2398 = vmatprep.subr.mxu0 0.0
        %2399 = vmatpush2.msra.mxu0 0.0
        %2400 = vmatprep.subr.mxu0 0.0
        %2401 = vmatpush2.msra.mxu0 0.0
        %2402 = vmatprep.subr.mxu0 0.0
        %2403 = vmatpush2.msra.mxu0 0.0
        %2404 = vmatprep.subr.mxu0 0.0
        %2405 = vmatpush2.msra.mxu0 0.0
        %2406 = vmatprep.subr.mxu0 0.0
        %2407 = vmatpush2.msra.mxu0 0.0
        %2408 = vmatprep.subr.mxu0 0.0
        %2409 = vmatpush2.msra.mxu0 0.0
        %2410 = vmatprep.subr.mxu0 0.0
        %2411 = vmatpush2.msra.mxu0 0.0
        %2412 = vmatprep.subr.mxu0 0.0
        %2413 = vmatpush2.msra.mxu0 0.0
        %2414 = vmatprep.subr.mxu0 0.0
        %2415 = vmatpush2.msra.mxu0 0.0
        %2416 = vmatprep.subr.mxu0 0.0
        %2417 = vmatpush2.msra.mxu0 0.0
        %2418 = vmatprep.subr.mxu0 0.0
        %2419 = vmatpush2.msra.mxu0 0.0
        %2420 = vmatprep.subr.mxu0 0.0
        %2421 = vmatpush2.msra.mxu0 0.0
        %2422 = vmatprep.subr.mxu0 0.0
        %2423 = vmatpush2.msra.mxu0 0.0
        %2424 = vmatprep.subr.mxu0 0.0
        %2425 = vmatpush2.msra.mxu0 0.0
        %2426 = vmatprep.subr.mxu0 0.0
        %2427 = vmatpush2.msra.mxu0 0.0
        %2428 = vmatprep.mubr.f32.mxu0 0.0
        %2429 = vmatmul.mubr.f32.gmra.mxu0 %v2288
        %v2430 = vpop.f32.mrf.mxu0
        %v2431 = vadd.f32 %v2363, %v2430
        %v2432 = vpop.f32.mrf.mxu0
        %2433 = vdwg.mxu0
        %v2434 = vlaneseq
        %v2435 = vshrl.u32 %v2434, 7
        %v2436 = vsub.s32 0, %v2435
        %v2437 = vrot.slane %v682, %v2436
        %v2439 = vsel %vm703, %v2266, 0
        %2441 = vmatprep.subr.mxu0 0.0
        %2442 = vmatpush1.msra.mxu0 0.0
        %2443 = vmatprep.subr.mxu0 0.0
        %2444 = vmatpush1.msra.mxu0 0.0
        %2445 = vmatprep.subr.mxu0 0.0
        %2446 = vmatpush1.msra.mxu0 0.0
        %2447 = vmatprep.subr.mxu0 0.0
        %2448 = vmatpush1.msra.mxu0 0.0
        %2449 = vmatprep.subr.mxu0 0.0
        %2450 = vmatpush1.msra.mxu0 0.0
        %2451 = vmatprep.subr.mxu0 0.0
        %2452 = vmatpush1.msra.mxu0 0.0
        %2453 = vmatprep.subr.mxu0 0.0
        %2454 = vmatpush1.msra.mxu0 0.0
        %2455 = vmatprep.subr.mxu0 0.0
        %2456 = vmatpush1.msra.mxu0 0.0
        %2457 = vmatprep.subr.mxu0 0.0
        %2458 = vmatpush1.msra.mxu0 0.0
        %2459 = vmatprep.subr.mxu0 0.0
        %2460 = vmatpush1.msra.mxu0 0.0
        %2461 = vmatprep.subr.mxu0 0.0
        %2462 = vmatpush1.msra.mxu0 0.0
        %2463 = vmatprep.subr.mxu0 0.0
        %2464 = vmatpush1.msra.mxu0 0.0
        %2465 = vmatprep.subr.mxu0 0.0
        %2466 = vmatpush1.msra.mxu0 %v2278
        %2467 = vmatprep.subr.mxu0 0.0
        %2468 = vmatpush1.msra.mxu0 %v2277
        %2469 = vmatprep.subr.mxu0 0.0
        %2470 = vmatpush1.msra.mxu0 %v2276
        %2471 = vmatprep.subr.mxu0 0.0
        %2472 = vmatpush1.msra.mxu0 %v2275
        %2473 = vmatprep.subr.mxu0 0.0
        %2474 = vmatpush2.msra.mxu0 0.0
        %2475 = vmatprep.subr.mxu0 0.0
        %2476 = vmatpush2.msra.mxu0 0.0
        %2477 = vmatprep.subr.mxu0 0.0
        %2478 = vmatpush2.msra.mxu0 0.0
        %2479 = vmatprep.subr.mxu0 0.0
        %2480 = vmatpush2.msra.mxu0 0.0
        %2481 = vmatprep.subr.mxu0 0.0
        %2482 = vmatpush2.msra.mxu0 0.0
        %2483 = vmatprep.subr.mxu0 0.0
        %2484 = vmatpush2.msra.mxu0 0.0
        %2485 = vmatprep.subr.mxu0 0.0
        %2486 = vmatpush2.msra.mxu0 0.0
        %2487 = vmatprep.subr.mxu0 0.0
        %2488 = vmatpush2.msra.mxu0 0.0
        %2489 = vmatprep.subr.mxu0 0.0
        %2490 = vmatpush2.msra.mxu0 0.0
        %2491 = vmatprep.subr.mxu0 0.0
        %2492 = vmatpush2.msra.mxu0 0.0
        %2493 = vmatprep.subr.mxu0 0.0
        %2494 = vmatpush2.msra.mxu0 0.0
        %2495 = vmatprep.subr.mxu0 0.0
        %2496 = vmatpush2.msra.mxu0 0.0
        %2497 = vmatprep.subr.mxu0 0.0
        %2498 = vmatpush2.msra.mxu0 0.0
        %2499 = vmatprep.subr.mxu0 0.0
        %2500 = vmatpush2.msra.mxu0 0.0
        %2501 = vmatprep.subr.mxu0 0.0
        %2502 = vmatpush2.msra.mxu0 0.0
        %2503 = vmatprep.subr.mxu0 0.0
        %2504 = vmatpush2.msra.mxu0 0.0
        %2505 = vmatprep.mubr.f32.mxu0 0.0
        %2506 = vmatmul.mubr.f32.gmra.mxu0 %v2439
        %v2507 = vpop.f32.mrf.mxu0
        %v2508 = vadd.f32 %v2437, %v2507
        %v2509 = vpop.f32.mrf.mxu0
        %2510 = vdwg.mxu0
        %2512 = vrot.lane.b32.xlu0 %v2357, 120
        %v2513 = vpop.permute.xlu0 %2512
        %2515 = vrot.lane.b32.xlu0 %v2357, 112
        %v2516 = vpop.permute.xlu0 %2515
        %2518 = vrot.lane.b32.xlu0 %v2357, 104
        %v2519 = vpop.permute.xlu0 %2518
        %v2521 = vcombine.low %v2357, %v2516
        %v2522 = vcombine.high %v2357, %v2516
        %v2524 = vunpack.c.l.s4 1983009808
        %v2525 = vunpack.c.0.s8 %v2524
        %v2526 = vlaneseq
        %v2527 = vshrl.u32 %v2526, 7
        %v2528 = vsub.s32 %v2525, %v2527
        %v2529 = vrot.slane %v2521, %v2528
        %v2531 = vunpack.c.l.s4 1983009808
        %v2532 = vunpack.c.0.s8 %v2531
        %v2533 = vlaneseq
        %v2534 = vshrl.u32 %v2533, 7
        %v2535 = vsub.s32 %v2532, %v2534
        %v2536 = vrot.slane %v2522, %v2535
        %v2537 = vcombine.low %v2513, %v2519
        %v2538 = vcombine.high %v2513, %v2519
        %v2540 = vunpack.c.l.s4 1983009808
        %v2541 = vunpack.c.0.s8 %v2540
        %v2542 = vlaneseq
        %v2543 = vshrl.u32 %v2542, 7
        %v2544 = vsub.s32 %v2541, %v2543
        %v2545 = vrot.slane %v2537, %v2544
        %v2547 = vunpack.c.l.s4 1983009808
        %v2548 = vunpack.c.0.s8 %v2547
        %v2549 = vlaneseq
        %v2550 = vshrl.u32 %v2549, 7
        %v2551 = vsub.s32 %v2548, %v2550
        %v2552 = vrot.slane %v2538, %v2551
        %v2553 = vcombine.low %v2529, %v2545
        %v2554 = vcombine.high %v2529, %v2545
        %v2556 = vunpack.c.l.s4 1934713408
        %v2557 = vunpack.c.0.s8 %v2556
        %v2558 = vlaneseq
        %v2559 = vshrl.u32 %v2558, 7
        %v2560 = vsub.s32 %v2557, %v2559
        %v2561 = vrot.slane %v2553, %v2560
        %v2563 = vunpack.c.l.s4 1934713408
        %v2564 = vunpack.c.0.s8 %v2563
        %v2565 = vlaneseq
        %v2566 = vshrl.u32 %v2565, 7
        %v2567 = vsub.s32 %v2564, %v2566
        %v2568 = vrot.slane %v2554, %v2567
        %v2569 = vcombine.low %v2536, %v2552
        %v2570 = vcombine.high %v2536, %v2552
        %v2572 = vunpack.c.l.s4 1934713408
        %v2573 = vunpack.c.0.s8 %v2572
        %v2574 = vlaneseq
        %v2575 = vshrl.u32 %v2574, 7
        %v2576 = vsub.s32 %v2573, %v2575
        %v2577 = vrot.slane %v2569, %v2576
        %v2579 = vunpack.c.l.s4 1934713408
        %v2580 = vunpack.c.0.s8 %v2579
        %v2581 = vlaneseq
        %v2582 = vshrl.u32 %v2581, 7
        %v2583 = vsub.s32 %v2580, %v2582
        %v2584 = vrot.slane %v2570, %v2583
        %v2585 = vcombine.high %v2561, 0.0
        %v2586 = vcombine.high %v2568, 0.0
        %v2587 = vcombine.high %v2577, 0.0
        %v2588 = vcombine.high %v2584, 0.0
        %v2589 = vcombine.low %v2561, %v2568
        %v2591 = vunpack.c.l.s4 1983009808
        %v2592 = vunpack.c.0.s8 %v2591
        %v2593 = vlaneseq
        %v2594 = vshrl.u32 %v2593, 7
        %v2595 = vsub.s32 %v2592, %v2594
        %v2596 = vrot.slane %v2589, %v2595
        %v2597 = vcombine.low %v2585, %v2586
        %v2599 = vunpack.c.l.s4 1983009808
        %v2600 = vunpack.c.0.s8 %v2599
        %v2601 = vlaneseq
        %v2602 = vshrl.u32 %v2601, 7
        %v2603 = vsub.s32 %v2600, %v2602
        %v2604 = vrot.slane %v2597, %v2603
        %v2605 = vcombine.low %v2577, %v2584
        %v2607 = vunpack.c.l.s4 1983009808
        %v2608 = vunpack.c.0.s8 %v2607
        %v2609 = vlaneseq
        %v2610 = vshrl.u32 %v2609, 7
        %v2611 = vsub.s32 %v2608, %v2610
        %v2612 = vrot.slane %v2605, %v2611
        %v2613 = vcombine.low %v2587, %v2588
        %v2615 = vunpack.c.l.s4 1983009808
        %v2616 = vunpack.c.0.s8 %v2615
        %v2617 = vlaneseq
        %v2618 = vshrl.u32 %v2617, 7
        %v2619 = vsub.s32 %v2616, %v2618
        %v2620 = vrot.slane %v2613, %v2619
        %v2621 = vcombine.low %v2596, %v2604
        %v2622 = vcombine.high %v2596, %v2604
        %v2624 = vunpack.c.l.s4 1934713408
        %v2625 = vunpack.c.0.s8 %v2624
        %v2626 = vlaneseq
        %v2627 = vshrl.u32 %v2626, 7
        %v2628 = vsub.s32 %v2625, %v2627
        %v2629 = vrot.slane %v2621, %v2628
        %v2631 = vunpack.c.l.s4 1934713408
        %v2632 = vunpack.c.0.s8 %v2631
        %v2633 = vlaneseq
        %v2634 = vshrl.u32 %v2633, 7
        %v2635 = vsub.s32 %v2632, %v2634
        %v2636 = vrot.slane %v2622, %v2635
        %v2637 = vcombine.low %v2612, %v2620
        %v2638 = vcombine.high %v2612, %v2620
        %v2640 = vunpack.c.l.s4 1934713408
        %v2641 = vunpack.c.0.s8 %v2640
        %v2642 = vlaneseq
        %v2643 = vshrl.u32 %v2642, 7
        %v2644 = vsub.s32 %v2641, %v2643
        %v2645 = vrot.slane %v2637, %v2644
        %v2647 = vunpack.c.l.s4 1934713408
        %v2648 = vunpack.c.0.s8 %v2647
        %v2649 = vlaneseq
        %v2650 = vshrl.u32 %v2649, 7
        %v2651 = vsub.s32 %v2648, %v2650
        %v2652 = vrot.slane %v2638, %v2651
        %v2653 = vcombine.low %v2629, %v2645
        %v2654 = vcombine.high %v2629, %v2645
        %v2655 = vcombine.low %v2636, %v2652
        %v2656 = vcombine.high %v2636, %v2652
        %2658 = vrot.lane.b32.xlu0 %v2431, 120
        %v2659 = vpop.permute.xlu0 %2658
        %2661 = vrot.lane.b32.xlu0 %v2431, 112
        %v2662 = vpop.permute.xlu0 %2661
        %2664 = vrot.lane.b32.xlu0 %v2431, 104
        %v2665 = vpop.permute.xlu0 %2664
        %v2667 = vcombine.low %v2431, %v2662
        %v2668 = vcombine.high %v2431, %v2662
        %v2670 = vunpack.c.l.s4 1983009808
        %v2671 = vunpack.c.0.s8 %v2670
        %v2672 = vlaneseq
        %v2673 = vshrl.u32 %v2672, 7
        %v2674 = vsub.s32 %v2671, %v2673
        %v2675 = vrot.slane %v2667, %v2674
        %v2677 = vunpack.c.l.s4 1983009808
        %v2678 = vunpack.c.0.s8 %v2677
        %v2679 = vlaneseq
        %v2680 = vshrl.u32 %v2679, 7
        %v2681 = vsub.s32 %v2678, %v2680
        %v2682 = vrot.slane %v2668, %v2681
        %v2683 = vcombine.low %v2659, %v2665
        %v2684 = vcombine.high %v2659, %v2665
        %v2686 = vunpack.c.l.s4 1983009808
        %v2687 = vunpack.c.0.s8 %v2686
        %v2688 = vlaneseq
        %v2689 = vshrl.u32 %v2688, 7
        %v2690 = vsub.s32 %v2687, %v2689
        %v2691 = vrot.slane %v2683, %v2690
        %v2693 = vunpack.c.l.s4 1983009808
        %v2694 = vunpack.c.0.s8 %v2693
        %v2695 = vlaneseq
        %v2696 = vshrl.u32 %v2695, 7
        %v2697 = vsub.s32 %v2694, %v2696
        %v2698 = vrot.slane %v2684, %v2697
        %v2699 = vcombine.low %v2675, %v2691
        %v2700 = vcombine.high %v2675, %v2691
        %v2702 = vunpack.c.l.s4 1934713408
        %v2703 = vunpack.c.0.s8 %v2702
        %v2704 = vlaneseq
        %v2705 = vshrl.u32 %v2704, 7
        %v2706 = vsub.s32 %v2703, %v2705
        %v2707 = vrot.slane %v2699, %v2706
        %v2709 = vunpack.c.l.s4 1934713408
        %v2710 = vunpack.c.0.s8 %v2709
        %v2711 = vlaneseq
        %v2712 = vshrl.u32 %v2711, 7
        %v2713 = vsub.s32 %v2710, %v2712
        %v2714 = vrot.slane %v2700, %v2713
        %v2715 = vcombine.low %v2682, %v2698
        %v2716 = vcombine.high %v2682, %v2698
        %v2718 = vunpack.c.l.s4 1934713408
        %v2719 = vunpack.c.0.s8 %v2718
        %v2720 = vlaneseq
        %v2721 = vshrl.u32 %v2720, 7
        %v2722 = vsub.s32 %v2719, %v2721
        %v2723 = vrot.slane %v2715, %v2722
        %v2725 = vunpack.c.l.s4 1934713408
        %v2726 = vunpack.c.0.s8 %v2725
        %v2727 = vlaneseq
        %v2728 = vshrl.u32 %v2727, 7
        %v2729 = vsub.s32 %v2726, %v2728
        %v2730 = vrot.slane %v2716, %v2729
        %v2731 = vcombine.high %v2707, 0.0
        %v2732 = vcombine.high %v2714, 0.0
        %v2733 = vcombine.high %v2723, 0.0
        %v2734 = vcombine.high %v2730, 0.0
        %v2735 = vcombine.low %v2707, %v2714
        %v2737 = vunpack.c.l.s4 1983009808
        %v2738 = vunpack.c.0.s8 %v2737
        %v2739 = vlaneseq
        %v2740 = vshrl.u32 %v2739, 7
        %v2741 = vsub.s32 %v2738, %v2740
        %v2742 = vrot.slane %v2735, %v2741
        %v2743 = vcombine.low %v2731, %v2732
        %v2745 = vunpack.c.l.s4 1983009808
        %v2746 = vunpack.c.0.s8 %v2745
        %v2747 = vlaneseq
        %v2748 = vshrl.u32 %v2747, 7
        %v2749 = vsub.s32 %v2746, %v2748
        %v2750 = vrot.slane %v2743, %v2749
        %v2751 = vcombine.low %v2723, %v2730
        %v2753 = vunpack.c.l.s4 1983009808
        %v2754 = vunpack.c.0.s8 %v2753
        %v2755 = vlaneseq
        %v2756 = vshrl.u32 %v2755, 7
        %v2757 = vsub.s32 %v2754, %v2756
        %v2758 = vrot.slane %v2751, %v2757
        %v2759 = vcombine.low %v2733, %v2734
        %v2761 = vunpack.c.l.s4 1983009808
        %v2762 = vunpack.c.0.s8 %v2761
        %v2763 = vlaneseq
        %v2764 = vshrl.u32 %v2763, 7
        %v2765 = vsub.s32 %v2762, %v2764
        %v2766 = vrot.slane %v2759, %v2765
        %v2767 = vcombine.low %v2742, %v2750
        %v2768 = vcombine.high %v2742, %v2750
        %v2770 = vunpack.c.l.s4 1934713408
        %v2771 = vunpack.c.0.s8 %v2770
        %v2772 = vlaneseq
        %v2773 = vshrl.u32 %v2772, 7
        %v2774 = vsub.s32 %v2771, %v2773
        %v2775 = vrot.slane %v2767, %v2774
        %v2777 = vunpack.c.l.s4 1934713408
        %v2778 = vunpack.c.0.s8 %v2777
        %v2779 = vlaneseq
        %v2780 = vshrl.u32 %v2779, 7
        %v2781 = vsub.s32 %v2778, %v2780
        %v2782 = vrot.slane %v2768, %v2781
        %v2783 = vcombine.low %v2758, %v2766
        %v2784 = vcombine.high %v2758, %v2766
        %v2786 = vunpack.c.l.s4 1934713408
        %v2787 = vunpack.c.0.s8 %v2786
        %v2788 = vlaneseq
        %v2789 = vshrl.u32 %v2788, 7
        %v2790 = vsub.s32 %v2787, %v2789
        %v2791 = vrot.slane %v2783, %v2790
        %v2793 = vunpack.c.l.s4 1934713408
        %v2794 = vunpack.c.0.s8 %v2793
        %v2795 = vlaneseq
        %v2796 = vshrl.u32 %v2795, 7
        %v2797 = vsub.s32 %v2794, %v2796
        %v2798 = vrot.slane %v2784, %v2797
        %v2799 = vcombine.low %v2775, %v2791
        %v2800 = vcombine.high %v2775, %v2791
        %v2801 = vcombine.low %v2782, %v2798
        %v2802 = vcombine.high %v2782, %v2798
        %2804 = vrot.lane.b32.xlu0 %v2508, 120
        %v2805 = vpop.permute.xlu0 %2804
        %2807 = vrot.lane.b32.xlu0 %v2508, 112
        %v2808 = vpop.permute.xlu0 %2807
        %2810 = vrot.lane.b32.xlu0 %v2508, 104
        %v2811 = vpop.permute.xlu0 %2810
        %v2813 = vcombine.low %v2508, %v2808
        %v2814 = vcombine.high %v2508, %v2808
        %v2816 = vunpack.c.l.s4 1983009808
        %v2817 = vunpack.c.0.s8 %v2816
        %v2818 = vlaneseq
        %v2819 = vshrl.u32 %v2818, 7
        %v2820 = vsub.s32 %v2817, %v2819
        %v2821 = vrot.slane %v2813, %v2820
        %v2823 = vunpack.c.l.s4 1983009808
        %v2824 = vunpack.c.0.s8 %v2823
        %v2825 = vlaneseq
        %v2826 = vshrl.u32 %v2825, 7
        %v2827 = vsub.s32 %v2824, %v2826
        %v2828 = vrot.slane %v2814, %v2827
        %v2829 = vcombine.low %v2805, %v2811
        %v2830 = vcombine.high %v2805, %v2811
        %v2832 = vunpack.c.l.s4 1983009808
        %v2833 = vunpack.c.0.s8 %v2832
        %v2834 = vlaneseq
        %v2835 = vshrl.u32 %v2834, 7
        %v2836 = vsub.s32 %v2833, %v2835
        %v2837 = vrot.slane %v2829, %v2836
        %v2839 = vunpack.c.l.s4 1983009808
        %v2840 = vunpack.c.0.s8 %v2839
        %v2841 = vlaneseq
        %v2842 = vshrl.u32 %v2841, 7
        %v2843 = vsub.s32 %v2840, %v2842
        %v2844 = vrot.slane %v2830, %v2843
        %v2845 = vcombine.low %v2821, %v2837
        %v2846 = vcombine.high %v2821, %v2837
        %v2848 = vunpack.c.l.s4 1934713408
        %v2849 = vunpack.c.0.s8 %v2848
        %v2850 = vlaneseq
        %v2851 = vshrl.u32 %v2850, 7
        %v2852 = vsub.s32 %v2849, %v2851
        %v2853 = vrot.slane %v2845, %v2852
        %v2855 = vunpack.c.l.s4 1934713408
        %v2856 = vunpack.c.0.s8 %v2855
        %v2857 = vlaneseq
        %v2858 = vshrl.u32 %v2857, 7
        %v2859 = vsub.s32 %v2856, %v2858
        %v2860 = vrot.slane %v2846, %v2859
        %v2861 = vcombine.low %v2828, %v2844
        %v2862 = vcombine.high %v2828, %v2844
        %v2864 = vunpack.c.l.s4 1934713408
        %v2865 = vunpack.c.0.s8 %v2864
        %v2866 = vlaneseq
        %v2867 = vshrl.u32 %v2866, 7
        %v2868 = vsub.s32 %v2865, %v2867
        %v2869 = vrot.slane %v2861, %v2868
        %v2871 = vunpack.c.l.s4 1934713408
        %v2872 = vunpack.c.0.s8 %v2871
        %v2873 = vlaneseq
        %v2874 = vshrl.u32 %v2873, 7
        %v2875 = vsub.s32 %v2872, %v2874
        %v2876 = vrot.slane %v2862, %v2875
        %v2877 = vcombine.high %v2853, 0.0
        %v2878 = vcombine.high %v2860, 0.0
        %v2879 = vcombine.high %v2869, 0.0
        %v2880 = vcombine.high %v2876, 0.0
        %v2881 = vcombine.low %v2853, %v2860
        %v2883 = vunpack.c.l.s4 1983009808
        %v2884 = vunpack.c.0.s8 %v2883
        %v2885 = vlaneseq
        %v2886 = vshrl.u32 %v2885, 7
        %v2887 = vsub.s32 %v2884, %v2886
        %v2888 = vrot.slane %v2881, %v2887
        %v2889 = vcombine.low %v2877, %v2878
        %v2891 = vunpack.c.l.s4 1983009808
        %v2892 = vunpack.c.0.s8 %v2891
        %v2893 = vlaneseq
        %v2894 = vshrl.u32 %v2893, 7
        %v2895 = vsub.s32 %v2892, %v2894
        %v2896 = vrot.slane %v2889, %v2895
        %v2897 = vcombine.low %v2869, %v2876
        %v2899 = vunpack.c.l.s4 1983009808
        %v2900 = vunpack.c.0.s8 %v2899
        %v2901 = vlaneseq
        %v2902 = vshrl.u32 %v2901, 7
        %v2903 = vsub.s32 %v2900, %v2902
        %v2904 = vrot.slane %v2897, %v2903
        %v2905 = vcombine.low %v2879, %v2880
        %v2907 = vunpack.c.l.s4 1983009808
        %v2908 = vunpack.c.0.s8 %v2907
        %v2909 = vlaneseq
        %v2910 = vshrl.u32 %v2909, 7
        %v2911 = vsub.s32 %v2908, %v2910
        %v2912 = vrot.slane %v2905, %v2911
        %v2913 = vcombine.low %v2888, %v2896
        %v2914 = vcombine.high %v2888, %v2896
        %v2916 = vunpack.c.l.s4 1934713408
        %v2917 = vunpack.c.0.s8 %v2916
        %v2918 = vlaneseq
        %v2919 = vshrl.u32 %v2918, 7
        %v2920 = vsub.s32 %v2917, %v2919
        %v2921 = vrot.slane %v2913, %v2920
        %v2923 = vunpack.c.l.s4 1934713408
        %v2924 = vunpack.c.0.s8 %v2923
        %v2925 = vlaneseq
        %v2926 = vshrl.u32 %v2925, 7
        %v2927 = vsub.s32 %v2924, %v2926
        %v2928 = vrot.slane %v2914, %v2927
        %v2929 = vcombine.low %v2904, %v2912
        %v2930 = vcombine.high %v2904, %v2912
        %v2932 = vunpack.c.l.s4 1934713408
        %v2933 = vunpack.c.0.s8 %v2932
        %v2934 = vlaneseq
        %v2935 = vshrl.u32 %v2934, 7
        %v2936 = vsub.s32 %v2933, %v2935
        %v2937 = vrot.slane %v2929, %v2936
        %v2939 = vunpack.c.l.s4 1934713408
        %v2940 = vunpack.c.0.s8 %v2939
        %v2941 = vlaneseq
        %v2942 = vshrl.u32 %v2941, 7
        %v2943 = vsub.s32 %v2940, %v2942
        %v2944 = vrot.slane %v2930, %v2943
        %v2945 = vcombine.low %v2921, %v2937
        %v2946 = vcombine.high %v2921, %v2937
        %v2947 = vcombine.low %v2928, %v2944
        %v2948 = vcombine.high %v2928, %v2944
        %v2950 = vsel %vm1363, %v2945, 0
        %v2953 = vsel %vm1363, %v2799, 0
        %2955 = vmatprep.subr.mxu0 0.0
        %2956 = vmatpush1.xpose.msra.mxu0 0.0
        %2957 = vmatprep.subr.mxu0 0.0
        %2958 = vmatpush1.xpose.msra.mxu0 0.0
        %2959 = vmatprep.subr.mxu0 0.0
        %2960 = vmatpush1.xpose.msra.mxu0 0.0
        %2961 = vmatprep.subr.mxu0 0.0
        %2962 = vmatpush1.xpose.msra.mxu0 0.0
        %2963 = vmatprep.subr.mxu0 0.0
        %2964 = vmatpush1.xpose.msra.mxu0 0.0
        %2965 = vmatprep.subr.mxu0 0.0
        %2966 = vmatpush1.xpose.msra.mxu0 0.0
        %2967 = vmatprep.subr.mxu0 0.0
        %2968 = vmatpush1.xpose.msra.mxu0 0.0
        %2969 = vmatprep.subr.mxu0 0.0
        %2970 = vmatpush1.xpose.msra.mxu0 0.0
        %2971 = vmatprep.subr.mxu0 0.0
        %2972 = vmatpush1.xpose.msra.mxu0 0.0
        %2973 = vmatprep.subr.mxu0 0.0
        %2974 = vmatpush1.xpose.msra.mxu0 0.0
        %2975 = vmatprep.subr.mxu0 0.0
        %2976 = vmatpush1.xpose.msra.mxu0 0.0
        %2977 = vmatprep.subr.mxu0 0.0
        %2978 = vmatpush1.xpose.msra.mxu0 0.0
        %2979 = vmatprep.subr.mxu0 0.0
        %2980 = vmatpush1.xpose.msra.mxu0 0.0
        %2981 = vmatprep.subr.mxu0 0.0
        %2982 = vmatpush1.xpose.msra.mxu0 0.0
        %2983 = vmatprep.subr.mxu0 0.0
        %2984 = vmatpush1.xpose.msra.mxu0 0.0
        %2985 = vmatprep.subr.mxu0 0.0
        %2986 = vmatpush1.xpose.msra.mxu0 %v2953
        %2987 = vmatprep.subr.mxu0 0.0
        %2988 = vmatpush2.xpose.msra.mxu0 0.0
        %2989 = vmatprep.subr.mxu0 0.0
        %2990 = vmatpush2.xpose.msra.mxu0 0.0
        %2991 = vmatprep.subr.mxu0 0.0
        %2992 = vmatpush2.xpose.msra.mxu0 0.0
        %2993 = vmatprep.subr.mxu0 0.0
        %2994 = vmatpush2.xpose.msra.mxu0 0.0
        %2995 = vmatprep.subr.mxu0 0.0
        %2996 = vmatpush2.xpose.msra.mxu0 0.0
        %2997 = vmatprep.subr.mxu0 0.0
        %2998 = vmatpush2.xpose.msra.mxu0 0.0
        %2999 = vmatprep.subr.mxu0 0.0
        %3000 = vmatpush2.xpose.msra.mxu0 0.0
        %3001 = vmatprep.subr.mxu0 0.0
        %3002 = vmatpush2.xpose.msra.mxu0 0.0
        %3003 = vmatprep.subr.mxu0 0.0
        %3004 = vmatpush2.xpose.msra.mxu0 0.0
        %3005 = vmatprep.subr.mxu0 0.0
        %3006 = vmatpush2.xpose.msra.mxu0 0.0
        %3007 = vmatprep.subr.mxu0 0.0
        %3008 = vmatpush2.xpose.msra.mxu0 0.0
        %3009 = vmatprep.subr.mxu0 0.0
        %3010 = vmatpush2.xpose.msra.mxu0 0.0
        %3011 = vmatprep.subr.mxu0 0.0
        %3012 = vmatpush2.xpose.msra.mxu0 0.0
        %3013 = vmatprep.subr.mxu0 0.0
        %3014 = vmatpush2.xpose.msra.mxu0 0.0
        %3015 = vmatprep.subr.mxu0 0.0
        %3016 = vmatpush2.xpose.msra.mxu0 0.0
        %3017 = vmatprep.subr.mxu0 0.0
        %3018 = vmatpush2.xpose.msra.mxu0 0.0
        %3019 = vmatprep.mubr.f32.mxu0 0.0
        %3020 = vmatmul.mubr.f32.gmra.mxu0 %v2950
        %v3021 = vpop.f32.mrf.mxu0
        %v3022 = vadd.f32 0.0, %v3021
        %v3023 = vpop.f32.mrf.mxu0
        %3024 = vdwg.mxu0
        %v3026 = vsel %vm1363, %v2946, 0
        %v3029 = vsel %vm1363, %v2800, 0
        %3031 = vmatprep.subr.mxu0 0.0
        %3032 = vmatpush1.xpose.msra.mxu0 0.0
        %3033 = vmatprep.subr.mxu0 0.0
        %3034 = vmatpush1.xpose.msra.mxu0 0.0
        %3035 = vmatprep.subr.mxu0 0.0
        %3036 = vmatpush1.xpose.msra.mxu0 0.0
        %3037 = vmatprep.subr.mxu0 0.0
        %3038 = vmatpush1.xpose.msra.mxu0 0.0
        %3039 = vmatprep.subr.mxu0 0.0
        %3040 = vmatpush1.xpose.msra.mxu0 0.0
        %3041 = vmatprep.subr.mxu0 0.0
        %3042 = vmatpush1.xpose.msra.mxu0 0.0
        %3043 = vmatprep.subr.mxu0 0.0
        %3044 = vmatpush1.xpose.msra.mxu0 0.0
        %3045 = vmatprep.subr.mxu0 0.0
        %3046 = vmatpush1.xpose.msra.mxu0 0.0
        %3047 = vmatprep.subr.mxu0 0.0
        %3048 = vmatpush1.xpose.msra.mxu0 0.0
        %3049 = vmatprep.subr.mxu0 0.0
        %3050 = vmatpush1.xpose.msra.mxu0 0.0
        %3051 = vmatprep.subr.mxu0 0.0
        %3052 = vmatpush1.xpose.msra.mxu0 0.0
        %3053 = vmatprep.subr.mxu0 0.0
        %3054 = vmatpush1.xpose.msra.mxu0 0.0
        %3055 = vmatprep.subr.mxu0 0.0
        %3056 = vmatpush1.xpose.msra.mxu0 0.0
        %3057 = vmatprep.subr.mxu0 0.0
        %3058 = vmatpush1.xpose.msra.mxu0 0.0
        %3059 = vmatprep.subr.mxu0 0.0
        %3060 = vmatpush1.xpose.msra.mxu0 0.0
        %3061 = vmatprep.subr.mxu0 0.0
        %3062 = vmatpush1.xpose.msra.mxu0 %v3029
        %3063 = vmatprep.subr.mxu0 0.0
        %3064 = vmatpush2.xpose.msra.mxu0 0.0
        %3065 = vmatprep.subr.mxu0 0.0
        %3066 = vmatpush2.xpose.msra.mxu0 0.0
        %3067 = vmatprep.subr.mxu0 0.0
        %3068 = vmatpush2.xpose.msra.mxu0 0.0
        %3069 = vmatprep.subr.mxu0 0.0
        %3070 = vmatpush2.xpose.msra.mxu0 0.0
        %3071 = vmatprep.subr.mxu0 0.0
        %3072 = vmatpush2.xpose.msra.mxu0 0.0
        %3073 = vmatprep.subr.mxu0 0.0
        %3074 = vmatpush2.xpose.msra.mxu0 0.0
        %3075 = vmatprep.subr.mxu0 0.0
        %3076 = vmatpush2.xpose.msra.mxu0 0.0
        %3077 = vmatprep.subr.mxu0 0.0
        %3078 = vmatpush2.xpose.msra.mxu0 0.0
        %3079 = vmatprep.subr.mxu0 0.0
        %3080 = vmatpush2.xpose.msra.mxu0 0.0
        %3081 = vmatprep.subr.mxu0 0.0
        %3082 = vmatpush2.xpose.msra.mxu0 0.0
        %3083 = vmatprep.subr.mxu0 0.0
        %3084 = vmatpush2.xpose.msra.mxu0 0.0
        %3085 = vmatprep.subr.mxu0 0.0
        %3086 = vmatpush2.xpose.msra.mxu0 0.0
        %3087 = vmatprep.subr.mxu0 0.0
        %3088 = vmatpush2.xpose.msra.mxu0 0.0
        %3089 = vmatprep.subr.mxu0 0.0
        %3090 = vmatpush2.xpose.msra.mxu0 0.0
        %3091 = vmatprep.subr.mxu0 0.0
        %3092 = vmatpush2.xpose.msra.mxu0 0.0
        %3093 = vmatprep.subr.mxu0 0.0
        %3094 = vmatpush2.xpose.msra.mxu0 0.0
        %3095 = vmatprep.mubr.f32.mxu0 0.0
        %3096 = vmatmul.mubr.f32.gmra.mxu0 %v3026
        %v3097 = vpop.f32.mrf.mxu0
        %v3098 = vadd.f32 0.0, %v3097
        %v3099 = vpop.f32.mrf.mxu0
        %3100 = vdwg.mxu0
        %v3102 = vsel %vm1363, %v2947, 0
        %v3105 = vsel %vm1363, %v2801, 0
        %3107 = vmatprep.subr.mxu0 0.0
        %3108 = vmatpush1.xpose.msra.mxu0 0.0
        %3109 = vmatprep.subr.mxu0 0.0
        %3110 = vmatpush1.xpose.msra.mxu0 0.0
        %3111 = vmatprep.subr.mxu0 0.0
        %3112 = vmatpush1.xpose.msra.mxu0 0.0
        %3113 = vmatprep.subr.mxu0 0.0
        %3114 = vmatpush1.xpose.msra.mxu0 0.0
        %3115 = vmatprep.subr.mxu0 0.0
        %3116 = vmatpush1.xpose.msra.mxu0 0.0
        %3117 = vmatprep.subr.mxu0 0.0
        %3118 = vmatpush1.xpose.msra.mxu0 0.0
        %3119 = vmatprep.subr.mxu0 0.0
        %3120 = vmatpush1.xpose.msra.mxu0 0.0
        %3121 = vmatprep.subr.mxu0 0.0
        %3122 = vmatpush1.xpose.msra.mxu0 0.0
        %3123 = vmatprep.subr.mxu0 0.0
        %3124 = vmatpush1.xpose.msra.mxu0 0.0
        %3125 = vmatprep.subr.mxu0 0.0
        %3126 = vmatpush1.xpose.msra.mxu0 0.0
        %3127 = vmatprep.subr.mxu0 0.0
        %3128 = vmatpush1.xpose.msra.mxu0 0.0
        %3129 = vmatprep.subr.mxu0 0.0
        %3130 = vmatpush1.xpose.msra.mxu0 0.0
        %3131 = vmatprep.subr.mxu0 0.0
        %3132 = vmatpush1.xpose.msra.mxu0 0.0
        %3133 = vmatprep.subr.mxu0 0.0
        %3134 = vmatpush1.xpose.msra.mxu0 0.0
        %3135 = vmatprep.subr.mxu0 0.0
        %3136 = vmatpush1.xpose.msra.mxu0 0.0
        %3137 = vmatprep.subr.mxu0 0.0
        %3138 = vmatpush1.xpose.msra.mxu0 %v3105
        %3139 = vmatprep.subr.mxu0 0.0
        %3140 = vmatpush2.xpose.msra.mxu0 0.0
        %3141 = vmatprep.subr.mxu0 0.0
        %3142 = vmatpush2.xpose.msra.mxu0 0.0
        %3143 = vmatprep.subr.mxu0 0.0
        %3144 = vmatpush2.xpose.msra.mxu0 0.0
        %3145 = vmatprep.subr.mxu0 0.0
        %3146 = vmatpush2.xpose.msra.mxu0 0.0
        %3147 = vmatprep.subr.mxu0 0.0
        %3148 = vmatpush2.xpose.msra.mxu0 0.0
        %3149 = vmatprep.subr.mxu0 0.0
        %3150 = vmatpush2.xpose.msra.mxu0 0.0
        %3151 = vmatprep.subr.mxu0 0.0
        %3152 = vmatpush2.xpose.msra.mxu0 0.0
        %3153 = vmatprep.subr.mxu0 0.0
        %3154 = vmatpush2.xpose.msra.mxu0 0.0
        %3155 = vmatprep.subr.mxu0 0.0
        %3156 = vmatpush2.xpose.msra.mxu0 0.0
        %3157 = vmatprep.subr.mxu0 0.0
        %3158 = vmatpush2.xpose.msra.mxu0 0.0
        %3159 = vmatprep.subr.mxu0 0.0
        %3160 = vmatpush2.xpose.msra.mxu0 0.0
        %3161 = vmatprep.subr.mxu0 0.0
        %3162 = vmatpush2.xpose.msra.mxu0 0.0
        %3163 = vmatprep.subr.mxu0 0.0
        %3164 = vmatpush2.xpose.msra.mxu0 0.0
        %3165 = vmatprep.subr.mxu0 0.0
        %3166 = vmatpush2.xpose.msra.mxu0 0.0
        %3167 = vmatprep.subr.mxu0 0.0
        %3168 = vmatpush2.xpose.msra.mxu0 0.0
        %3169 = vmatprep.subr.mxu0 0.0
        %3170 = vmatpush2.xpose.msra.mxu0 0.0
        %3171 = vmatprep.mubr.f32.mxu0 0.0
        %3172 = vmatmul.mubr.f32.gmra.mxu0 %v3102
        %v3173 = vpop.f32.mrf.mxu0
        %v3174 = vadd.f32 0.0, %v3173
        %v3175 = vpop.f32.mrf.mxu0
        %3176 = vdwg.mxu0
        %v3178 = vsel %vm1363, %v2948, 0
        %v3181 = vsel %vm1363, %v2802, 0
        %3183 = vmatprep.subr.mxu0 0.0
        %3184 = vmatpush1.xpose.msra.mxu0 0.0
        %3185 = vmatprep.subr.mxu0 0.0
        %3186 = vmatpush1.xpose.msra.mxu0 0.0
        %3187 = vmatprep.subr.mxu0 0.0
        %3188 = vmatpush1.xpose.msra.mxu0 0.0
        %3189 = vmatprep.subr.mxu0 0.0
        %3190 = vmatpush1.xpose.msra.mxu0 0.0
        %3191 = vmatprep.subr.mxu0 0.0
        %3192 = vmatpush1.xpose.msra.mxu0 0.0
        %3193 = vmatprep.subr.mxu0 0.0
        %3194 = vmatpush1.xpose.msra.mxu0 0.0
        %3195 = vmatprep.subr.mxu0 0.0
        %3196 = vmatpush1.xpose.msra.mxu0 0.0
        %3197 = vmatprep.subr.mxu0 0.0
        %3198 = vmatpush1.xpose.msra.mxu0 0.0
        %3199 = vmatprep.subr.mxu0 0.0
        %3200 = vmatpush1.xpose.msra.mxu0 0.0
        %3201 = vmatprep.subr.mxu0 0.0
        %3202 = vmatpush1.xpose.msra.mxu0 0.0
        %3203 = vmatprep.subr.mxu0 0.0
        %3204 = vmatpush1.xpose.msra.mxu0 0.0
        %3205 = vmatprep.subr.mxu0 0.0
        %3206 = vmatpush1.xpose.msra.mxu0 0.0
        %3207 = vmatprep.subr.mxu0 0.0
        %3208 = vmatpush1.xpose.msra.mxu0 0.0
        %3209 = vmatprep.subr.mxu0 0.0
        %3210 = vmatpush1.xpose.msra.mxu0 0.0
        %3211 = vmatprep.subr.mxu0 0.0
        %3212 = vmatpush1.xpose.msra.mxu0 0.0
        %3213 = vmatprep.subr.mxu0 0.0
        %3214 = vmatpush1.xpose.msra.mxu0 %v3181
        %3215 = vmatprep.subr.mxu0 0.0
        %3216 = vmatpush2.xpose.msra.mxu0 0.0
        %3217 = vmatprep.subr.mxu0 0.0
        %3218 = vmatpush2.xpose.msra.mxu0 0.0
        %3219 = vmatprep.subr.mxu0 0.0
        %3220 = vmatpush2.xpose.msra.mxu0 0.0
        %3221 = vmatprep.subr.mxu0 0.0
        %3222 = vmatpush2.xpose.msra.mxu0 0.0
        %3223 = vmatprep.subr.mxu0 0.0
        %3224 = vmatpush2.xpose.msra.mxu0 0.0
        %3225 = vmatprep.subr.mxu0 0.0
        %3226 = vmatpush2.xpose.msra.mxu0 0.0
        %3227 = vmatprep.subr.mxu0 0.0
        %3228 = vmatpush2.xpose.msra.mxu0 0.0
        %3229 = vmatprep.subr.mxu0 0.0
        %3230 = vmatpush2.xpose.msra.mxu0 0.0
        %3231 = vmatprep.subr.mxu0 0.0
        %3232 = vmatpush2.xpose.msra.mxu0 0.0
        %3233 = vmatprep.subr.mxu0 0.0
        %3234 = vmatpush2.xpose.msra.mxu0 0.0
        %3235 = vmatprep.subr.mxu0 0.0
        %3236 = vmatpush2.xpose.msra.mxu0 0.0
        %3237 = vmatprep.subr.mxu0 0.0
        %3238 = vmatpush2.xpose.msra.mxu0 0.0
        %3239 = vmatprep.subr.mxu0 0.0
        %3240 = vmatpush2.xpose.msra.mxu0 0.0
        %3241 = vmatprep.subr.mxu0 0.0
        %3242 = vmatpush2.xpose.msra.mxu0 0.0
        %3243 = vmatprep.subr.mxu0 0.0
        %3244 = vmatpush2.xpose.msra.mxu0 0.0
        %3245 = vmatprep.subr.mxu0 0.0
        %3246 = vmatpush2.xpose.msra.mxu0 0.0
        %3247 = vmatprep.mubr.f32.mxu0 0.0
        %3248 = vmatmul.mubr.f32.gmra.mxu0 %v3178
        %v3249 = vpop.f32.mrf.mxu0
        %v3250 = vadd.f32 0.0, %v3249
        %v3251 = vpop.f32.mrf.mxu0
        %3252 = vdwg.mxu0
        %v3253 = vmul.f32 %v3022, 0.35355338
        %v3254 = vmul.f32 %v3098, 0.35355338
        %v3255 = vmul.f32 %v3174, 0.35355338
        %v3256 = vmul.f32 %v3250, 0.35355338
        %v3257 = vsel %vm1363, %v3253, -inf
        %3258 = vmax.xlane.f32.xlu0 %v3257
        %v3259 = vpop.xlane.xlu0 %3258
        %v3260 = vsel %vm1363, %v3254, -inf
        %3261 = vmax.xlane.f32.xlu0 %v3260
        %v3262 = vpop.xlane.xlu0 %3261
        %v3263 = vsel %vm1363, %v3255, -inf
        %3264 = vmax.xlane.f32.xlu0 %v3263
        %v3265 = vpop.xlane.xlu0 %3264
        %v3266 = vsel %vm1363, %v3256, -inf
        %3267 = vmax.xlane.f32.xlu0 %v3266
        %v3268 = vpop.xlane.xlu0 %3267
        %v3269 = vsub.f32 %v3253, %v3259
        %v3270 = vsub.f32 %v3254, %v3262
        %v3271 = vsub.f32 %v3255, %v3265
        %v3272 = vsub.f32 %v3256, %v3268
        %v3273 = vmul.f32 %v3269, 1.442695
        %v3274 = vpow.pop %v3273
        %v3275 = vmul.f32 %v3270, 1.442695
        %v3276 = vpow.pop %v3275
        %v3277 = vmul.f32 %v3271, 1.442695
        %v3278 = vpow.pop %v3277
        %v3279 = vmul.f32 %v3272, 1.442695
        %v3280 = vpow.pop %v3279
        %v3281 = vsel %vm1363, %v3274, 0.0
        %3282 = vadd.xlane.f32.xlu0 %v3281
        %v3283 = vpop.xlane.xlu0 %3282
        %v3284 = vsel %vm1363, %v3276, 0.0
        %3285 = vadd.xlane.f32.xlu0 %v3284
        %v3286 = vpop.xlane.xlu0 %3285
        %v3287 = vsel %vm1363, %v3278, 0.0
        %3288 = vadd.xlane.f32.xlu0 %v3287
        %v3289 = vpop.xlane.xlu0 %3288
        %v3290 = vsel %vm1363, %v3280, 0.0
        %3291 = vadd.xlane.f32.xlu0 %v3290
        %v3292 = vpop.xlane.xlu0 %3291
        %v3293 = vrcp.pop %v3283
        %v3294 = vrcp.pop %v3286
        %v3295 = vrcp.pop %v3289
        %v3296 = vrcp.pop %v3292
        %v3297 = vmul.f32 %v3274, %v3293
        %v3298 = vmul.f32 %v3276, %v3294
        %v3299 = vmul.f32 %v3278, %v3295
        %v3300 = vmul.f32 %v3280, %v3296
        %3301 = vst.msk [vmem:[%s678] sm:$0xff] %vm1363, %v3297
        %3302 = vst.msk [vmem:[%s678 + $0x8] sm:$0xff] %vm1363, %v3298
        %3303 = vst.msk [vmem:[%s678 + $0x10] sm:$0xff] %vm1363, %v3299
        %3304 = vst.msk [vmem:[%s678 + $0x18] sm:$0xff] %vm1363, %v3300
        %v3306 = vsel %vm1363, %v3297, 0
        %3308 = vmatprep.subr.mxu0 0.0
        %3309 = vmatpush1.msra.mxu0 0.0
        %3310 = vmatprep.subr.mxu0 0.0
        %3311 = vmatpush1.msra.mxu0 0.0
        %3312 = vmatprep.subr.mxu0 0.0
        %3313 = vmatpush1.msra.mxu0 0.0
        %3314 = vmatprep.subr.mxu0 0.0
        %3315 = vmatpush1.msra.mxu0 0.0
        %3316 = vmatprep.subr.mxu0 0.0
        %3317 = vmatpush1.msra.mxu0 0.0
        %3318 = vmatprep.subr.mxu0 0.0
        %3319 = vmatpush1.msra.mxu0 0.0
        %3320 = vmatprep.subr.mxu0 0.0
        %3321 = vmatpush1.msra.mxu0 0.0
        %3322 = vmatprep.subr.mxu0 0.0
        %3323 = vmatpush1.msra.mxu0 0.0
        %3324 = vmatprep.subr.mxu0 0.0
        %3325 = vmatpush1.msra.mxu0 0.0
        %3326 = vmatprep.subr.mxu0 0.0
        %3327 = vmatpush1.msra.mxu0 0.0
        %3328 = vmatprep.subr.mxu0 0.0
        %3329 = vmatpush1.msra.mxu0 0.0
        %3330 = vmatprep.subr.mxu0 0.0
        %3331 = vmatpush1.msra.mxu0 0.0
        %3332 = vmatprep.subr.mxu0 0.0
        %3333 = vmatpush1.msra.mxu0 0.0
        %3334 = vmatprep.subr.mxu0 0.0
        %3335 = vmatpush1.msra.mxu0 0.0
        %3336 = vmatprep.subr.mxu0 0.0
        %3337 = vmatpush1.msra.mxu0 0.0
        %3338 = vmatprep.subr.mxu0 0.0
        %3339 = vmatpush1.msra.mxu0 %v2653
        %3340 = vmatprep.subr.mxu0 0.0
        %3341 = vmatpush2.msra.mxu0 0.0
        %3342 = vmatprep.subr.mxu0 0.0
        %3343 = vmatpush2.msra.mxu0 0.0
        %3344 = vmatprep.subr.mxu0 0.0
        %3345 = vmatpush2.msra.mxu0 0.0
        %3346 = vmatprep.subr.mxu0 0.0
        %3347 = vmatpush2.msra.mxu0 0.0
        %3348 = vmatprep.subr.mxu0 0.0
        %3349 = vmatpush2.msra.mxu0 0.0
        %3350 = vmatprep.subr.mxu0 0.0
        %3351 = vmatpush2.msra.mxu0 0.0
        %3352 = vmatprep.subr.mxu0 0.0
        %3353 = vmatpush2.msra.mxu0 0.0
        %3354 = vmatprep.subr.mxu0 0.0
        %3355 = vmatpush2.msra.mxu0 0.0
        %3356 = vmatprep.subr.mxu0 0.0
        %3357 = vmatpush2.msra.mxu0 0.0
        %3358 = vmatprep.subr.mxu0 0.0
        %3359 = vmatpush2.msra.mxu0 0.0
        %3360 = vmatprep.subr.mxu0 0.0
        %3361 = vmatpush2.msra.mxu0 0.0
        %3362 = vmatprep.subr.mxu0 0.0
        %3363 = vmatpush2.msra.mxu0 0.0
        %3364 = vmatprep.subr.mxu0 0.0
        %3365 = vmatpush2.msra.mxu0 0.0
        %3366 = vmatprep.subr.mxu0 0.0
        %3367 = vmatpush2.msra.mxu0 0.0
        %3368 = vmatprep.subr.mxu0 0.0
        %3369 = vmatpush2.msra.mxu0 0.0
        %3370 = vmatprep.subr.mxu0 0.0
        %3371 = vmatpush2.msra.mxu0 0.0
        %3372 = vmatprep.mubr.f32.mxu0 0.0
        %3373 = vmatmul.mubr.f32.gmra.mxu0 %v3306
        %v3374 = vpop.f32.mrf.mxu0
        %v3375 = vadd.f32 0.0, %v3374
        %v3376 = vpop.f32.mrf.mxu0
        %3377 = vdwg.mxu0
        %v3379 = vsel %vm1363, %v3298, 0
        %3381 = vmatprep.subr.mxu0 0.0
        %3382 = vmatpush1.msra.mxu0 0.0
        %3383 = vmatprep.subr.mxu0 0.0
        %3384 = vmatpush1.msra.mxu0 0.0
        %3385 = vmatprep.subr.mxu0 0.0
        %3386 = vmatpush1.msra.mxu0 0.0
        %3387 = vmatprep.subr.mxu0 0.0
        %3388 = vmatpush1.msra.mxu0 0.0
        %3389 = vmatprep.subr.mxu0 0.0
        %3390 = vmatpush1.msra.mxu0 0.0
        %3391 = vmatprep.subr.mxu0 0.0
        %3392 = vmatpush1.msra.mxu0 0.0
        %3393 = vmatprep.subr.mxu0 0.0
        %3394 = vmatpush1.msra.mxu0 0.0
        %3395 = vmatprep.subr.mxu0 0.0
        %3396 = vmatpush1.msra.mxu0 0.0
        %3397 = vmatprep.subr.mxu0 0.0
        %3398 = vmatpush1.msra.mxu0 0.0
        %3399 = vmatprep.subr.mxu0 0.0
        %3400 = vmatpush1.msra.mxu0 0.0
        %3401 = vmatprep.subr.mxu0 0.0
        %3402 = vmatpush1.msra.mxu0 0.0
        %3403 = vmatprep.subr.mxu0 0.0
        %3404 = vmatpush1.msra.mxu0 0.0
        %3405 = vmatprep.subr.mxu0 0.0
        %3406 = vmatpush1.msra.mxu0 0.0
        %3407 = vmatprep.subr.mxu0 0.0
        %3408 = vmatpush1.msra.mxu0 0.0
        %3409 = vmatprep.subr.mxu0 0.0
        %3410 = vmatpush1.msra.mxu0 0.0
        %3411 = vmatprep.subr.mxu0 0.0
        %3412 = vmatpush1.msra.mxu0 %v2654
        %3413 = vmatprep.subr.mxu0 0.0
        %3414 = vmatpush2.msra.mxu0 0.0
        %3415 = vmatprep.subr.mxu0 0.0
        %3416 = vmatpush2.msra.mxu0 0.0
        %3417 = vmatprep.subr.mxu0 0.0
        %3418 = vmatpush2.msra.mxu0 0.0
        %3419 = vmatprep.subr.mxu0 0.0
        %3420 = vmatpush2.msra.mxu0 0.0
        %3421 = vmatprep.subr.mxu0 0.0
        %3422 = vmatpush2.msra.mxu0 0.0
        %3423 = vmatprep.subr.mxu0 0.0
        %3424 = vmatpush2.msra.mxu0 0.0
        %3425 = vmatprep.subr.mxu0 0.0
        %3426 = vmatpush2.msra.mxu0 0.0
        %3427 = vmatprep.subr.mxu0 0.0
        %3428 = vmatpush2.msra.mxu0 0.0
        %3429 = vmatprep.subr.mxu0 0.0
        %3430 = vmatpush2.msra.mxu0 0.0
        %3431 = vmatprep.subr.mxu0 0.0
        %3432 = vmatpush2.msra.mxu0 0.0
        %3433 = vmatprep.subr.mxu0 0.0
        %3434 = vmatpush2.msra.mxu0 0.0
        %3435 = vmatprep.subr.mxu0 0.0
        %3436 = vmatpush2.msra.mxu0 0.0
        %3437 = vmatprep.subr.mxu0 0.0
        %3438 = vmatpush2.msra.mxu0 0.0
        %3439 = vmatprep.subr.mxu0 0.0
        %3440 = vmatpush2.msra.mxu0 0.0
        %3441 = vmatprep.subr.mxu0 0.0
        %3442 = vmatpush2.msra.mxu0 0.0
        %3443 = vmatprep.subr.mxu0 0.0
        %3444 = vmatpush2.msra.mxu0 0.0
        %3445 = vmatprep.mubr.f32.mxu0 0.0
        %3446 = vmatmul.mubr.f32.gmra.mxu0 %v3379
        %v3447 = vpop.f32.mrf.mxu0
        %v3448 = vadd.f32 0.0, %v3447
        %v3449 = vpop.f32.mrf.mxu0
        %3450 = vdwg.mxu0
        %v3452 = vsel %vm1363, %v3299, 0
        %3454 = vmatprep.subr.mxu0 0.0
        %3455 = vmatpush1.msra.mxu0 0.0
        %3456 = vmatprep.subr.mxu0 0.0
        %3457 = vmatpush1.msra.mxu0 0.0
        %3458 = vmatprep.subr.mxu0 0.0
        %3459 = vmatpush1.msra.mxu0 0.0
        %3460 = vmatprep.subr.mxu0 0.0
        %3461 = vmatpush1.msra.mxu0 0.0
        %3462 = vmatprep.subr.mxu0 0.0
        %3463 = vmatpush1.msra.mxu0 0.0
        %3464 = vmatprep.subr.mxu0 0.0
        %3465 = vmatpush1.msra.mxu0 0.0
        %3466 = vmatprep.subr.mxu0 0.0
        %3467 = vmatpush1.msra.mxu0 0.0
        %3468 = vmatprep.subr.mxu0 0.0
        %3469 = vmatpush1.msra.mxu0 0.0
        %3470 = vmatprep.subr.mxu0 0.0
        %3471 = vmatpush1.msra.mxu0 0.0
        %3472 = vmatprep.subr.mxu0 0.0
        %3473 = vmatpush1.msra.mxu0 0.0
        %3474 = vmatprep.subr.mxu0 0.0
        %3475 = vmatpush1.msra.mxu0 0.0
        %3476 = vmatprep.subr.mxu0 0.0
        %3477 = vmatpush1.msra.mxu0 0.0
        %3478 = vmatprep.subr.mxu0 0.0
        %3479 = vmatpush1.msra.mxu0 0.0
        %3480 = vmatprep.subr.mxu0 0.0
        %3481 = vmatpush1.msra.mxu0 0.0
        %3482 = vmatprep.subr.mxu0 0.0
        %3483 = vmatpush1.msra.mxu0 0.0
        %3484 = vmatprep.subr.mxu0 0.0
        %3485 = vmatpush1.msra.mxu0 %v2655
        %3486 = vmatprep.subr.mxu0 0.0
        %3487 = vmatpush2.msra.mxu0 0.0
        %3488 = vmatprep.subr.mxu0 0.0
        %3489 = vmatpush2.msra.mxu0 0.0
        %3490 = vmatprep.subr.mxu0 0.0
        %3491 = vmatpush2.msra.mxu0 0.0
        %3492 = vmatprep.subr.mxu0 0.0
        %3493 = vmatpush2.msra.mxu0 0.0
        %3494 = vmatprep.subr.mxu0 0.0
        %3495 = vmatpush2.msra.mxu0 0.0
        %3496 = vmatprep.subr.mxu0 0.0
        %3497 = vmatpush2.msra.mxu0 0.0
        %3498 = vmatprep.subr.mxu0 0.0
        %3499 = vmatpush2.msra.mxu0 0.0
        %3500 = vmatprep.subr.mxu0 0.0
        %3501 = vmatpush2.msra.mxu0 0.0
        %3502 = vmatprep.subr.mxu0 0.0
        %3503 = vmatpush2.msra.mxu0 0.0
        %3504 = vmatprep.subr.mxu0 0.0
        %3505 = vmatpush2.msra.mxu0 0.0
        %3506 = vmatprep.subr.mxu0 0.0
        %3507 = vmatpush2.msra.mxu0 0.0
        %3508 = vmatprep.subr.mxu0 0.0
        %3509 = vmatpush2.msra.mxu0 0.0
        %3510 = vmatprep.subr.mxu0 0.0
        %3511 = vmatpush2.msra.mxu0 0.0
        %3512 = vmatprep.subr.mxu0 0.0
        %3513 = vmatpush2.msra.mxu0 0.0
        %3514 = vmatprep.subr.mxu0 0.0
        %3515 = vmatpush2.msra.mxu0 0.0
        %3516 = vmatprep.subr.mxu0 0.0
        %3517 = vmatpush2.msra.mxu0 0.0
        %3518 = vmatprep.mubr.f32.mxu0 0.0
        %3519 = vmatmul.mubr.f32.gmra.mxu0 %v3452
        %v3520 = vpop.f32.mrf.mxu0
        %v3521 = vadd.f32 0.0, %v3520
        %v3522 = vpop.f32.mrf.mxu0
        %3523 = vdwg.mxu0
        %v3525 = vsel %vm1363, %v3300, 0
        %3527 = vmatprep.subr.mxu0 0.0
        %3528 = vmatpush1.msra.mxu0 0.0
        %3529 = vmatprep.subr.mxu0 0.0
        %3530 = vmatpush1.msra.mxu0 0.0
        %3531 = vmatprep.subr.mxu0 0.0
        %3532 = vmatpush1.msra.mxu0 0.0
        %3533 = vmatprep.subr.mxu0 0.0
        %3534 = vmatpush1.msra.mxu0 0.0
        %3535 = vmatprep.subr.mxu0 0.0
        %3536 = vmatpush1.msra.mxu0 0.0
        %3537 = vmatprep.subr.mxu0 0.0
        %3538 = vmatpush1.msra.mxu0 0.0
        %3539 = vmatprep.subr.mxu0 0.0
        %3540 = vmatpush1.msra.mxu0 0.0
        %3541 = vmatprep.subr.mxu0 0.0
        %3542 = vmatpush1.msra.mxu0 0.0
        %3543 = vmatprep.subr.mxu0 0.0
        %3544 = vmatpush1.msra.mxu0 0.0
        %3545 = vmatprep.subr.mxu0 0.0
        %3546 = vmatpush1.msra.mxu0 0.0
        %3547 = vmatprep.subr.mxu0 0.0
        %3548 = vmatpush1.msra.mxu0 0.0
        %3549 = vmatprep.subr.mxu0 0.0
        %3550 = vmatpush1.msra.mxu0 0.0
        %3551 = vmatprep.subr.mxu0 0.0
        %3552 = vmatpush1.msra.mxu0 0.0
        %3553 = vmatprep.subr.mxu0 0.0
        %3554 = vmatpush1.msra.mxu0 0.0
        %3555 = vmatprep.subr.mxu0 0.0
        %3556 = vmatpush1.msra.mxu0 0.0
        %3557 = vmatprep.subr.mxu0 0.0
        %3558 = vmatpush1.msra.mxu0 %v2656
        %3559 = vmatprep.subr.mxu0 0.0
        %3560 = vmatpush2.msra.mxu0 0.0
        %3561 = vmatprep.subr.mxu0 0.0
        %3562 = vmatpush2.msra.mxu0 0.0
        %3563 = vmatprep.subr.mxu0 0.0
        %3564 = vmatpush2.msra.mxu0 0.0
        %3565 = vmatprep.subr.mxu0 0.0
        %3566 = vmatpush2.msra.mxu0 0.0
        %3567 = vmatprep.subr.mxu0 0.0
        %3568 = vmatpush2.msra.mxu0 0.0
        %3569 = vmatprep.subr.mxu0 0.0
        %3570 = vmatpush2.msra.mxu0 0.0
        %3571 = vmatprep.subr.mxu0 0.0
        %3572 = vmatpush2.msra.mxu0 0.0
        %3573 = vmatprep.subr.mxu0 0.0
        %3574 = vmatpush2.msra.mxu0 0.0
        %3575 = vmatprep.subr.mxu0 0.0
        %3576 = vmatpush2.msra.mxu0 0.0
        %3577 = vmatprep.subr.mxu0 0.0
        %3578 = vmatpush2.msra.mxu0 0.0
        %3579 = vmatprep.subr.mxu0 0.0
        %3580 = vmatpush2.msra.mxu0 0.0
        %3581 = vmatprep.subr.mxu0 0.0
        %3582 = vmatpush2.msra.mxu0 0.0
        %3583 = vmatprep.subr.mxu0 0.0
        %3584 = vmatpush2.msra.mxu0 0.0
        %3585 = vmatprep.subr.mxu0 0.0
        %3586 = vmatpush2.msra.mxu0 0.0
        %3587 = vmatprep.subr.mxu0 0.0
        %3588 = vmatpush2.msra.mxu0 0.0
        %3589 = vmatprep.subr.mxu0 0.0
        %3590 = vmatpush2.msra.mxu0 0.0
        %3591 = vmatprep.mubr.f32.mxu0 0.0
        %3592 = vmatmul.mubr.f32.gmra.mxu0 %v3525
        %v3593 = vpop.f32.mrf.mxu0
        %v3594 = vadd.f32 0.0, %v3593
        %v3595 = vpop.f32.mrf.mxu0
        %3596 = vdwg.mxu0
        %v3597 = vcombine.low %v3375, %v3521
        %v3598 = vcombine.high %v3375, %v3521
        %v3600 = vunpack.c.l.s4 1983009808
        %v3601 = vunpack.c.0.s8 %v3600
        %v3602 = vlaneseq
        %v3603 = vshrl.u32 %v3602, 7
        %v3604 = vsub.s32 %v3601, %v3603
        %v3605 = vrot.slane %v3597, %v3604
        %v3607 = vunpack.c.l.s4 1983009808
        %v3608 = vunpack.c.0.s8 %v3607
        %v3609 = vlaneseq
        %v3610 = vshrl.u32 %v3609, 7
        %v3611 = vsub.s32 %v3608, %v3610
        %v3612 = vrot.slane %v3598, %v3611
        %v3613 = vcombine.low %v3448, %v3594
        %v3614 = vcombine.high %v3448, %v3594
        %v3616 = vunpack.c.l.s4 1983009808
        %v3617 = vunpack.c.0.s8 %v3616
        %v3618 = vlaneseq
        %v3619 = vshrl.u32 %v3618, 7
        %v3620 = vsub.s32 %v3617, %v3619
        %v3621 = vrot.slane %v3613, %v3620
        %v3623 = vunpack.c.l.s4 1983009808
        %v3624 = vunpack.c.0.s8 %v3623
        %v3625 = vlaneseq
        %v3626 = vshrl.u32 %v3625, 7
        %v3627 = vsub.s32 %v3624, %v3626
        %v3628 = vrot.slane %v3614, %v3627
        %v3629 = vcombine.low %v3605, %v3621
        %v3630 = vcombine.high %v3605, %v3621
        %v3632 = vunpack.c.l.s4 1934713408
        %v3633 = vunpack.c.0.s8 %v3632
        %v3634 = vlaneseq
        %v3635 = vshrl.u32 %v3634, 7
        %v3636 = vsub.s32 %v3633, %v3635
        %v3637 = vrot.slane %v3629, %v3636
        %v3639 = vunpack.c.l.s4 1934713408
        %v3640 = vunpack.c.0.s8 %v3639
        %v3641 = vlaneseq
        %v3642 = vshrl.u32 %v3641, 7
        %v3643 = vsub.s32 %v3640, %v3642
        %v3644 = vrot.slane %v3630, %v3643
        %v3645 = vcombine.low %v3612, %v3628
        %v3646 = vcombine.high %v3612, %v3628
        %v3648 = vunpack.c.l.s4 1934713408
        %v3649 = vunpack.c.0.s8 %v3648
        %v3650 = vlaneseq
        %v3651 = vshrl.u32 %v3650, 7
        %v3652 = vsub.s32 %v3649, %v3651
        %v3653 = vrot.slane %v3645, %v3652
        %v3655 = vunpack.c.l.s4 1934713408
        %v3656 = vunpack.c.0.s8 %v3655
        %v3657 = vlaneseq
        %v3658 = vshrl.u32 %v3657, 7
        %v3659 = vsub.s32 %v3656, %v3658
        %v3660 = vrot.slane %v3646, %v3659
        %v3661 = vcombine.high %v3637, 0.0
        %v3662 = vcombine.high %v3644, 0.0
        %v3663 = vcombine.high %v3653, 0.0
        %v3664 = vcombine.high %v3660, 0.0
        %v3665 = vcombine.low %v3637, %v3644
        %v3667 = vunpack.c.l.s4 1983009808
        %v3668 = vunpack.c.0.s8 %v3667
        %v3669 = vlaneseq
        %v3670 = vshrl.u32 %v3669, 7
        %v3671 = vsub.s32 %v3668, %v3670
        %v3672 = vrot.slane %v3665, %v3671
        %v3673 = vcombine.low %v3661, %v3662
        %v3675 = vunpack.c.l.s4 1983009808
        %v3676 = vunpack.c.0.s8 %v3675
        %v3677 = vlaneseq
        %v3678 = vshrl.u32 %v3677, 7
        %v3679 = vsub.s32 %v3676, %v3678
        %v3680 = vrot.slane %v3673, %v3679
        %v3681 = vcombine.low %v3653, %v3660
        %v3683 = vunpack.c.l.s4 1983009808
        %v3684 = vunpack.c.0.s8 %v3683
        %v3685 = vlaneseq
        %v3686 = vshrl.u32 %v3685, 7
        %v3687 = vsub.s32 %v3684, %v3686
        %v3688 = vrot.slane %v3681, %v3687
        %v3689 = vcombine.low %v3663, %v3664
        %v3691 = vunpack.c.l.s4 1983009808
        %v3692 = vunpack.c.0.s8 %v3691
        %v3693 = vlaneseq
        %v3694 = vshrl.u32 %v3693, 7
        %v3695 = vsub.s32 %v3692, %v3694
        %v3696 = vrot.slane %v3689, %v3695
        %v3697 = vcombine.low %v3672, %v3680
        %v3698 = vcombine.high %v3672, %v3680
        %v3700 = vunpack.c.l.s4 1934713408
        %v3701 = vunpack.c.0.s8 %v3700
        %v3702 = vlaneseq
        %v3703 = vshrl.u32 %v3702, 7
        %v3704 = vsub.s32 %v3701, %v3703
        %v3705 = vrot.slane %v3697, %v3704
        %v3707 = vunpack.c.l.s4 1934713408
        %v3708 = vunpack.c.0.s8 %v3707
        %v3709 = vlaneseq
        %v3710 = vshrl.u32 %v3709, 7
        %v3711 = vsub.s32 %v3708, %v3710
        %v3712 = vrot.slane %v3698, %v3711
        %v3713 = vcombine.low %v3688, %v3696
        %v3714 = vcombine.high %v3688, %v3696
        %v3716 = vunpack.c.l.s4 1934713408
        %v3717 = vunpack.c.0.s8 %v3716
        %v3718 = vlaneseq
        %v3719 = vshrl.u32 %v3718, 7
        %v3720 = vsub.s32 %v3717, %v3719
        %v3721 = vrot.slane %v3713, %v3720
        %v3723 = vunpack.c.l.s4 1934713408
        %v3724 = vunpack.c.0.s8 %v3723
        %v3725 = vlaneseq
        %v3726 = vshrl.u32 %v3725, 7
        %v3727 = vsub.s32 %v3724, %v3726
        %v3728 = vrot.slane %v3714, %v3727
        %v3729 = vcombine.low %v3705, %v3721
        %v3730 = vcombine.high %v3705, %v3721
        %v3731 = vcombine.low %v3712, %v3728
        %v3732 = vcombine.high %v3712, %v3728
        %3734 = vrot.lane.b32.xlu0 %v3730, 8
        %v3735 = vpop.permute.xlu0 %3734
        %3738 = vrot.lane.b32.xlu0 %v3731, 16
        %v3739 = vpop.permute.xlu0 %3738
        %3742 = vrot.lane.b32.xlu0 %v3732, 24
        %v3743 = vpop.permute.xlu0 %3742
        %v3745 = vsel %vm1363, %v3729, %v3735
        %v3746 = vsel %vm2161, %v3745, %v3739
        %v3747 = vsel %vm2163, %v3746, %v3743
        %v3748 = vlaneseq
        %v3749 = vshrl.u32 %v3748, 7
        %v3750 = vsub.s32 1, %v3749
        %v3751 = vrot.slane %v682, %v3750
        %v3753 = vsel %vm703, %v3747, 0
        %3755 = vmatprep.subr.mxu0 0.0
        %3756 = vmatpush1.msra.mxu0 0.0
        %3757 = vmatprep.subr.mxu0 0.0
        %3758 = vmatpush1.msra.mxu0 0.0
        %3759 = vmatprep.subr.mxu0 0.0
        %3760 = vmatpush1.msra.mxu0 0.0
        %3761 = vmatprep.subr.mxu0 0.0
        %3762 = vmatpush1.msra.mxu0 0.0
        %3763 = vmatprep.subr.mxu0 0.0
        %3764 = vmatpush1.msra.mxu0 0.0
        %3765 = vmatprep.subr.mxu0 0.0
        %3766 = vmatpush1.msra.mxu0 0.0
        %3767 = vmatprep.subr.mxu0 0.0
        %3768 = vmatpush1.msra.mxu0 0.0
        %3769 = vmatprep.subr.mxu0 0.0
        %3770 = vmatpush1.msra.mxu0 0.0
        %3771 = vmatprep.subr.mxu0 0.0
        %3772 = vmatpush1.msra.mxu0 0.0
        %3773 = vmatprep.subr.mxu0 0.0
        %3774 = vmatpush1.msra.mxu0 0.0
        %3775 = vmatprep.subr.mxu0 0.0
        %3776 = vmatpush1.msra.mxu0 0.0
        %3777 = vmatprep.subr.mxu0 0.0
        %3778 = vmatpush1.msra.mxu0 0.0
        %3779 = vmatprep.subr.mxu0 0.0
        %3780 = vmatpush1.msra.mxu0 %v2282
        %3781 = vmatprep.subr.mxu0 0.0
        %3782 = vmatpush1.msra.mxu0 %v2281
        %3783 = vmatprep.subr.mxu0 0.0
        %3784 = vmatpush1.msra.mxu0 %v2280
        %3785 = vmatprep.subr.mxu0 0.0
        %3786 = vmatpush1.msra.mxu0 %v2279
        %3787 = vmatprep.subr.mxu0 0.0
        %3788 = vmatpush2.msra.mxu0 0.0
        %3789 = vmatprep.subr.mxu0 0.0
        %3790 = vmatpush2.msra.mxu0 0.0
        %3791 = vmatprep.subr.mxu0 0.0
        %3792 = vmatpush2.msra.mxu0 0.0
        %3793 = vmatprep.subr.mxu0 0.0
        %3794 = vmatpush2.msra.mxu0 0.0
        %3795 = vmatprep.subr.mxu0 0.0
        %3796 = vmatpush2.msra.mxu0 0.0
        %3797 = vmatprep.subr.mxu0 0.0
        %3798 = vmatpush2.msra.mxu0 0.0
        %3799 = vmatprep.subr.mxu0 0.0
        %3800 = vmatpush2.msra.mxu0 0.0
        %3801 = vmatprep.subr.mxu0 0.0
        %3802 = vmatpush2.msra.mxu0 0.0
        %3803 = vmatprep.subr.mxu0 0.0
        %3804 = vmatpush2.msra.mxu0 0.0
        %3805 = vmatprep.subr.mxu0 0.0
        %3806 = vmatpush2.msra.mxu0 0.0
        %3807 = vmatprep.subr.mxu0 0.0
        %3808 = vmatpush2.msra.mxu0 0.0
        %3809 = vmatprep.subr.mxu0 0.0
        %3810 = vmatpush2.msra.mxu0 0.0
        %3811 = vmatprep.subr.mxu0 0.0
        %3812 = vmatpush2.msra.mxu0 0.0
        %3813 = vmatprep.subr.mxu0 0.0
        %3814 = vmatpush2.msra.mxu0 0.0
        %3815 = vmatprep.subr.mxu0 0.0
        %3816 = vmatpush2.msra.mxu0 0.0
        %3817 = vmatprep.subr.mxu0 0.0
        %3818 = vmatpush2.msra.mxu0 0.0
        %3819 = vmatprep.mubr.f32.mxu0 0.0
        %3820 = vmatmul.mubr.f32.gmra.mxu0 %v3753
        %v3821 = vpop.f32.mrf.mxu0
        %v3822 = vadd.f32 %v3751, %v3821
        %v3823 = vpop.f32.mrf.mxu0
        %3824 = vdwg.mxu0
        %v3825 = vadd.f32 %v3822, %v2266
        %v3826 = vsel %vm703, %v3825, 0.0
        %3827 = vadd.xlane.f32.xlu0 %v3826
        %v3828 = vpop.xlane.xlu0 %3827
        %v3829 = vmul.f32 %v3828, %v2246
        %v3830 = vsub.f32 %v3825, %v3829
        %v3831 = vmul.f32 %v3830, %v3830
        %v3832 = vsel %vm703, %v3831, 0.0
        %3833 = vadd.xlane.f32.xlu0 %v3832
        %v3834 = vpop.xlane.xlu0 %3833
        %v3835 = vmul.f32 %v3834, %v2246
        %v3836 = vadd.f32 %v3835, 1e-06
        %v3837 = vrsqrt.pop %v3836
        %v3838 = vmul.f32 %v3830, %v3837
        %v3839 = vlaneseq
        %v3840 = vshrl.u32 %v3839, 7
        %v3841 = vsub.s32 2, %v3840
        %v3842 = vrot.slane %v682, %v3841
        %v3843 = vmul.f32 %v3838, %v3842
        %v3844 = vlaneseq
        %v3845 = vshrl.u32 %v3844, 7
        %v3846 = vsub.s32 3, %v3845
        %v3847 = vrot.slane %v682, %v3846
        %v3848 = vadd.f32 %v3843, %v3847
        %v3849 = vld [vmem:[#allocation14] sm:$0xff]
        %v3850 = vld [vmem:[#allocation14 + $0x8] sm:$0xff]
        %v3851 = vld [vmem:[#allocation14 + $0x10] sm:$0xff]
        %v3852 = vld [vmem:[#allocation14 + $0x18] sm:$0xff]
        %v3853 = vld [vmem:[%s11] sm:$0x1]
        %v3855 = vlaneseq
        %v3856 = vshrl.u32 %v3855, 7
        %v3857 = vsub.s32 0, %v3856
        %v3858 = vrot.slane %v3853, %v3857
        %v3861 = vsel %vm703, %v3848, 0
        %3863 = vmatprep.subr.mxu0 0.0
        %3864 = vmatpush1.msra.mxu0 0.0
        %3865 = vmatprep.subr.mxu0 0.0
        %3866 = vmatpush1.msra.mxu0 0.0
        %3867 = vmatprep.subr.mxu0 0.0
        %3868 = vmatpush1.msra.mxu0 0.0
        %3869 = vmatprep.subr.mxu0 0.0
        %3870 = vmatpush1.msra.mxu0 0.0
        %3871 = vmatprep.subr.mxu0 0.0
        %3872 = vmatpush1.msra.mxu0 0.0
        %3873 = vmatprep.subr.mxu0 0.0
        %3874 = vmatpush1.msra.mxu0 0.0
        %3875 = vmatprep.subr.mxu0 0.0
        %3876 = vmatpush1.msra.mxu0 0.0
        %3877 = vmatprep.subr.mxu0 0.0
        %3878 = vmatpush1.msra.mxu0 0.0
        %3879 = vmatprep.subr.mxu0 0.0
        %3880 = vmatpush1.msra.mxu0 0.0
        %3881 = vmatprep.subr.mxu0 0.0
        %3882 = vmatpush1.msra.mxu0 0.0
        %3883 = vmatprep.subr.mxu0 0.0
        %3884 = vmatpush1.msra.mxu0 0.0
        %3885 = vmatprep.subr.mxu0 0.0
        %3886 = vmatpush1.msra.mxu0 0.0
        %3887 = vmatprep.subr.mxu0 0.0
        %3888 = vmatpush1.msra.mxu0 %v3852
        %3889 = vmatprep.subr.mxu0 0.0
        %3890 = vmatpush1.msra.mxu0 %v3851
        %3891 = vmatprep.subr.mxu0 0.0
        %3892 = vmatpush1.msra.mxu0 %v3850
        %3893 = vmatprep.subr.mxu0 0.0
        %3894 = vmatpush1.msra.mxu0 %v3849
        %3895 = vmatprep.subr.mxu0 0.0
        %3896 = vmatpush2.msra.mxu0 0.0
        %3897 = vmatprep.subr.mxu0 0.0
        %3898 = vmatpush2.msra.mxu0 0.0
        %3899 = vmatprep.subr.mxu0 0.0
        %3900 = vmatpush2.msra.mxu0 0.0
        %3901 = vmatprep.subr.mxu0 0.0
        %3902 = vmatpush2.msra.mxu0 0.0
        %3903 = vmatprep.subr.mxu0 0.0
        %3904 = vmatpush2.msra.mxu0 0.0
        %3905 = vmatprep.subr.mxu0 0.0
        %3906 = vmatpush2.msra.mxu0 0.0
        %3907 = vmatprep.subr.mxu0 0.0
        %3908 = vmatpush2.msra.mxu0 0.0
        %3909 = vmatprep.subr.mxu0 0.0
        %3910 = vmatpush2.msra.mxu0 0.0
        %3911 = vmatprep.subr.mxu0 0.0
        %3912 = vmatpush2.msra.mxu0 0.0
        %3913 = vmatprep.subr.mxu0 0.0
        %3914 = vmatpush2.msra.mxu0 0.0
        %3915 = vmatprep.subr.mxu0 0.0
        %3916 = vmatpush2.msra.mxu0 0.0
        %3917 = vmatprep.subr.mxu0 0.0
        %3918 = vmatpush2.msra.mxu0 0.0
        %3919 = vmatprep.subr.mxu0 0.0
        %3920 = vmatpush2.msra.mxu0 0.0
        %3921 = vmatprep.subr.mxu0 0.0
        %3922 = vmatpush2.msra.mxu0 0.0
        %3923 = vmatprep.subr.mxu0 0.0
        %3924 = vmatpush2.msra.mxu0 0.0
        %3925 = vmatprep.subr.mxu0 0.0
        %3926 = vmatpush2.msra.mxu0 0.0
        %3927 = vmatprep.mubr.f32.mxu0 0.0
        %3928 = vmatmul.mubr.f32.gmra.mxu0 %v3861
        %v3929 = vpop.f32.mrf.mxu0
        %v3930 = vadd.f32 %v3858, %v3929
        %v3931 = vpop.f32.mrf.mxu0
        %3932 = vdwg.mxu0
        %v3933 = vmax.f32 %v3930, 0.0
        %v3934 = vld [vmem:[%s12] sm:$0xff]
        %v3935 = vld [vmem:[%s12 + $0x8] sm:$0xff]
        %v3936 = vld [vmem:[%s12 + $0x10] sm:$0xff]
        %v3937 = vld [vmem:[%s12 + $0x18] sm:$0xff]
        %v3938 = vld [vmem:[%s12 + $0x20] sm:$0xff]
        %v3939 = vld [vmem:[%s12 + $0x28] sm:$0xff]
        %v3940 = vld [vmem:[%s12 + $0x30] sm:$0xff]
        %v3941 = vld [vmem:[%s12 + $0x38] sm:$0xff]
        %v3942 = vlaneseq
        %v3943 = vshrl.u32 %v3942, 7
        %v3944 = vsub.s32 4, %v3943
        %v3945 = vrot.slane %v682, %v3944
        %vm3946 = vcmask 523264
        %v3948 = vsel %vm3946, %v3933, 0
        %3950 = vmatprep.subr.mxu0 0.0
        %3951 = vmatpush1.msra.mxu0 0.0
        %3952 = vmatprep.subr.mxu0 0.0
        %3953 = vmatpush1.msra.mxu0 0.0
        %3954 = vmatprep.subr.mxu0 0.0
        %3955 = vmatpush1.msra.mxu0 0.0
        %3956 = vmatprep.subr.mxu0 0.0
        %3957 = vmatpush1.msra.mxu0 0.0
        %3958 = vmatprep.subr.mxu0 0.0
        %3959 = vmatpush1.msra.mxu0 0.0
        %3960 = vmatprep.subr.mxu0 0.0
        %3961 = vmatpush1.msra.mxu0 0.0
        %3962 = vmatprep.subr.mxu0 0.0
        %3963 = vmatpush1.msra.mxu0 0.0
        %3964 = vmatprep.subr.mxu0 0.0
        %3965 = vmatpush1.msra.mxu0 0.0
        %3966 = vmatprep.subr.mxu0 0.0
        %3967 = vmatpush1.msra.mxu0 %v3941
        %3968 = vmatprep.subr.mxu0 0.0
        %3969 = vmatpush1.msra.mxu0 %v3940
        %3970 = vmatprep.subr.mxu0 0.0
        %3971 = vmatpush1.msra.mxu0 %v3939
        %3972 = vmatprep.subr.mxu0 0.0
        %3973 = vmatpush1.msra.mxu0 %v3938
        %3974 = vmatprep.subr.mxu0 0.0
        %3975 = vmatpush1.msra.mxu0 %v3937
        %3976 = vmatprep.subr.mxu0 0.0
        %3977 = vmatpush1.msra.mxu0 %v3936
        %3978 = vmatprep.subr.mxu0 0.0
        %3979 = vmatpush1.msra.mxu0 %v3935
        %3980 = vmatprep.subr.mxu0 0.0
        %3981 = vmatpush1.msra.mxu0 %v3934
        %3982 = vmatprep.subr.mxu0 0.0
        %3983 = vmatpush2.msra.mxu0 0.0
        %3984 = vmatprep.subr.mxu0 0.0
        %3985 = vmatpush2.msra.mxu0 0.0
        %3986 = vmatprep.subr.mxu0 0.0
        %3987 = vmatpush2.msra.mxu0 0.0
        %3988 = vmatprep.subr.mxu0 0.0
        %3989 = vmatpush2.msra.mxu0 0.0
        %3990 = vmatprep.subr.mxu0 0.0
        %3991 = vmatpush2.msra.mxu0 0.0
        %3992 = vmatprep.subr.mxu0 0.0
        %3993 = vmatpush2.msra.mxu0 0.0
        %3994 = vmatprep.subr.mxu0 0.0
        %3995 = vmatpush2.msra.mxu0 0.0
        %3996 = vmatprep.subr.mxu0 0.0
        %3997 = vmatpush2.msra.mxu0 0.0
        %3998 = vmatprep.subr.mxu0 0.0
        %3999 = vmatpush2.msra.mxu0 0.0
        %4000 = vmatprep.subr.mxu0 0.0
        %4001 = vmatpush2.msra.mxu0 0.0
        %4002 = vmatprep.subr.mxu0 0.0
        %4003 = vmatpush2.msra.mxu0 0.0
        %4004 = vmatprep.subr.mxu0 0.0
        %4005 = vmatpush2.msra.mxu0 0.0
        %4006 = vmatprep.subr.mxu0 0.0
        %4007 = vmatpush2.msra.mxu0 0.0
        %4008 = vmatprep.subr.mxu0 0.0
        %4009 = vmatpush2.msra.mxu0 0.0
        %4010 = vmatprep.subr.mxu0 0.0
        %4011 = vmatpush2.msra.mxu0 0.0
        %4012 = vmatprep.subr.mxu0 0.0
        %4013 = vmatpush2.msra.mxu0 0.0
        %4014 = vmatprep.mubr.f32.mxu0 0.0
        %4015 = vmatmul.mubr.f32.gmra.mxu0 %v3948
        %v4016 = vpop.f32.mrf.mxu0
        %v4017 = vadd.f32 %v3945, %v4016
        %v4018 = vpop.f32.mrf.mxu0
        %4019 = vdwg.mxu0
        %v4020 = vadd.f32 %v4017, %v3848
        %v4021 = vsel %vm703, %v4020, 0.0
        %4022 = vadd.xlane.f32.xlu0 %v4021
        %v4023 = vpop.xlane.xlu0 %4022
        %v4024 = vmul.f32 %v4023, %v2246
        %v4025 = vsub.f32 %v4020, %v4024
        %v4026 = vmul.f32 %v4025, %v4025
        %v4027 = vsel %vm703, %v4026, 0.0
        %4028 = vadd.xlane.f32.xlu0 %v4027
        %v4029 = vpop.xlane.xlu0 %4028
        %v4030 = vmul.f32 %v4029, %v2246
        %v4031 = vadd.f32 %v4030, 1e-06
        %v4032 = vrsqrt.pop %v4031
        %v4033 = vmul.f32 %v4025, %v4032
        %v4034 = vlaneseq
        %v4035 = vshrl.u32 %v4034, 7
        %v4036 = vsub.s32 5, %v4035
        %v4037 = vrot.slane %v682, %v4036
        %v4038 = vmul.f32 %v4033, %v4037
        %v4039 = vlaneseq
        %v4040 = vshrl.u32 %v4039, 7
        %v4041 = vsub.s32 6, %v4040
        %v4042 = vrot.slane %v682, %v4041
        %v4043 = vadd.f32 %v4038, %v4042
        %4044 = vst.msk [vmem:[%s664] sm:$0xff] %vm703, %v4043
        %s4045 = sand.u32 %s355, 1
        %s4046 = scalar_lea.sflag [#allocation4], %s4045
        %s4047 = sand.u32 %s355, 1
        %s4048 = smul.addr %s4047, 8
        %s4049 = scalar_lea.vmem [#allocation16], %s4048
        %s4050 = sand.u32 %s43, 1
        %s4051 = scalar_lea.sflag [#allocation18], %s4050
        %s4052 = sand.u32 %s381, 1
        %s4053 = smul.addr %s4052, 32
        %s4054 = scalar_lea.vmem [#allocation17], %s4053
        %s4055 = sand.u32 %s43, 1
        %s4056 = scalar_lea.sflag [#allocation18], %s4055
        %s4057 = sand.u32 %s407, 1
        %s4058 = smul.addr %s4057, 32
        %s4059 = scalar_lea.vmem [#allocation19], %s4058
        // Predicated region
        $region109: #{tpu_custom_call.1} parent=75 // pred_check
          %p4060 = pneg %p365
        $region110: #{tpu_custom_call.1} parent=75 // pred_check_branch
          %4062 = sbr.rel (%p4060) target = $region112
        $region111: #{tpu_custom_call.1} parent=75 // pred_region
          %s4064 = ssub.s32 128, 128
          %4065 = vsyncadd %s4046, %s4064
          %s4066 = smul.addr %s43, 128
          %s4067 = scalar_lea.hbm %s14, %s4066
          %s4069 = sshll.u32 %s4049, 4
          %s4070 = int_to_ptr.vmem [resolvable:$true] %s4069
          %4072 = dma.vmem_to_hbm [thread:$0]  %s4070, 128, %s4067, %s4046
        $region112: #{tpu_custom_call.1} parent=75 // pred_fallthru
          _
        // Predicated region
        $region113: #{tpu_custom_call.1} parent=75 // pred_check
          %p4073 = pneg %p391
        $region114: #{tpu_custom_call.1} parent=75 // pred_check_branch
          %4075 = sbr.rel (%p4073) target = $region116
        $region115: #{tpu_custom_call.1} parent=75 // pred_region
          %s4077 = ssub.s32 512, 512
          %4078 = vsyncadd %s4051, %s4077
          %s4079 = smul.addr %s43, 4
          %s4080 = smul.addr %s4079, 128
          %s4081 = scalar_lea.hbm %s15, %s4080
          %s4082 = sshll.u32 %s4054, 4
          %s4083 = int_to_ptr.vmem [resolvable:$true] %s4082
          %4088 = dma.vmem_to_hbm [thread:$0]  %s4083, 512, %s4081, %s4051, 128, 128, 8
        $region116: #{tpu_custom_call.1} parent=75 // pred_fallthru
          _
        // Predicated region
        $region117: #{tpu_custom_call.1} parent=75 // pred_check
          %p4089 = pneg %p417
        $region118: #{tpu_custom_call.1} parent=75 // pred_check_branch
          %4091 = sbr.rel (%p4089) target = $region120
        $region119: #{tpu_custom_call.1} parent=75 // pred_region
          %s4093 = ssub.s32 512, 512
          %4094 = vsyncadd %s4056, %s4093
          %s4095 = smul.addr %s43, 4
          %s4096 = smul.addr %s4095, 128
          %s4097 = scalar_lea.hbm %s16, %s4096
          %s4098 = sshll.u32 %s4059, 4
          %s4099 = int_to_ptr.vmem [resolvable:$true] %s4098
          %4104 = dma.vmem_to_hbm [thread:$0]  %s4099, 512, %s4097, %s4056, 128, 128, 8
        $region120: #{tpu_custom_call.1} parent=75 // pred_fallthru
          _
      $region76: #{tpu_custom_call.1} parent=5 // pred_fallthru
        _
      %p4105 = scmp.le.s32.totalorder 2, %s38
      // Predicated region
      $region121: #{tpu_custom_call.1} parent=5 // pred_check
        %p4106 = pneg %p4105
      $region122: #{tpu_custom_call.1} parent=5 // pred_check_branch
        %4108 = sbr.rel (%p4106) target = $region124
      $region123: #{tpu_custom_call.1} parent=5 // pred_region
        %s4109 = ssub.s32 %s38, 2
        // Predicated region
        $region125: #{tpu_custom_call.1} parent=123 // pred_check
          %p4110 = pneg %p371
        $region126: #{tpu_custom_call.1} parent=123 // pred_check_branch
          %4112 = sbr.rel (%p4110) target = $region128
        $region127: #{tpu_custom_call.1} parent=123 // pred_region
          %s4113 = sand.u32 %s356, 1
          %s4114 = scalar_lea.sflag [#allocation4], %s4113
          %s4115 = sand.u32 %s356, 1
          %s4116 = smul.addr %s4115, 8
          %s4117 = scalar_lea.vmem [#allocation16], %s4116
          %4118 = dma.done %s4114, 128
        $region128: #{tpu_custom_call.1} parent=123 // pred_fallthru
          _
        // Predicated region
        $region129: #{tpu_custom_call.1} parent=123 // pred_check
          %p4119 = pneg %p397
        $region130: #{tpu_custom_call.1} parent=123 // pred_check_branch
          %4121 = sbr.rel (%p4119) target = $region132
        $region131: #{tpu_custom_call.1} parent=123 // pred_region
          %s4122 = sand.u32 %s44, 1
          %s4123 = scalar_lea.sflag [#allocation18], %s4122
          %s4124 = sand.u32 %s382, 1
          %s4125 = smul.addr %s4124, 32
          %s4126 = scalar_lea.vmem [#allocation17], %s4125
          %4127 = dma.done %s4123, 512
        $region132: #{tpu_custom_call.1} parent=123 // pred_fallthru
          _
        // Predicated region
        $region133: #{tpu_custom_call.1} parent=123 // pred_check
          %p4128 = pneg %p423
        $region134: #{tpu_custom_call.1} parent=123 // pred_check_branch
          %4130 = sbr.rel (%p4128) target = $region136
        $region135: #{tpu_custom_call.1} parent=123 // pred_region
          %s4131 = sand.u32 %s44, 1
          %s4132 = scalar_lea.sflag [#allocation18], %s4131
          %s4133 = sand.u32 %s408, 1
          %s4134 = smul.addr %s4133, 32
          %s4135 = scalar_lea.vmem [#allocation19], %s4134
          %4136 = dma.done %s4132, 512
        $region136: #{tpu_custom_call.1} parent=123 // pred_fallthru
          _
      $region124: #{tpu_custom_call.1} parent=5 // pred_fallthru
        _
    $region6: #{tpu_custom_call.1} parent=1 // loop_footer
      %s42 = sadd.s32 1, %s38
    $region7: #{tpu_custom_call.1} parent=1 // loop_footer_branch
      %37 = sbr.rel target = $region3
    $region8: #{tpu_custom_call.1} parent=1 // loop_exit
      _
    %4137 = vsyncpa [#allocation3], 1
    %s4138 = scalar_lea.sflag [#allocation3], 1
    %4139 = vsyncpa %s4138, 1
    %4140 = vsyncpa [#allocation6], 1
    %s4141 = scalar_lea.sflag [#allocation6], 1
    %4142 = vsyncpa %s4141, 1
    %4143 = vsyncpa [#allocation9], 1
    %4144 = vsyncpa [#allocation12], 1
    %4145 = vsyncpa [#allocation15], 1
    %4146 = vsyncpa [#allocation4], 1
    %s4147 = scalar_lea.sflag [#allocation4], 1
    %4148 = vsyncpa %s4147, 1
    %4149 = vsyncpa [#allocation18], 1
    %s4150 = scalar_lea.sflag [#allocation18], 1
    %4151 = vsyncpa %s4150, 1

</llo_original>
